<compile_context>
chip_gen: v7x
topology: tpu7x:2x2x1
jax: 0.10.0
libtpu: 0.0.40
codegen_flags: <defaults>
</compile_context>

<pallas_src>
from functools import partial

import jax
import jax.numpy as jnp
from jax.experimental import pallas as pl
from jax.experimental.pallas import tpu as pltpu


def gru_seq_kernel(tok_ref,                                        # (T,) int32, SMEM prefetch
                   emb_ref, wih_ref, whh_ref, bih_ref, bhh_ref,    # inputs (VMEM resident)
                   wd_ref, bd_ref, h_in_ref,
                   out_ref, h_out_ref,                             # outputs (VMEM resident)
                   xseq_ref, gx_ref,                               # scratch
                   *, n_layers, hp, seq_len):
    # ---- Embedding gather: xseq[t, :] = emb[tokens[t], :] ------------------
    for t in range(seq_len):                       # static, tiny T
        tok = tok_ref[t]                           # scalar int32 from SMEM
        xseq_ref[pl.ds(t, 1), :] = emb_ref[pl.ds(tok, 1), :]

    # ---- Layer-sequential GRU ----------------------------------------------
    for l in range(n_layers):                      # static, unrolled
        # Hoisted input-side gate matmul for the whole sequence: (T,Hp)@(Hp,3Hp)
        gx_ref[...] = (
            jnp.dot(xseq_ref[...].astype(jnp.bfloat16), wih_ref[l],
                    preferred_element_type=jnp.float32)
            + bih_ref[l])

        h0 = h_in_ref[l]                           # (1, Hp) f32 initial hidden

        def step(t, h_prev):
            # Recurrent half: only h_prev @ W_hh on the serial chain.
            gh = (jnp.dot(h_prev.astype(jnp.bfloat16), whh_ref[l],
                          preferred_element_type=jnp.float32)
                  + bhh_ref[l])                    # (1, 3Hp) f32
            gx = gx_ref[pl.ds(t, 1), :]            # (1, 3Hp) f32
            r = jax.nn.sigmoid(gx[:, 0:hp] + gh[:, 0:hp])
            z = jax.nn.sigmoid(gx[:, hp:2 * hp] + gh[:, hp:2 * hp])
            n = jnp.tanh(gx[:, 2 * hp:3 * hp] + r * gh[:, 2 * hp:3 * hp])
            h_new = (1.0 - z) * n + z * h_prev     # (1, Hp) f32
            # xseq already consumed by the input matmul -> reuse it in place
            # as this layer's hidden-sequence output (next layer's input).
            xseq_ref[pl.ds(t, 1), :] = h_new
            return h_new

        h_last = jax.lax.fori_loop(0, seq_len, step, h0, unroll=True)
        h_out_ref[l] = h_last                      # final hidden of layer l

    # ---- Batched decoder: one (T,Hp)@(Hp,Op) matmul, lane/sublane-dense store
    out_ref[...] = (
        jnp.dot(xseq_ref[...].astype(jnp.bfloat16), wd_ref[...],
                preferred_element_type=jnp.float32)
        + bd_ref[...])


def rnn_forward(packed, tokens, hidden_padded, *, n_layers, hp, op, seq_len):
    """Run the char-RNN over a whole token sequence with one pallas_call,
    one grid step, and the full time loop inside the kernel."""
    emb_p, wih, whh, bih, bhh, wd, bd = packed
    kernel = partial(gru_seq_kernel, n_layers=n_layers, hp=hp, seq_len=seq_len)

    vmem = pl.BlockSpec(memory_space=pltpu.MemorySpace.VMEM)  # whole-array, resident

    grid_spec = pltpu.PrefetchScalarGridSpec(
        num_scalar_prefetch=1,                    # token indices -> SMEM
        grid=(1,),                                # single step; time loop is in-kernel
        in_specs=[vmem,                           # embedding table (V, Hp)    f32
                  vmem,                           # W_ih packed     (L,Hp,3Hp) bf16
                  vmem,                           # W_hh packed     (L,Hp,3Hp) bf16
                  vmem,                           # b_ih packed     (L,1,3Hp)  f32
                  vmem,                           # b_hh packed     (L,1,3Hp)  f32
                  vmem,                           # decoder weight  (Hp, Op)   bf16
                  vmem,                           # decoder bias    (1, Op)    f32
                  vmem],                          # initial hidden  (L,1,Hp)   f32
        out_specs=(
            vmem,                                 # logits slab (T, Op) f32
            vmem,                                 # final hidden (L, 1, Hp) f32
        ),
        scratch_shapes=[
            pltpu.VMEM((seq_len, hp), jnp.float32),        # x / h sequence buffer
            pltpu.VMEM((seq_len, 3 * hp), jnp.float32),    # hoisted input gates
        ],
    )

    out, h_out = pl.pallas_call(
        kernel,
        grid_spec=grid_spec,
        out_shape=(
            jax.ShapeDtypeStruct((seq_len, op), jnp.float32),
            jax.ShapeDtypeStruct((n_layers, 1, hp), jnp.float32),
        ),
        compiler_params=pltpu.CompilerParams(
            dimension_semantics=("arbitrary",),
            vmem_limit_bytes=32 * 1024 * 1024,
        ),
    )(tokens, emb_p, wih, whh, bih, bhh, wd, bd, hidden_padded)
    return out, h_out


def init_params(key, input_size, hidden_size, output_size, n_layers):
    """Logical (unpadded) params matching nn.Embedding / nn.GRU / nn.Linear
    (weight matrices stored transposed: (in_features, out_features))."""
    H = hidden_size
    k = 1.0 / (H ** 0.5)
    keys = jax.random.split(key, 7)
    emb = jax.random.normal(keys[0], (input_size, H), jnp.float32)
    w_ih = jax.random.uniform(keys[1], (n_layers, H, 3 * H), jnp.float32, -k, k)
    w_hh = jax.random.uniform(keys[2], (n_layers, H, 3 * H), jnp.float32, -k, k)
    b_ih = jax.random.uniform(keys[3], (n_layers, 1, 3 * H), jnp.float32, -k, k)
    b_hh = jax.random.uniform(keys[4], (n_layers, 1, 3 * H), jnp.float32, -k, k)
    w_dec = jax.random.uniform(keys[5], (H, output_size), jnp.float32, -k, k)
    b_dec = jax.random.uniform(keys[6], (1, output_size), jnp.float32, -k, k)
    return (emb, w_ih, w_hh, b_ih, b_hh, w_dec, b_dec)


def pack_params(params, *, hidden_size, output_size, n_layers, hp, op):
    """Pad features to 128-lane multiples, pack the 3 GRU gates into
    128-lane-aligned [r | z | n] column blocks, cast weights to bf16."""
    H, O = hidden_size, output_size
    emb, w_ih, w_hh, b_ih, b_hh, w_dec, b_dec = params
    V = emb.shape[0]

    emb_p = jnp.zeros((V, hp), jnp.float32).at[:, :H].set(emb)

    wih = jnp.zeros((n_layers, hp, 3 * hp), jnp.float32)
    whh = jnp.zeros((n_layers, hp, 3 * hp), jnp.float32)
    bih = jnp.zeros((n_layers, 1, 3 * hp), jnp.float32)
    bhh = jnp.zeros((n_layers, 1, 3 * hp), jnp.float32)
    for l in range(n_layers):
        for g in range(3):  # r, z, n gate column blocks, each 128-lane aligned
            wih = wih.at[l, :H, g * hp:g * hp + H].set(w_ih[l][:, g * H:(g + 1) * H])
            whh = whh.at[l, :H, g * hp:g * hp + H].set(w_hh[l][:, g * H:(g + 1) * H])
            bih = bih.at[l, 0, g * hp:g * hp + H].set(b_ih[l, 0, g * H:(g + 1) * H])
            bhh = bhh.at[l, 0, g * hp:g * hp + H].set(b_hh[l, 0, g * H:(g + 1) * H])

    wd = jnp.zeros((hp, op), jnp.float32).at[:H, :O].set(w_dec)
    bd = jnp.zeros((1, op), jnp.float32).at[:, :O].set(b_dec)

    return (emb_p, wih.astype(jnp.bfloat16), whh.astype(jnp.bfloat16), bih, bhh,
            wd.astype(jnp.bfloat16), bd)


def rnn_forward_ref(params, tokens, hidden, *, hidden_size, n_layers):
    """Pure-JAX reference mirroring PyTorch GRU semantics (and the kernel's
    bf16-weight / f32-accumulate precision)."""
    H = hidden_size
    emb, w_ih, w_hh, b_ih, b_hh, w_dec, b_dec = params
    bf = lambda a: a.astype(jnp.bfloat16).astype(jnp.float32)

    hs = [hidden[l] for l in range(n_layers)]
    outs = []
    for i in range(tokens.shape[0]):
        x = emb[tokens[i]][None, :]
        for l in range(n_layers):
            h = hs[l]
            gi = bf(x) @ bf(w_ih[l]) + b_ih[l]
            gh = bf(h) @ bf(w_hh[l]) + b_hh[l]
            r = jax.nn.sigmoid(gi[:, :H] + gh[:, :H])
            z = jax.nn.sigmoid(gi[:, H:2 * H] + gh[:, H:2 * H])
            n = jnp.tanh(gi[:, 2 * H:] + r * gh[:, 2 * H:])
            h_new = (1.0 - z) * n + z * h
            hs[l] = h_new
            x = h_new
        outs.append(bf(x) @ bf(w_dec) + b_dec)
    return jnp.concatenate(outs, axis=0), jnp.stack(hs)


if __name__ == "__main__":
    input_size, hidden_size, output_size, n_layers = 16, 32, 16, 2
    seq_len = 8
    Hp = ((hidden_size + 127) // 128) * 128      # 128: lane-dense hidden
    Op = ((output_size + 127) // 128) * 128      # 128: lane-dense decoder output

    key = jax.random.PRNGKey(0)
    pkey, tkey = jax.random.split(key)
    params = init_params(pkey, input_size, hidden_size, output_size, n_layers)
    packed = pack_params(params, hidden_size=hidden_size, output_size=output_size,
                         n_layers=n_layers, hp=Hp, op=Op)

    tokens = jax.random.randint(tkey, (seq_len,), 0, input_size, dtype=jnp.int32)
    hidden = jnp.zeros((n_layers, 1, hidden_size), jnp.float32)          # init_hidden()
    # NOTE: pad lanes of the hidden carry MUST be zero (pack_params keeps the
    # padded weight/bias lanes zero, so zeros stay zero through the recurrence).
    hidden_p = jnp.zeros((n_layers, 1, Hp), jnp.float32).at[:, :, :hidden_size].set(hidden)

    out_p, h_out_p = rnn_forward(packed, tokens, hidden_p,
                                 n_layers=n_layers, hp=Hp, op=Op, seq_len=seq_len)
    jax.block_until_ready((out_p, h_out_p))

    out = out_p[:, :output_size]
    h_out = h_out_p[:, :, :hidden_size]

    out_ref, h_ref = rnn_forward_ref(params, tokens, hidden,
                                     hidden_size=hidden_size, n_layers=n_layers)

    assert out.shape == (seq_len, output_size)
    assert h_out.shape == (n_layers, 1, hidden_size)
    assert jnp.allclose(out, out_ref, atol=2e-3, rtol=2e-3), "decoder output mismatch"
    assert jnp.allclose(h_out, h_ref, atol=2e-3, rtol=2e-3), "hidden state mismatch"

    print("KERNEL_OK")
</pallas_src>

<mosaic_0001>
module attributes {stable_mosaic.version = 11 : i64} {
  func.func @gru_seq_kernel(%arg0: i32, %arg1: memref<8xi32, #tpu.memory_space<smem>>, %arg2: memref<16x128xf32, #tpu.memory_space<vmem>>, %arg3: memref<2x128x384xbf16, #tpu.memory_space<vmem>>, %arg4: memref<2x128x384xbf16, #tpu.memory_space<vmem>>, %arg5: memref<2x1x384xf32, #tpu.memory_space<vmem>>, %arg6: memref<2x1x384xf32, #tpu.memory_space<vmem>>, %arg7: memref<128x128xbf16, #tpu.memory_space<vmem>>, %arg8: memref<1x128xf32, #tpu.memory_space<vmem>>, %arg9: memref<2x1x128xf32, #tpu.memory_space<vmem>>, %arg10: memref<8x128xf32, #tpu.memory_space<vmem>>, %arg11: memref<2x1x128xf32, #tpu.memory_space<vmem>>, %arg12: memref<8x128xf32, #tpu.memory_space<vmem>>, %arg13: memref<8x384xf32, #tpu.memory_space<vmem>>) attributes {dimension_semantics = [#tpu.dimension_semantics<arbitrary>], iteration_bounds = array<i64: 1>, scalar_prefetch = 1 : i64, scratch_operands = 2 : i64, tpu.core_type = #tpu.core_type<tc>, window_params = [{pipeline_mode = #tpu.pipeline_mode<synchronous>, transform_indices = @transform_0, window_bounds = array<i64: 16, 128>}, {pipeline_mode = #tpu.pipeline_mode<synchronous>, transform_indices = @transform_1, window_bounds = array<i64: 2, 128, 384>}, {pipeline_mode = #tpu.pipeline_mode<synchronous>, transform_indices = @transform_2, window_bounds = array<i64: 2, 128, 384>}, {pipeline_mode = #tpu.pipeline_mode<synchronous>, transform_indices = @transform_3, window_bounds = array<i64: 2, 1, 384>}, {pipeline_mode = #tpu.pipeline_mode<synchronous>, transform_indices = @transform_4, window_bounds = array<i64: 2, 1, 384>}, {pipeline_mode = #tpu.pipeline_mode<synchronous>, transform_indices = @transform_5, window_bounds = array<i64: 128, 128>}, {pipeline_mode = #tpu.pipeline_mode<synchronous>, transform_indices = @transform_6, window_bounds = array<i64: 1, 128>}, {pipeline_mode = #tpu.pipeline_mode<synchronous>, transform_indices = @transform_7, window_bounds = array<i64: 2, 1, 128>}, {pipeline_mode = #tpu.pipeline_mode<synchronous>, transform_indices = @transform_8, window_bounds = array<i64: 8, 128>}, {pipeline_mode = #tpu.pipeline_mode<synchronous>, transform_indices = @transform_9, window_bounds = array<i64: 2, 1, 128>}]} {
    %c0 = arith.constant 0 : index
    %0 = memref.load %arg1[%c0] : memref<8xi32, #tpu.memory_space<smem>>
    %1 = arith.index_cast %0 : i32 to index
    %c0_0 = arith.constant 0 : index
    %2 = vector.load %arg2[%1, %c0_0] : memref<16x128xf32, #tpu.memory_space<vmem>>, vector<1x128xf32>
    %c0_1 = arith.constant 0 : index
    %c0_2 = arith.constant 0 : index
    %3 = vector.load %arg12[%c0_1, %c0_2] : memref<8x128xf32, #tpu.memory_space<vmem>>, vector<1x128xf32>
    tpu.vector_store %arg12[%c0_1, %c0_2], %2 {strides = array<i32>} : memref<8x128xf32, #tpu.memory_space<vmem>>, vector<1x128xf32>,
    %c1 = arith.constant 1 : index
    %4 = memref.load %arg1[%c1] : memref<8xi32, #tpu.memory_space<smem>>
    %5 = arith.index_cast %4 : i32 to index
    %c0_3 = arith.constant 0 : index
    %6 = vector.load %arg2[%5, %c0_3] : memref<16x128xf32, #tpu.memory_space<vmem>>, vector<1x128xf32>
    %c1_4 = arith.constant 1 : index
    %c0_5 = arith.constant 0 : index
    %7 = vector.load %arg12[%c1_4, %c0_5] : memref<8x128xf32, #tpu.memory_space<vmem>>, vector<1x128xf32>
    tpu.vector_store %arg12[%c1_4, %c0_5], %6 {strides = array<i32>} : memref<8x128xf32, #tpu.memory_space<vmem>>, vector<1x128xf32>,
    %c2 = arith.constant 2 : index
    %8 = memref.load %arg1[%c2] : memref<8xi32, #tpu.memory_space<smem>>
    %9 = arith.index_cast %8 : i32 to index
    %c0_6 = arith.constant 0 : index
    %10 = vector.load %arg2[%9, %c0_6] : memref<16x128xf32, #tpu.memory_space<vmem>>, vector<1x128xf32>
    %c2_7 = arith.constant 2 : index
    %c0_8 = arith.constant 0 : index
    %11 = vector.load %arg12[%c2_7, %c0_8] : memref<8x128xf32, #tpu.memory_space<vmem>>, vector<1x128xf32>
    tpu.vector_store %arg12[%c2_7, %c0_8], %10 {strides = array<i32>} : memref<8x128xf32, #tpu.memory_space<vmem>>, vector<1x128xf32>,
    %c3 = arith.constant 3 : index
    %12 = memref.load %arg1[%c3] : memref<8xi32, #tpu.memory_space<smem>>
    %13 = arith.index_cast %12 : i32 to index
    %c0_9 = arith.constant 0 : index
    %14 = vector.load %arg2[%13, %c0_9] : memref<16x128xf32, #tpu.memory_space<vmem>>, vector<1x128xf32>
    %c3_10 = arith.constant 3 : index
    %c0_11 = arith.constant 0 : index
    %15 = vector.load %arg12[%c3_10, %c0_11] : memref<8x128xf32, #tpu.memory_space<vmem>>, vector<1x128xf32>
    tpu.vector_store %arg12[%c3_10, %c0_11], %14 {strides = array<i32>} : memref<8x128xf32, #tpu.memory_space<vmem>>, vector<1x128xf32>,
    %c4 = arith.constant 4 : index
    %16 = memref.load %arg1[%c4] : memref<8xi32, #tpu.memory_space<smem>>
    %17 = arith.index_cast %16 : i32 to index
    %c0_12 = arith.constant 0 : index
    %18 = vector.load %arg2[%17, %c0_12] : memref<16x128xf32, #tpu.memory_space<vmem>>, vector<1x128xf32>
    %c4_13 = arith.constant 4 : index
    %c0_14 = arith.constant 0 : index
    %19 = vector.load %arg12[%c4_13, %c0_14] : memref<8x128xf32, #tpu.memory_space<vmem>>, vector<1x128xf32>
    tpu.vector_store %arg12[%c4_13, %c0_14], %18 {strides = array<i32>} : memref<8x128xf32, #tpu.memory_space<vmem>>, vector<1x128xf32>,
    %c5 = arith.constant 5 : index
    %20 = memref.load %arg1[%c5] : memref<8xi32, #tpu.memory_space<smem>>
    %21 = arith.index_cast %20 : i32 to index
    %c0_15 = arith.constant 0 : index
    %22 = vector.load %arg2[%21, %c0_15] : memref<16x128xf32, #tpu.memory_space<vmem>>, vector<1x128xf32>
    %c5_16 = arith.constant 5 : index
    %c0_17 = arith.constant 0 : index
    %23 = vector.load %arg12[%c5_16, %c0_17] : memref<8x128xf32, #tpu.memory_space<vmem>>, vector<1x128xf32>
    tpu.vector_store %arg12[%c5_16, %c0_17], %22 {strides = array<i32>} : memref<8x128xf32, #tpu.memory_space<vmem>>, vector<1x128xf32>,
    %c6 = arith.constant 6 : index
    %24 = memref.load %arg1[%c6] : memref<8xi32, #tpu.memory_space<smem>>
    %25 = arith.index_cast %24 : i32 to index
    %c0_18 = arith.constant 0 : index
    %26 = vector.load %arg2[%25, %c0_18] : memref<16x128xf32, #tpu.memory_space<vmem>>, vector<1x128xf32>
    %c6_19 = arith.constant 6 : index
    %c0_20 = arith.constant 0 : index
    %27 = vector.load %arg12[%c6_19, %c0_20] : memref<8x128xf32, #tpu.memory_space<vmem>>, vector<1x128xf32>
    tpu.vector_store %arg12[%c6_19, %c0_20], %26 {strides = array<i32>} : memref<8x128xf32, #tpu.memory_space<vmem>>, vector<1x128xf32>,
    %c7 = arith.constant 7 : index
    %28 = memref.load %arg1[%c7] : memref<8xi32, #tpu.memory_space<smem>>
    %29 = arith.index_cast %28 : i32 to index
    %c0_21 = arith.constant 0 : index
    %30 = vector.load %arg2[%29, %c0_21] : memref<16x128xf32, #tpu.memory_space<vmem>>, vector<1x128xf32>
    %c7_22 = arith.constant 7 : index
    %c0_23 = arith.constant 0 : index
    %31 = vector.load %arg12[%c7_22, %c0_23] : memref<8x128xf32, #tpu.memory_space<vmem>>, vector<1x128xf32>
    tpu.vector_store %arg12[%c7_22, %c0_23], %30 {strides = array<i32>} : memref<8x128xf32, #tpu.memory_space<vmem>>, vector<1x128xf32>,
    %c0_24 = arith.constant 0 : index
    %c0_25 = arith.constant 0 : index
    %32 = vector.load %arg12[%c0_24, %c0_25] : memref<8x128xf32, #tpu.memory_space<vmem>>, vector<8x128xf32>
    %33 = arith.truncf %32 : vector<8x128xf32> to vector<8x128xbf16>
    %c0_26 = arith.constant 0 : index
    %c0_27 = arith.constant 0 : index
    %c0_28 = arith.constant 0 : index
    %34 = vector.load %arg3[%c0_26, %c0_27, %c0_28] : memref<2x128x384xbf16, #tpu.memory_space<vmem>>, vector<1x128x384xbf16>
    %35 = vector.shape_cast %34 : vector<1x128x384xbf16> to vector<128x384xbf16>
    %cst = arith.constant dense<0.000000e+00> : vector<8x384xf32>
    %36 = tpu.matmul %33, %35, %cst {dimension_numbers = #tpu.dot_dimension_numbers<[1], [0], [0], [1], [0, 0, 1, 1], [], []>} : vector<8x128xbf16>, vector<128x384xbf16>, vector<8x384xf32> -> vector<8x384xf32>
    %c0_29 = arith.constant 0 : index
    %c0_30 = arith.constant 0 : index
    %c0_31 = arith.constant 0 : index
    %37 = vector.load %arg5[%c0_29, %c0_30, %c0_31] : memref<2x1x384xf32, #tpu.memory_space<vmem>>, vector<1x1x384xf32>
    %38 = vector.shape_cast %37 : vector<1x1x384xf32> to vector<1x384xf32>
    %39 = vector.broadcast %38 : vector<1x384xf32> to vector<8x384xf32>
    %40 = arith.addf %36, %39 : vector<8x384xf32>
    %c0_32 = arith.constant 0 : index
    %c0_33 = arith.constant 0 : index
    %41 = vector.load %arg13[%c0_32, %c0_33] : memref<8x384xf32, #tpu.memory_space<vmem>>, vector<8x384xf32>
    tpu.vector_store %arg13[%c0_32, %c0_33], %40 {strides = array<i32>} : memref<8x384xf32, #tpu.memory_space<vmem>>, vector<8x384xf32>,
    %c0_34 = arith.constant 0 : index
    %c0_35 = arith.constant 0 : index
    %c0_36 = arith.constant 0 : index
    %42 = vector.load %arg9[%c0_34, %c0_35, %c0_36] : memref<2x1x128xf32, #tpu.memory_space<vmem>>, vector<1x1x128xf32>
    %43 = vector.shape_cast %42 : vector<1x1x128xf32> to vector<1x128xf32>
    %c0_i32 = arith.constant 0 : i32
    %44 = arith.truncf %43 : vector<1x128xf32> to vector<1x128xbf16>
    %c0_37 = arith.constant 0 : index
    %c0_38 = arith.constant 0 : index
    %c0_39 = arith.constant 0 : index
    %45 = vector.load %arg4[%c0_37, %c0_38, %c0_39] : memref<2x128x384xbf16, #tpu.memory_space<vmem>>, vector<1x128x384xbf16>
    %46 = vector.shape_cast %45 : vector<1x128x384xbf16> to vector<128x384xbf16>
    %cst_40 = arith.constant dense<0.000000e+00> : vector<1x384xf32>
    %47 = tpu.matmul %44, %46, %cst_40 {dimension_numbers = #tpu.dot_dimension_numbers<[1], [0], [0], [1], [0, 0, 1, 1], [], []>} : vector<1x128xbf16>, vector<128x384xbf16>, vector<1x384xf32> -> vector<1x384xf32>
    %c0_41 = arith.constant 0 : index
    %c0_42 = arith.constant 0 : index
    %c0_43 = arith.constant 0 : index
    %48 = vector.load %arg6[%c0_41, %c0_42, %c0_43] : memref<2x1x384xf32, #tpu.memory_space<vmem>>, vector<1x1x384xf32>
    %49 = vector.shape_cast %48 : vector<1x1x384xf32> to vector<1x384xf32>
    %50 = arith.addf %47, %49 : vector<1x384xf32>
    %51 = arith.index_cast %c0_i32 : i32 to index
    %c0_44 = arith.constant 0 : index
    %52 = vector.load %arg13[%51, %c0_44] : memref<8x384xf32, #tpu.memory_space<vmem>>, vector<1x384xf32>
    %53 = vector.extract_strided_slice %52 {offsets = [0, 0], sizes = [1, 128], strides = [1, 1]} : vector<1x384xf32> to vector<1x128xf32>
    %54 = vector.extract_strided_slice %50 {offsets = [0, 0], sizes = [1, 128], strides = [1, 1]} : vector<1x384xf32> to vector<1x128xf32>
    %55 = arith.addf %53, %54 : vector<1x128xf32>
    %56 = arith.negf %55 : vector<1x128xf32>
    %57 = math.exp %56 : vector<1x128xf32>
    %cst_45 = arith.constant 1.000000e+00 : f32
    %58 = vector.broadcast %cst_45 : f32 to vector<1x128xf32>
    %59 = arith.addf %58, %57 : vector<1x128xf32>
    %60 = arith.divf %58, %59 : vector<1x128xf32>
    %61 = vector.extract_strided_slice %52 {offsets = [0, 128], sizes = [1, 128], strides = [1, 1]} : vector<1x384xf32> to vector<1x128xf32>
    %62 = vector.extract_strided_slice %50 {offsets = [0, 128], sizes = [1, 128], strides = [1, 1]} : vector<1x384xf32> to vector<1x128xf32>
    %63 = arith.addf %61, %62 : vector<1x128xf32>
    %64 = arith.negf %63 : vector<1x128xf32>
    %65 = math.exp %64 : vector<1x128xf32>
    %cst_46 = arith.constant 1.000000e+00 : f32
    %66 = vector.broadcast %cst_46 : f32 to vector<1x128xf32>
    %67 = arith.addf %66, %65 : vector<1x128xf32>
    %68 = arith.divf %66, %67 : vector<1x128xf32>
    %69 = vector.extract_strided_slice %52 {offsets = [0, 256], sizes = [1, 128], strides = [1, 1]} : vector<1x384xf32> to vector<1x128xf32>
    %70 = vector.extract_strided_slice %50 {offsets = [0, 256], sizes = [1, 128], strides = [1, 1]} : vector<1x384xf32> to vector<1x128xf32>
    %71 = arith.mulf %60, %70 : vector<1x128xf32>
    %72 = arith.addf %69, %71 : vector<1x128xf32>
    %73 = math.tanh %72 : vector<1x128xf32>
    %cst_47 = arith.constant 1.000000e+00 : f32
    %74 = vector.broadcast %cst_47 : f32 to vector<1x128xf32>
    %75 = arith.subf %74, %68 : vector<1x128xf32>
    %76 = arith.mulf %75, %73 : vector<1x128xf32>
    %77 = arith.mulf %68, %43 : vector<1x128xf32>
    %78 = arith.addf %76, %77 : vector<1x128xf32>
    %79 = arith.index_cast %c0_i32 : i32 to index
    %c0_48 = arith.constant 0 : index
    %80 = vector.load %arg12[%79, %c0_48] : memref<8x128xf32, #tpu.memory_space<vmem>>, vector<1x128xf32>
    tpu.vector_store %arg12[%79, %c0_48], %78 {strides = array<i32>} : memref<8x128xf32, #tpu.memory_space<vmem>>, vector<1x128xf32>,
    %c1_i32 = arith.constant 1 : i32
    %81 = arith.truncf %78 : vector<1x128xf32> to vector<1x128xbf16>
    %c0_49 = arith.constant 0 : index
    %c0_50 = arith.constant 0 : index
    %c0_51 = arith.constant 0 : index
    %82 = vector.load %arg4[%c0_49, %c0_50, %c0_51] : memref<2x128x384xbf16, #tpu.memory_space<vmem>>, vector<1x128x384xbf16>
    %83 = vector.shape_cast %82 : vector<1x128x384xbf16> to vector<128x384xbf16>
    %cst_52 = arith.constant dense<0.000000e+00> : vector<1x384xf32>
    %84 = tpu.matmul %81, %83, %cst_52 {dimension_numbers = #tpu.dot_dimension_numbers<[1], [0], [0], [1], [0, 0, 1, 1], [], []>} : vector<1x128xbf16>, vector<128x384xbf16>, vector<1x384xf32> -> vector<1x384xf32>
    %c0_53 = arith.constant 0 : index
    %c0_54 = arith.constant 0 : index
    %c0_55 = arith.constant 0 : index
    %85 = vector.load %arg6[%c0_53, %c0_54, %c0_55] : memref<2x1x384xf32, #tpu.memory_space<vmem>>, vector<1x1x384xf32>
    %86 = vector.shape_cast %85 : vector<1x1x384xf32> to vector<1x384xf32>
    %87 = arith.addf %84, %86 : vector<1x384xf32>
    %88 = arith.index_cast %c1_i32 : i32 to index
    %c0_56 = arith.constant 0 : index
    %89 = vector.load %arg13[%88, %c0_56] : memref<8x384xf32, #tpu.memory_space<vmem>>, vector<1x384xf32>
    %90 = vector.extract_strided_slice %89 {offsets = [0, 0], sizes = [1, 128], strides = [1, 1]} : vector<1x384xf32> to vector<1x128xf32>
    %91 = vector.extract_strided_slice %87 {offsets = [0, 0], sizes = [1, 128], strides = [1, 1]} : vector<1x384xf32> to vector<1x128xf32>
    %92 = arith.addf %90, %91 : vector<1x128xf32>
    %93 = arith.negf %92 : vector<1x128xf32>
    %94 = math.exp %93 : vector<1x128xf32>
    %cst_57 = arith.constant 1.000000e+00 : f32
    %95 = vector.broadcast %cst_57 : f32 to vector<1x128xf32>
    %96 = arith.addf %95, %94 : vector<1x128xf32>
    %97 = arith.divf %95, %96 : vector<1x128xf32>
    %98 = vector.extract_strided_slice %89 {offsets = [0, 128], sizes = [1, 128], strides = [1, 1]} : vector<1x384xf32> to vector<1x128xf32>
    %99 = vector.extract_strided_slice %87 {offsets = [0, 128], sizes = [1, 128], strides = [1, 1]} : vector<1x384xf32> to vector<1x128xf32>
    %100 = arith.addf %98, %99 : vector<1x128xf32>
    %101 = arith.negf %100 : vector<1x128xf32>
    %102 = math.exp %101 : vector<1x128xf32>
    %cst_58 = arith.constant 1.000000e+00 : f32
    %103 = vector.broadcast %cst_58 : f32 to vector<1x128xf32>
    %104 = arith.addf %103, %102 : vector<1x128xf32>
    %105 = arith.divf %103, %104 : vector<1x128xf32>
    %106 = vector.extract_strided_slice %89 {offsets = [0, 256], sizes = [1, 128], strides = [1, 1]} : vector<1x384xf32> to vector<1x128xf32>
    %107 = vector.extract_strided_slice %87 {offsets = [0, 256], sizes = [1, 128], strides = [1, 1]} : vector<1x384xf32> to vector<1x128xf32>
    %108 = arith.mulf %97, %107 : vector<1x128xf32>
    %109 = arith.addf %106, %108 : vector<1x128xf32>
    %110 = math.tanh %109 : vector<1x128xf32>
    %cst_59 = arith.constant 1.000000e+00 : f32
    %111 = vector.broadcast %cst_59 : f32 to vector<1x128xf32>
    %112 = arith.subf %111, %105 : vector<1x128xf32>
    %113 = arith.mulf %112, %110 : vector<1x128xf32>
    %114 = arith.mulf %105, %78 : vector<1x128xf32>
    %115 = arith.addf %113, %114 : vector<1x128xf32>
    %116 = arith.index_cast %c1_i32 : i32 to index
    %c0_60 = arith.constant 0 : index
    %117 = vector.load %arg12[%116, %c0_60] : memref<8x128xf32, #tpu.memory_space<vmem>>, vector<1x128xf32>
    tpu.vector_store %arg12[%116, %c0_60], %115 {strides = array<i32>} : memref<8x128xf32, #tpu.memory_space<vmem>>, vector<1x128xf32>,
    %c2_i32 = arith.constant 2 : i32
    %118 = arith.truncf %115 : vector<1x128xf32> to vector<1x128xbf16>
    %c0_61 = arith.constant 0 : index
    %c0_62 = arith.constant 0 : index
    %c0_63 = arith.constant 0 : index
    %119 = vector.load %arg4[%c0_61, %c0_62, %c0_63] : memref<2x128x384xbf16, #tpu.memory_space<vmem>>, vector<1x128x384xbf16>
    %120 = vector.shape_cast %119 : vector<1x128x384xbf16> to vector<128x384xbf16>
    %cst_64 = arith.constant dense<0.000000e+00> : vector<1x384xf32>
    %121 = tpu.matmul %118, %120, %cst_64 {dimension_numbers = #tpu.dot_dimension_numbers<[1], [0], [0], [1], [0, 0, 1, 1], [], []>} : vector<1x128xbf16>, vector<128x384xbf16>, vector<1x384xf32> -> vector<1x384xf32>
    %c0_65 = arith.constant 0 : index
    %c0_66 = arith.constant 0 : index
    %c0_67 = arith.constant 0 : index
    %122 = vector.load %arg6[%c0_65, %c0_66, %c0_67] : memref<2x1x384xf32, #tpu.memory_space<vmem>>, vector<1x1x384xf32>
    %123 = vector.shape_cast %122 : vector<1x1x384xf32> to vector<1x384xf32>
    %124 = arith.addf %121, %123 : vector<1x384xf32>
    %125 = arith.index_cast %c2_i32 : i32 to index
    %c0_68 = arith.constant 0 : index
    %126 = vector.load %arg13[%125, %c0_68] : memref<8x384xf32, #tpu.memory_space<vmem>>, vector<1x384xf32>
    %127 = vector.extract_strided_slice %126 {offsets = [0, 0], sizes = [1, 128], strides = [1, 1]} : vector<1x384xf32> to vector<1x128xf32>
    %128 = vector.extract_strided_slice %124 {offsets = [0, 0], sizes = [1, 128], strides = [1, 1]} : vector<1x384xf32> to vector<1x128xf32>
    %129 = arith.addf %127, %128 : vector<1x128xf32>
    %130 = arith.negf %129 : vector<1x128xf32>
    %131 = math.exp %130 : vector<1x128xf32>
    %cst_69 = arith.constant 1.000000e+00 : f32
    %132 = vector.broadcast %cst_69 : f32 to vector<1x128xf32>
    %133 = arith.addf %132, %131 : vector<1x128xf32>
    %134 = arith.divf %132, %133 : vector<1x128xf32>
    %135 = vector.extract_strided_slice %126 {offsets = [0, 128], sizes = [1, 128], strides = [1, 1]} : vector<1x384xf32> to vector<1x128xf32>
    %136 = vector.extract_strided_slice %124 {offsets = [0, 128], sizes = [1, 128], strides = [1, 1]} : vector<1x384xf32> to vector<1x128xf32>
    %137 = arith.addf %135, %136 : vector<1x128xf32>
    %138 = arith.negf %137 : vector<1x128xf32>
    %139 = math.exp %138 : vector<1x128xf32>
    %cst_70 = arith.constant 1.000000e+00 : f32
    %140 = vector.broadcast %cst_70 : f32 to vector<1x128xf32>
    %141 = arith.addf %140, %139 : vector<1x128xf32>
    %142 = arith.divf %140, %141 : vector<1x128xf32>
    %143 = vector.extract_strided_slice %126 {offsets = [0, 256], sizes = [1, 128], strides = [1, 1]} : vector<1x384xf32> to vector<1x128xf32>
    %144 = vector.extract_strided_slice %124 {offsets = [0, 256], sizes = [1, 128], strides = [1, 1]} : vector<1x384xf32> to vector<1x128xf32>
    %145 = arith.mulf %134, %144 : vector<1x128xf32>
    %146 = arith.addf %143, %145 : vector<1x128xf32>
    %147 = math.tanh %146 : vector<1x128xf32>
    %cst_71 = arith.constant 1.000000e+00 : f32
    %148 = vector.broadcast %cst_71 : f32 to vector<1x128xf32>
    %149 = arith.subf %148, %142 : vector<1x128xf32>
    %150 = arith.mulf %149, %147 : vector<1x128xf32>
    %151 = arith.mulf %142, %115 : vector<1x128xf32>
    %152 = arith.addf %150, %151 : vector<1x128xf32>
    %153 = arith.index_cast %c2_i32 : i32 to index
    %c0_72 = arith.constant 0 : index
    %154 = vector.load %arg12[%153, %c0_72] : memref<8x128xf32, #tpu.memory_space<vmem>>, vector<1x128xf32>
    tpu.vector_store %arg12[%153, %c0_72], %152 {strides = array<i32>} : memref<8x128xf32, #tpu.memory_space<vmem>>, vector<1x128xf32>,
    %c3_i32 = arith.constant 3 : i32
    %155 = arith.truncf %152 : vector<1x128xf32> to vector<1x128xbf16>
    %c0_73 = arith.constant 0 : index
    %c0_74 = arith.constant 0 : index
    %c0_75 = arith.constant 0 : index
    %156 = vector.load %arg4[%c0_73, %c0_74, %c0_75] : memref<2x128x384xbf16, #tpu.memory_space<vmem>>, vector<1x128x384xbf16>
    %157 = vector.shape_cast %156 : vector<1x128x384xbf16> to vector<128x384xbf16>
    %cst_76 = arith.constant dense<0.000000e+00> : vector<1x384xf32>
    %158 = tpu.matmul %155, %157, %cst_76 {dimension_numbers = #tpu.dot_dimension_numbers<[1], [0], [0], [1], [0, 0, 1, 1], [], []>} : vector<1x128xbf16>, vector<128x384xbf16>, vector<1x384xf32> -> vector<1x384xf32>
    %c0_77 = arith.constant 0 : index
    %c0_78 = arith.constant 0 : index
    %c0_79 = arith.constant 0 : index
    %159 = vector.load %arg6[%c0_77, %c0_78, %c0_79] : memref<2x1x384xf32, #tpu.memory_space<vmem>>, vector<1x1x384xf32>
    %160 = vector.shape_cast %159 : vector<1x1x384xf32> to vector<1x384xf32>
    %161 = arith.addf %158, %160 : vector<1x384xf32>
    %162 = arith.index_cast %c3_i32 : i32 to index
    %c0_80 = arith.constant 0 : index
    %163 = vector.load %arg13[%162, %c0_80] : memref<8x384xf32, #tpu.memory_space<vmem>>, vector<1x384xf32>
    %164 = vector.extract_strided_slice %163 {offsets = [0, 0], sizes = [1, 128], strides = [1, 1]} : vector<1x384xf32> to vector<1x128xf32>
    %165 = vector.extract_strided_slice %161 {offsets = [0, 0], sizes = [1, 128], strides = [1, 1]} : vector<1x384xf32> to vector<1x128xf32>
    %166 = arith.addf %164, %165 : vector<1x128xf32>
    %167 = arith.negf %166 : vector<1x128xf32>
    %168 = math.exp %167 : vector<1x128xf32>
    %cst_81 = arith.constant 1.000000e+00 : f32
    %169 = vector.broadcast %cst_81 : f32 to vector<1x128xf32>
    %170 = arith.addf %169, %168 : vector<1x128xf32>
    %171 = arith.divf %169, %170 : vector<1x128xf32>
    %172 = vector.extract_strided_slice %163 {offsets = [0, 128], sizes = [1, 128], strides = [1, 1]} : vector<1x384xf32> to vector<1x128xf32>
    %173 = vector.extract_strided_slice %161 {offsets = [0, 128], sizes = [1, 128], strides = [1, 1]} : vector<1x384xf32> to vector<1x128xf32>
    %174 = arith.addf %172, %173 : vector<1x128xf32>
    %175 = arith.negf %174 : vector<1x128xf32>
    %176 = math.exp %175 : vector<1x128xf32>
    %cst_82 = arith.constant 1.000000e+00 : f32
    %177 = vector.broadcast %cst_82 : f32 to vector<1x128xf32>
    %178 = arith.addf %177, %176 : vector<1x128xf32>
    %179 = arith.divf %177, %178 : vector<1x128xf32>
    %180 = vector.extract_strided_slice %163 {offsets = [0, 256], sizes = [1, 128], strides = [1, 1]} : vector<1x384xf32> to vector<1x128xf32>
    %181 = vector.extract_strided_slice %161 {offsets = [0, 256], sizes = [1, 128], strides = [1, 1]} : vector<1x384xf32> to vector<1x128xf32>
    %182 = arith.mulf %171, %181 : vector<1x128xf32>
    %183 = arith.addf %180, %182 : vector<1x128xf32>
    %184 = math.tanh %183 : vector<1x128xf32>
    %cst_83 = arith.constant 1.000000e+00 : f32
    %185 = vector.broadcast %cst_83 : f32 to vector<1x128xf32>
    %186 = arith.subf %185, %179 : vector<1x128xf32>
    %187 = arith.mulf %186, %184 : vector<1x128xf32>
    %188 = arith.mulf %179, %152 : vector<1x128xf32>
    %189 = arith.addf %187, %188 : vector<1x128xf32>
    %190 = arith.index_cast %c3_i32 : i32 to index
    %c0_84 = arith.constant 0 : index
    %191 = vector.load %arg12[%190, %c0_84] : memref<8x128xf32, #tpu.memory_space<vmem>>, vector<1x128xf32>
    tpu.vector_store %arg12[%190, %c0_84], %189 {strides = array<i32>} : memref<8x128xf32, #tpu.memory_space<vmem>>, vector<1x128xf32>,
    %c4_i32 = arith.constant 4 : i32
    %192 = arith.truncf %189 : vector<1x128xf32> to vector<1x128xbf16>
    %c0_85 = arith.constant 0 : index
    %c0_86 = arith.constant 0 : index
    %c0_87 = arith.constant 0 : index
    %193 = vector.load %arg4[%c0_85, %c0_86, %c0_87] : memref<2x128x384xbf16, #tpu.memory_space<vmem>>, vector<1x128x384xbf16>
    %194 = vector.shape_cast %193 : vector<1x128x384xbf16> to vector<128x384xbf16>
    %cst_88 = arith.constant dense<0.000000e+00> : vector<1x384xf32>
    %195 = tpu.matmul %192, %194, %cst_88 {dimension_numbers = #tpu.dot_dimension_numbers<[1], [0], [0], [1], [0, 0, 1, 1], [], []>} : vector<1x128xbf16>, vector<128x384xbf16>, vector<1x384xf32> -> vector<1x384xf32>
    %c0_89 = arith.constant 0 : index
    %c0_90 = arith.constant 0 : index
    %c0_91 = arith.constant 0 : index
    %196 = vector.load %arg6[%c0_89, %c0_90, %c0_91] : memref<2x1x384xf32, #tpu.memory_space<vmem>>, vector<1x1x384xf32>
    %197 = vector.shape_cast %196 : vector<1x1x384xf32> to vector<1x384xf32>
    %198 = arith.addf %195, %197 : vector<1x384xf32>
    %199 = arith.index_cast %c4_i32 : i32 to index
    %c0_92 = arith.constant 0 : index
    %200 = vector.load %arg13[%199, %c0_92] : memref<8x384xf32, #tpu.memory_space<vmem>>, vector<1x384xf32>
    %201 = vector.extract_strided_slice %200 {offsets = [0, 0], sizes = [1, 128], strides = [1, 1]} : vector<1x384xf32> to vector<1x128xf32>
    %202 = vector.extract_strided_slice %198 {offsets = [0, 0], sizes = [1, 128], strides = [1, 1]} : vector<1x384xf32> to vector<1x128xf32>
    %203 = arith.addf %201, %202 : vector<1x128xf32>
    %204 = arith.negf %203 : vector<1x128xf32>
    %205 = math.exp %204 : vector<1x128xf32>
    %cst_93 = arith.constant 1.000000e+00 : f32
    %206 = vector.broadcast %cst_93 : f32 to vector<1x128xf32>
    %207 = arith.addf %206, %205 : vector<1x128xf32>
    %208 = arith.divf %206, %207 : vector<1x128xf32>
    %209 = vector.extract_strided_slice %200 {offsets = [0, 128], sizes = [1, 128], strides = [1, 1]} : vector<1x384xf32> to vector<1x128xf32>
    %210 = vector.extract_strided_slice %198 {offsets = [0, 128], sizes = [1, 128], strides = [1, 1]} : vector<1x384xf32> to vector<1x128xf32>
    %211 = arith.addf %209, %210 : vector<1x128xf32>
    %212 = arith.negf %211 : vector<1x128xf32>
    %213 = math.exp %212 : vector<1x128xf32>
    %cst_94 = arith.constant 1.000000e+00 : f32
    %214 = vector.broadcast %cst_94 : f32 to vector<1x128xf32>
    %215 = arith.addf %214, %213 : vector<1x128xf32>
    %216 = arith.divf %214, %215 : vector<1x128xf32>
    %217 = vector.extract_strided_slice %200 {offsets = [0, 256], sizes = [1, 128], strides = [1, 1]} : vector<1x384xf32> to vector<1x128xf32>
    %218 = vector.extract_strided_slice %198 {offsets = [0, 256], sizes = [1, 128], strides = [1, 1]} : vector<1x384xf32> to vector<1x128xf32>
    %219 = arith.mulf %208, %218 : vector<1x128xf32>
    %220 = arith.addf %217, %219 : vector<1x128xf32>
    %221 = math.tanh %220 : vector<1x128xf32>
    %cst_95 = arith.constant 1.000000e+00 : f32
    %222 = vector.broadcast %cst_95 : f32 to vector<1x128xf32>
    %223 = arith.subf %222, %216 : vector<1x128xf32>
    %224 = arith.mulf %223, %221 : vector<1x128xf32>
    %225 = arith.mulf %216, %189 : vector<1x128xf32>
    %226 = arith.addf %224, %225 : vector<1x128xf32>
    %227 = arith.index_cast %c4_i32 : i32 to index
    %c0_96 = arith.constant 0 : index
    %228 = vector.load %arg12[%227, %c0_96] : memref<8x128xf32, #tpu.memory_space<vmem>>, vector<1x128xf32>
    tpu.vector_store %arg12[%227, %c0_96], %226 {strides = array<i32>} : memref<8x128xf32, #tpu.memory_space<vmem>>, vector<1x128xf32>,
    %c5_i32 = arith.constant 5 : i32
    %229 = arith.truncf %226 : vector<1x128xf32> to vector<1x128xbf16>
    %c0_97 = arith.constant 0 : index
    %c0_98 = arith.constant 0 : index
    %c0_99 = arith.constant 0 : index
    %230 = vector.load %arg4[%c0_97, %c0_98, %c0_99] : memref<2x128x384xbf16, #tpu.memory_space<vmem>>, vector<1x128x384xbf16>
    %231 = vector.shape_cast %230 : vector<1x128x384xbf16> to vector<128x384xbf16>
    %cst_100 = arith.constant dense<0.000000e+00> : vector<1x384xf32>
    %232 = tpu.matmul %229, %231, %cst_100 {dimension_numbers = #tpu.dot_dimension_numbers<[1], [0], [0], [1], [0, 0, 1, 1], [], []>} : vector<1x128xbf16>, vector<128x384xbf16>, vector<1x384xf32> -> vector<1x384xf32>
    %c0_101 = arith.constant 0 : index
    %c0_102 = arith.constant 0 : index
    %c0_103 = arith.constant 0 : index
    %233 = vector.load %arg6[%c0_101, %c0_102, %c0_103] : memref<2x1x384xf32, #tpu.memory_space<vmem>>, vector<1x1x384xf32>
    %234 = vector.shape_cast %233 : vector<1x1x384xf32> to vector<1x384xf32>
    %235 = arith.addf %232, %234 : vector<1x384xf32>
    %236 = arith.index_cast %c5_i32 : i32 to index
    %c0_104 = arith.constant 0 : index
    %237 = vector.load %arg13[%236, %c0_104] : memref<8x384xf32, #tpu.memory_space<vmem>>, vector<1x384xf32>
    %238 = vector.extract_strided_slice %237 {offsets = [0, 0], sizes = [1, 128], strides = [1, 1]} : vector<1x384xf32> to vector<1x128xf32>
    %239 = vector.extract_strided_slice %235 {offsets = [0, 0], sizes = [1, 128], strides = [1, 1]} : vector<1x384xf32> to vector<1x128xf32>
    %240 = arith.addf %238, %239 : vector<1x128xf32>
    %241 = arith.negf %240 : vector<1x128xf32>
    %242 = math.exp %241 : vector<1x128xf32>
    %cst_105 = arith.constant 1.000000e+00 : f32
    %243 = vector.broadcast %cst_105 : f32 to vector<1x128xf32>
    %244 = arith.addf %243, %242 : vector<1x128xf32>
    %245 = arith.divf %243, %244 : vector<1x128xf32>
    %246 = vector.extract_strided_slice %237 {offsets = [0, 128], sizes = [1, 128], strides = [1, 1]} : vector<1x384xf32> to vector<1x128xf32>
    %247 = vector.extract_strided_slice %235 {offsets = [0, 128], sizes = [1, 128], strides = [1, 1]} : vector<1x384xf32> to vector<1x128xf32>
    %248 = arith.addf %246, %247 : vector<1x128xf32>
    %249 = arith.negf %248 : vector<1x128xf32>
    %250 = math.exp %249 : vector<1x128xf32>
    %cst_106 = arith.constant 1.000000e+00 : f32
    %251 = vector.broadcast %cst_106 : f32 to vector<1x128xf32>
    %252 = arith.addf %251, %250 : vector<1x128xf32>
    %253 = arith.divf %251, %252 : vector<1x128xf32>
    %254 = vector.extract_strided_slice %237 {offsets = [0, 256], sizes = [1, 128], strides = [1, 1]} : vector<1x384xf32> to vector<1x128xf32>
    %255 = vector.extract_strided_slice %235 {offsets = [0, 256], sizes = [1, 128], strides = [1, 1]} : vector<1x384xf32> to vector<1x128xf32>
    %256 = arith.mulf %245, %255 : vector<1x128xf32>
    %257 = arith.addf %254, %256 : vector<1x128xf32>
    %258 = math.tanh %257 : vector<1x128xf32>
    %cst_107 = arith.constant 1.000000e+00 : f32
    %259 = vector.broadcast %cst_107 : f32 to vector<1x128xf32>
    %260 = arith.subf %259, %253 : vector<1x128xf32>
    %261 = arith.mulf %260, %258 : vector<1x128xf32>
    %262 = arith.mulf %253, %226 : vector<1x128xf32>
    %263 = arith.addf %261, %262 : vector<1x128xf32>
    %264 = arith.index_cast %c5_i32 : i32 to index
    %c0_108 = arith.constant 0 : index
    %265 = vector.load %arg12[%264, %c0_108] : memref<8x128xf32, #tpu.memory_space<vmem>>, vector<1x128xf32>
    tpu.vector_store %arg12[%264, %c0_108], %263 {strides = array<i32>} : memref<8x128xf32, #tpu.memory_space<vmem>>, vector<1x128xf32>,
    %c6_i32 = arith.constant 6 : i32
    %266 = arith.truncf %263 : vector<1x128xf32> to vector<1x128xbf16>
    %c0_109 = arith.constant 0 : index
    %c0_110 = arith.constant 0 : index
    %c0_111 = arith.constant 0 : index
    %267 = vector.load %arg4[%c0_109, %c0_110, %c0_111] : memref<2x128x384xbf16, #tpu.memory_space<vmem>>, vector<1x128x384xbf16>
    %268 = vector.shape_cast %267 : vector<1x128x384xbf16> to vector<128x384xbf16>
    %cst_112 = arith.constant dense<0.000000e+00> : vector<1x384xf32>
    %269 = tpu.matmul %266, %268, %cst_112 {dimension_numbers = #tpu.dot_dimension_numbers<[1], [0], [0], [1], [0, 0, 1, 1], [], []>} : vector<1x128xbf16>, vector<128x384xbf16>, vector<1x384xf32> -> vector<1x384xf32>
    %c0_113 = arith.constant 0 : index
    %c0_114 = arith.constant 0 : index
    %c0_115 = arith.constant 0 : index
    %270 = vector.load %arg6[%c0_113, %c0_114, %c0_115] : memref<2x1x384xf32, #tpu.memory_space<vmem>>, vector<1x1x384xf32>
    %271 = vector.shape_cast %270 : vector<1x1x384xf32> to vector<1x384xf32>
    %272 = arith.addf %269, %271 : vector<1x384xf32>
    %273 = arith.index_cast %c6_i32 : i32 to index
    %c0_116 = arith.constant 0 : index
    %274 = vector.load %arg13[%273, %c0_116] : memref<8x384xf32, #tpu.memory_space<vmem>>, vector<1x384xf32>
    %275 = vector.extract_strided_slice %274 {offsets = [0, 0], sizes = [1, 128], strides = [1, 1]} : vector<1x384xf32> to vector<1x128xf32>
    %276 = vector.extract_strided_slice %272 {offsets = [0, 0], sizes = [1, 128], strides = [1, 1]} : vector<1x384xf32> to vector<1x128xf32>
    %277 = arith.addf %275, %276 : vector<1x128xf32>
    %278 = arith.negf %277 : vector<1x128xf32>
    %279 = math.exp %278 : vector<1x128xf32>
    %cst_117 = arith.constant 1.000000e+00 : f32
    %280 = vector.broadcast %cst_117 : f32 to vector<1x128xf32>
    %281 = arith.addf %280, %279 : vector<1x128xf32>
    %282 = arith.divf %280, %281 : vector<1x128xf32>
    %283 = vector.extract_strided_slice %274 {offsets = [0, 128], sizes = [1, 128], strides = [1, 1]} : vector<1x384xf32> to vector<1x128xf32>
    %284 = vector.extract_strided_slice %272 {offsets = [0, 128], sizes = [1, 128], strides = [1, 1]} : vector<1x384xf32> to vector<1x128xf32>
    %285 = arith.addf %283, %284 : vector<1x128xf32>
    %286 = arith.negf %285 : vector<1x128xf32>
    %287 = math.exp %286 : vector<1x128xf32>
    %cst_118 = arith.constant 1.000000e+00 : f32
    %288 = vector.broadcast %cst_118 : f32 to vector<1x128xf32>
    %289 = arith.addf %288, %287 : vector<1x128xf32>
    %290 = arith.divf %288, %289 : vector<1x128xf32>
    %291 = vector.extract_strided_slice %274 {offsets = [0, 256], sizes = [1, 128], strides = [1, 1]} : vector<1x384xf32> to vector<1x128xf32>
    %292 = vector.extract_strided_slice %272 {offsets = [0, 256], sizes = [1, 128], strides = [1, 1]} : vector<1x384xf32> to vector<1x128xf32>
    %293 = arith.mulf %282, %292 : vector<1x128xf32>
    %294 = arith.addf %291, %293 : vector<1x128xf32>
    %295 = math.tanh %294 : vector<1x128xf32>
    %cst_119 = arith.constant 1.000000e+00 : f32
    %296 = vector.broadcast %cst_119 : f32 to vector<1x128xf32>
    %297 = arith.subf %296, %290 : vector<1x128xf32>
    %298 = arith.mulf %297, %295 : vector<1x128xf32>
    %299 = arith.mulf %290, %263 : vector<1x128xf32>
    %300 = arith.addf %298, %299 : vector<1x128xf32>
    %301 = arith.index_cast %c6_i32 : i32 to index
    %c0_120 = arith.constant 0 : index
    %302 = vector.load %arg12[%301, %c0_120] : memref<8x128xf32, #tpu.memory_space<vmem>>, vector<1x128xf32>
    tpu.vector_store %arg12[%301, %c0_120], %300 {strides = array<i32>} : memref<8x128xf32, #tpu.memory_space<vmem>>, vector<1x128xf32>,
    %c7_i32 = arith.constant 7 : i32
    %303 = arith.truncf %300 : vector<1x128xf32> to vector<1x128xbf16>
    %c0_121 = arith.constant 0 : index
    %c0_122 = arith.constant 0 : index
    %c0_123 = arith.constant 0 : index
    %304 = vector.load %arg4[%c0_121, %c0_122, %c0_123] : memref<2x128x384xbf16, #tpu.memory_space<vmem>>, vector<1x128x384xbf16>
    %305 = vector.shape_cast %304 : vector<1x128x384xbf16> to vector<128x384xbf16>
    %cst_124 = arith.constant dense<0.000000e+00> : vector<1x384xf32>
    %306 = tpu.matmul %303, %305, %cst_124 {dimension_numbers = #tpu.dot_dimension_numbers<[1], [0], [0], [1], [0, 0, 1, 1], [], []>} : vector<1x128xbf16>, vector<128x384xbf16>, vector<1x384xf32> -> vector<1x384xf32>
    %c0_125 = arith.constant 0 : index
    %c0_126 = arith.constant 0 : index
    %c0_127 = arith.constant 0 : index
    %307 = vector.load %arg6[%c0_125, %c0_126, %c0_127] : memref<2x1x384xf32, #tpu.memory_space<vmem>>, vector<1x1x384xf32>
    %308 = vector.shape_cast %307 : vector<1x1x384xf32> to vector<1x384xf32>
    %309 = arith.addf %306, %308 : vector<1x384xf32>
    %310 = arith.index_cast %c7_i32 : i32 to index
    %c0_128 = arith.constant 0 : index
    %311 = vector.load %arg13[%310, %c0_128] : memref<8x384xf32, #tpu.memory_space<vmem>>, vector<1x384xf32>
    %312 = vector.extract_strided_slice %311 {offsets = [0, 0], sizes = [1, 128], strides = [1, 1]} : vector<1x384xf32> to vector<1x128xf32>
    %313 = vector.extract_strided_slice %309 {offsets = [0, 0], sizes = [1, 128], strides = [1, 1]} : vector<1x384xf32> to vector<1x128xf32>
    %314 = arith.addf %312, %313 : vector<1x128xf32>
    %315 = arith.negf %314 : vector<1x128xf32>
    %316 = math.exp %315 : vector<1x128xf32>
    %cst_129 = arith.constant 1.000000e+00 : f32
    %317 = vector.broadcast %cst_129 : f32 to vector<1x128xf32>
    %318 = arith.addf %317, %316 : vector<1x128xf32>
    %319 = arith.divf %317, %318 : vector<1x128xf32>
    %320 = vector.extract_strided_slice %311 {offsets = [0, 128], sizes = [1, 128], strides = [1, 1]} : vector<1x384xf32> to vector<1x128xf32>
    %321 = vector.extract_strided_slice %309 {offsets = [0, 128], sizes = [1, 128], strides = [1, 1]} : vector<1x384xf32> to vector<1x128xf32>
    %322 = arith.addf %320, %321 : vector<1x128xf32>
    %323 = arith.negf %322 : vector<1x128xf32>
    %324 = math.exp %323 : vector<1x128xf32>
    %cst_130 = arith.constant 1.000000e+00 : f32
    %325 = vector.broadcast %cst_130 : f32 to vector<1x128xf32>
    %326 = arith.addf %325, %324 : vector<1x128xf32>
    %327 = arith.divf %325, %326 : vector<1x128xf32>
    %328 = vector.extract_strided_slice %311 {offsets = [0, 256], sizes = [1, 128], strides = [1, 1]} : vector<1x384xf32> to vector<1x128xf32>
    %329 = vector.extract_strided_slice %309 {offsets = [0, 256], sizes = [1, 128], strides = [1, 1]} : vector<1x384xf32> to vector<1x128xf32>
    %330 = arith.mulf %319, %329 : vector<1x128xf32>
    %331 = arith.addf %328, %330 : vector<1x128xf32>
    %332 = math.tanh %331 : vector<1x128xf32>
    %cst_131 = arith.constant 1.000000e+00 : f32
    %333 = vector.broadcast %cst_131 : f32 to vector<1x128xf32>
    %334 = arith.subf %333, %327 : vector<1x128xf32>
    %335 = arith.mulf %334, %332 : vector<1x128xf32>
    %336 = arith.mulf %327, %300 : vector<1x128xf32>
    %337 = arith.addf %335, %336 : vector<1x128xf32>
    %338 = arith.index_cast %c7_i32 : i32 to index
    %c0_132 = arith.constant 0 : index
    %339 = vector.load %arg12[%338, %c0_132] : memref<8x128xf32, #tpu.memory_space<vmem>>, vector<1x128xf32>
    tpu.vector_store %arg12[%338, %c0_132], %337 {strides = array<i32>} : memref<8x128xf32, #tpu.memory_space<vmem>>, vector<1x128xf32>,
    %c8_i32 = arith.constant 8 : i32
    %c0_133 = arith.constant 0 : index
    %c0_134 = arith.constant 0 : index
    %c0_135 = arith.constant 0 : index
    %340 = vector.load %arg11[%c0_133, %c0_134, %c0_135] : memref<2x1x128xf32, #tpu.memory_space<vmem>>, vector<1x1x128xf32>
    %341 = vector.shape_cast %340 : vector<1x1x128xf32> to vector<1x128xf32>
    %342 = vector.shape_cast %337 : vector<1x128xf32> to vector<1x1x128xf32>
    tpu.vector_store %arg11[%c0_133, %c0_134, %c0_135], %342 {strides = array<i32>} : memref<2x1x128xf32, #tpu.memory_space<vmem>>, vector<1x1x128xf32>,
    %c0_136 = arith.constant 0 : index
    %c0_137 = arith.constant 0 : index
    %343 = vector.load %arg12[%c0_136, %c0_137] : memref<8x128xf32, #tpu.memory_space<vmem>>, vector<8x128xf32>
    %344 = arith.truncf %343 : vector<8x128xf32> to vector<8x128xbf16>
    %c1_138 = arith.constant 1 : index
    %c0_139 = arith.constant 0 : index
    %c0_140 = arith.constant 0 : index
    %345 = vector.load %arg3[%c1_138, %c0_139, %c0_140] : memref<2x128x384xbf16, #tpu.memory_space<vmem>>, vector<1x128x384xbf16>
    %346 = vector.shape_cast %345 : vector<1x128x384xbf16> to vector<128x384xbf16>
    %cst_141 = arith.constant dense<0.000000e+00> : vector<8x384xf32>
    %347 = tpu.matmul %344, %346, %cst_141 {dimension_numbers = #tpu.dot_dimension_numbers<[1], [0], [0], [1], [0, 0, 1, 1], [], []>} : vector<8x128xbf16>, vector<128x384xbf16>, vector<8x384xf32> -> vector<8x384xf32>
    %c1_142 = arith.constant 1 : index
    %c0_143 = arith.constant 0 : index
    %c0_144 = arith.constant 0 : index
    %348 = vector.load %arg5[%c1_142, %c0_143, %c0_144] : memref<2x1x384xf32, #tpu.memory_space<vmem>>, vector<1x1x384xf32>
    %349 = vector.shape_cast %348 : vector<1x1x384xf32> to vector<1x384xf32>
    %350 = vector.broadcast %349 : vector<1x384xf32> to vector<8x384xf32>
    %351 = arith.addf %347, %350 : vector<8x384xf32>
    %c0_145 = arith.constant 0 : index
    %c0_146 = arith.constant 0 : index
    %352 = vector.load %arg13[%c0_145, %c0_146] : memref<8x384xf32, #tpu.memory_space<vmem>>, vector<8x384xf32>
    tpu.vector_store %arg13[%c0_145, %c0_146], %351 {strides = array<i32>} : memref<8x384xf32, #tpu.memory_space<vmem>>, vector<8x384xf32>,
    %c1_147 = arith.constant 1 : index
    %c0_148 = arith.constant 0 : index
    %c0_149 = arith.constant 0 : index
    %353 = vector.load %arg9[%c1_147, %c0_148, %c0_149] : memref<2x1x128xf32, #tpu.memory_space<vmem>>, vector<1x1x128xf32>
    %354 = vector.shape_cast %353 : vector<1x1x128xf32> to vector<1x128xf32>
    %c0_i32_150 = arith.constant 0 : i32
    %355 = arith.truncf %354 : vector<1x128xf32> to vector<1x128xbf16>
    %c1_151 = arith.constant 1 : index
    %c0_152 = arith.constant 0 : index
    %c0_153 = arith.constant 0 : index
    %356 = vector.load %arg4[%c1_151, %c0_152, %c0_153] : memref<2x128x384xbf16, #tpu.memory_space<vmem>>, vector<1x128x384xbf16>
    %357 = vector.shape_cast %356 : vector<1x128x384xbf16> to vector<128x384xbf16>
    %cst_154 = arith.constant dense<0.000000e+00> : vector<1x384xf32>
    %358 = tpu.matmul %355, %357, %cst_154 {dimension_numbers = #tpu.dot_dimension_numbers<[1], [0], [0], [1], [0, 0, 1, 1], [], []>} : vector<1x128xbf16>, vector<128x384xbf16>, vector<1x384xf32> -> vector<1x384xf32>
    %c1_155 = arith.constant 1 : index
    %c0_156 = arith.constant 0 : index
    %c0_157 = arith.constant 0 : index
    %359 = vector.load %arg6[%c1_155, %c0_156, %c0_157] : memref<2x1x384xf32, #tpu.memory_space<vmem>>, vector<1x1x384xf32>
    %360 = vector.shape_cast %359 : vector<1x1x384xf32> to vector<1x384xf32>
    %361 = arith.addf %358, %360 : vector<1x384xf32>
    %362 = arith.index_cast %c0_i32_150 : i32 to index
    %c0_158 = arith.constant 0 : index
    %363 = vector.load %arg13[%362, %c0_158] : memref<8x384xf32, #tpu.memory_space<vmem>>, vector<1x384xf32>
    %364 = vector.extract_strided_slice %363 {offsets = [0, 0], sizes = [1, 128], strides = [1, 1]} : vector<1x384xf32> to vector<1x128xf32>
    %365 = vector.extract_strided_slice %361 {offsets = [0, 0], sizes = [1, 128], strides = [1, 1]} : vector<1x384xf32> to vector<1x128xf32>
    %366 = arith.addf %364, %365 : vector<1x128xf32>
    %367 = arith.negf %366 : vector<1x128xf32>
    %368 = math.exp %367 : vector<1x128xf32>
    %cst_159 = arith.constant 1.000000e+00 : f32
    %369 = vector.broadcast %cst_159 : f32 to vector<1x128xf32>
    %370 = arith.addf %369, %368 : vector<1x128xf32>
    %371 = arith.divf %369, %370 : vector<1x128xf32>
    %372 = vector.extract_strided_slice %363 {offsets = [0, 128], sizes = [1, 128], strides = [1, 1]} : vector<1x384xf32> to vector<1x128xf32>
    %373 = vector.extract_strided_slice %361 {offsets = [0, 128], sizes = [1, 128], strides = [1, 1]} : vector<1x384xf32> to vector<1x128xf32>
    %374 = arith.addf %372, %373 : vector<1x128xf32>
    %375 = arith.negf %374 : vector<1x128xf32>
    %376 = math.exp %375 : vector<1x128xf32>
    %cst_160 = arith.constant 1.000000e+00 : f32
    %377 = vector.broadcast %cst_160 : f32 to vector<1x128xf32>
    %378 = arith.addf %377, %376 : vector<1x128xf32>
    %379 = arith.divf %377, %378 : vector<1x128xf32>
    %380 = vector.extract_strided_slice %363 {offsets = [0, 256], sizes = [1, 128], strides = [1, 1]} : vector<1x384xf32> to vector<1x128xf32>
    %381 = vector.extract_strided_slice %361 {offsets = [0, 256], sizes = [1, 128], strides = [1, 1]} : vector<1x384xf32> to vector<1x128xf32>
    %382 = arith.mulf %371, %381 : vector<1x128xf32>
    %383 = arith.addf %380, %382 : vector<1x128xf32>
    %384 = math.tanh %383 : vector<1x128xf32>
    %cst_161 = arith.constant 1.000000e+00 : f32
    %385 = vector.broadcast %cst_161 : f32 to vector<1x128xf32>
    %386 = arith.subf %385, %379 : vector<1x128xf32>
    %387 = arith.mulf %386, %384 : vector<1x128xf32>
    %388 = arith.mulf %379, %354 : vector<1x128xf32>
    %389 = arith.addf %387, %388 : vector<1x128xf32>
    %390 = arith.index_cast %c0_i32_150 : i32 to index
    %c0_162 = arith.constant 0 : index
    %391 = vector.load %arg12[%390, %c0_162] : memref<8x128xf32, #tpu.memory_space<vmem>>, vector<1x128xf32>
    tpu.vector_store %arg12[%390, %c0_162], %389 {strides = array<i32>} : memref<8x128xf32, #tpu.memory_space<vmem>>, vector<1x128xf32>,
    %c1_i32_163 = arith.constant 1 : i32
    %392 = arith.truncf %389 : vector<1x128xf32> to vector<1x128xbf16>
    %c1_164 = arith.constant 1 : index
    %c0_165 = arith.constant 0 : index
    %c0_166 = arith.constant 0 : index
    %393 = vector.load %arg4[%c1_164, %c0_165, %c0_166] : memref<2x128x384xbf16, #tpu.memory_space<vmem>>, vector<1x128x384xbf16>
    %394 = vector.shape_cast %393 : vector<1x128x384xbf16> to vector<128x384xbf16>
    %cst_167 = arith.constant dense<0.000000e+00> : vector<1x384xf32>
    %395 = tpu.matmul %392, %394, %cst_167 {dimension_numbers = #tpu.dot_dimension_numbers<[1], [0], [0], [1], [0, 0, 1, 1], [], []>} : vector<1x128xbf16>, vector<128x384xbf16>, vector<1x384xf32> -> vector<1x384xf32>
    %c1_168 = arith.constant 1 : index
    %c0_169 = arith.constant 0 : index
    %c0_170 = arith.constant 0 : index
    %396 = vector.load %arg6[%c1_168, %c0_169, %c0_170] : memref<2x1x384xf32, #tpu.memory_space<vmem>>, vector<1x1x384xf32>
    %397 = vector.shape_cast %396 : vector<1x1x384xf32> to vector<1x384xf32>
    %398 = arith.addf %395, %397 : vector<1x384xf32>
    %399 = arith.index_cast %c1_i32_163 : i32 to index
    %c0_171 = arith.constant 0 : index
    %400 = vector.load %arg13[%399, %c0_171] : memref<8x384xf32, #tpu.memory_space<vmem>>, vector<1x384xf32>
    %401 = vector.extract_strided_slice %400 {offsets = [0, 0], sizes = [1, 128], strides = [1, 1]} : vector<1x384xf32> to vector<1x128xf32>
    %402 = vector.extract_strided_slice %398 {offsets = [0, 0], sizes = [1, 128], strides = [1, 1]} : vector<1x384xf32> to vector<1x128xf32>
    %403 = arith.addf %401, %402 : vector<1x128xf32>
    %404 = arith.negf %403 : vector<1x128xf32>
    %405 = math.exp %404 : vector<1x128xf32>
    %cst_172 = arith.constant 1.000000e+00 : f32
    %406 = vector.broadcast %cst_172 : f32 to vector<1x128xf32>
    %407 = arith.addf %406, %405 : vector<1x128xf32>
    %408 = arith.divf %406, %407 : vector<1x128xf32>
    %409 = vector.extract_strided_slice %400 {offsets = [0, 128], sizes = [1, 128], strides = [1, 1]} : vector<1x384xf32> to vector<1x128xf32>
    %410 = vector.extract_strided_slice %398 {offsets = [0, 128], sizes = [1, 128], strides = [1, 1]} : vector<1x384xf32> to vector<1x128xf32>
    %411 = arith.addf %409, %410 : vector<1x128xf32>
    %412 = arith.negf %411 : vector<1x128xf32>
    %413 = math.exp %412 : vector<1x128xf32>
    %cst_173 = arith.constant 1.000000e+00 : f32
    %414 = vector.broadcast %cst_173 : f32 to vector<1x128xf32>
    %415 = arith.addf %414, %413 : vector<1x128xf32>
    %416 = arith.divf %414, %415 : vector<1x128xf32>
    %417 = vector.extract_strided_slice %400 {offsets = [0, 256], sizes = [1, 128], strides = [1, 1]} : vector<1x384xf32> to vector<1x128xf32>
    %418 = vector.extract_strided_slice %398 {offsets = [0, 256], sizes = [1, 128], strides = [1, 1]} : vector<1x384xf32> to vector<1x128xf32>
    %419 = arith.mulf %408, %418 : vector<1x128xf32>
    %420 = arith.addf %417, %419 : vector<1x128xf32>
    %421 = math.tanh %420 : vector<1x128xf32>
    %cst_174 = arith.constant 1.000000e+00 : f32
    %422 = vector.broadcast %cst_174 : f32 to vector<1x128xf32>
    %423 = arith.subf %422, %416 : vector<1x128xf32>
    %424 = arith.mulf %423, %421 : vector<1x128xf32>
    %425 = arith.mulf %416, %389 : vector<1x128xf32>
    %426 = arith.addf %424, %425 : vector<1x128xf32>
    %427 = arith.index_cast %c1_i32_163 : i32 to index
    %c0_175 = arith.constant 0 : index
    %428 = vector.load %arg12[%427, %c0_175] : memref<8x128xf32, #tpu.memory_space<vmem>>, vector<1x128xf32>
    tpu.vector_store %arg12[%427, %c0_175], %426 {strides = array<i32>} : memref<8x128xf32, #tpu.memory_space<vmem>>, vector<1x128xf32>,
    %c2_i32_176 = arith.constant 2 : i32
    %429 = arith.truncf %426 : vector<1x128xf32> to vector<1x128xbf16>
    %c1_177 = arith.constant 1 : index
    %c0_178 = arith.constant 0 : index
    %c0_179 = arith.constant 0 : index
    %430 = vector.load %arg4[%c1_177, %c0_178, %c0_179] : memref<2x128x384xbf16, #tpu.memory_space<vmem>>, vector<1x128x384xbf16>
    %431 = vector.shape_cast %430 : vector<1x128x384xbf16> to vector<128x384xbf16>
    %cst_180 = arith.constant dense<0.000000e+00> : vector<1x384xf32>
    %432 = tpu.matmul %429, %431, %cst_180 {dimension_numbers = #tpu.dot_dimension_numbers<[1], [0], [0], [1], [0, 0, 1, 1], [], []>} : vector<1x128xbf16>, vector<128x384xbf16>, vector<1x384xf32> -> vector<1x384xf32>
    %c1_181 = arith.constant 1 : index
    %c0_182 = arith.constant 0 : index
    %c0_183 = arith.constant 0 : index
    %433 = vector.load %arg6[%c1_181, %c0_182, %c0_183] : memref<2x1x384xf32, #tpu.memory_space<vmem>>, vector<1x1x384xf32>
    %434 = vector.shape_cast %433 : vector<1x1x384xf32> to vector<1x384xf32>
    %435 = arith.addf %432, %434 : vector<1x384xf32>
    %436 = arith.index_cast %c2_i32_176 : i32 to index
    %c0_184 = arith.constant 0 : index
    %437 = vector.load %arg13[%436, %c0_184] : memref<8x384xf32, #tpu.memory_space<vmem>>, vector<1x384xf32>
    %438 = vector.extract_strided_slice %437 {offsets = [0, 0], sizes = [1, 128], strides = [1, 1]} : vector<1x384xf32> to vector<1x128xf32>
    %439 = vector.extract_strided_slice %435 {offsets = [0, 0], sizes = [1, 128], strides = [1, 1]} : vector<1x384xf32> to vector<1x128xf32>
    %440 = arith.addf %438, %439 : vector<1x128xf32>
    %441 = arith.negf %440 : vector<1x128xf32>
    %442 = math.exp %441 : vector<1x128xf32>
    %cst_185 = arith.constant 1.000000e+00 : f32
    %443 = vector.broadcast %cst_185 : f32 to vector<1x128xf32>
    %444 = arith.addf %443, %442 : vector<1x128xf32>
    %445 = arith.divf %443, %444 : vector<1x128xf32>
    %446 = vector.extract_strided_slice %437 {offsets = [0, 128], sizes = [1, 128], strides = [1, 1]} : vector<1x384xf32> to vector<1x128xf32>
    %447 = vector.extract_strided_slice %435 {offsets = [0, 128], sizes = [1, 128], strides = [1, 1]} : vector<1x384xf32> to vector<1x128xf32>
    %448 = arith.addf %446, %447 : vector<1x128xf32>
    %449 = arith.negf %448 : vector<1x128xf32>
    %450 = math.exp %449 : vector<1x128xf32>
    %cst_186 = arith.constant 1.000000e+00 : f32
    %451 = vector.broadcast %cst_186 : f32 to vector<1x128xf32>
    %452 = arith.addf %451, %450 : vector<1x128xf32>
    %453 = arith.divf %451, %452 : vector<1x128xf32>
    %454 = vector.extract_strided_slice %437 {offsets = [0, 256], sizes = [1, 128], strides = [1, 1]} : vector<1x384xf32> to vector<1x128xf32>
    %455 = vector.extract_strided_slice %435 {offsets = [0, 256], sizes = [1, 128], strides = [1, 1]} : vector<1x384xf32> to vector<1x128xf32>
    %456 = arith.mulf %445, %455 : vector<1x128xf32>
    %457 = arith.addf %454, %456 : vector<1x128xf32>
    %458 = math.tanh %457 : vector<1x128xf32>
    %cst_187 = arith.constant 1.000000e+00 : f32
    %459 = vector.broadcast %cst_187 : f32 to vector<1x128xf32>
    %460 = arith.subf %459, %453 : vector<1x128xf32>
    %461 = arith.mulf %460, %458 : vector<1x128xf32>
    %462 = arith.mulf %453, %426 : vector<1x128xf32>
    %463 = arith.addf %461, %462 : vector<1x128xf32>
    %464 = arith.index_cast %c2_i32_176 : i32 to index
    %c0_188 = arith.constant 0 : index
    %465 = vector.load %arg12[%464, %c0_188] : memref<8x128xf32, #tpu.memory_space<vmem>>, vector<1x128xf32>
    tpu.vector_store %arg12[%464, %c0_188], %463 {strides = array<i32>} : memref<8x128xf32, #tpu.memory_space<vmem>>, vector<1x128xf32>,
    %c3_i32_189 = arith.constant 3 : i32
    %466 = arith.truncf %463 : vector<1x128xf32> to vector<1x128xbf16>
    %c1_190 = arith.constant 1 : index
    %c0_191 = arith.constant 0 : index
    %c0_192 = arith.constant 0 : index
    %467 = vector.load %arg4[%c1_190, %c0_191, %c0_192] : memref<2x128x384xbf16, #tpu.memory_space<vmem>>, vector<1x128x384xbf16>
    %468 = vector.shape_cast %467 : vector<1x128x384xbf16> to vector<128x384xbf16>
    %cst_193 = arith.constant dense<0.000000e+00> : vector<1x384xf32>
    %469 = tpu.matmul %466, %468, %cst_193 {dimension_numbers = #tpu.dot_dimension_numbers<[1], [0], [0], [1], [0, 0, 1, 1], [], []>} : vector<1x128xbf16>, vector<128x384xbf16>, vector<1x384xf32> -> vector<1x384xf32>
    %c1_194 = arith.constant 1 : index
    %c0_195 = arith.constant 0 : index
    %c0_196 = arith.constant 0 : index
    %470 = vector.load %arg6[%c1_194, %c0_195, %c0_196] : memref<2x1x384xf32, #tpu.memory_space<vmem>>, vector<1x1x384xf32>
    %471 = vector.shape_cast %470 : vector<1x1x384xf32> to vector<1x384xf32>
    %472 = arith.addf %469, %471 : vector<1x384xf32>
    %473 = arith.index_cast %c3_i32_189 : i32 to index
    %c0_197 = arith.constant 0 : index
    %474 = vector.load %arg13[%473, %c0_197] : memref<8x384xf32, #tpu.memory_space<vmem>>, vector<1x384xf32>
    %475 = vector.extract_strided_slice %474 {offsets = [0, 0], sizes = [1, 128], strides = [1, 1]} : vector<1x384xf32> to vector<1x128xf32>
    %476 = vector.extract_strided_slice %472 {offsets = [0, 0], sizes = [1, 128], strides = [1, 1]} : vector<1x384xf32> to vector<1x128xf32>
    %477 = arith.addf %475, %476 : vector<1x128xf32>
    %478 = arith.negf %477 : vector<1x128xf32>
    %479 = math.exp %478 : vector<1x128xf32>
    %cst_198 = arith.constant 1.000000e+00 : f32
    %480 = vector.broadcast %cst_198 : f32 to vector<1x128xf32>
    %481 = arith.addf %480, %479 : vector<1x128xf32>
    %482 = arith.divf %480, %481 : vector<1x128xf32>
    %483 = vector.extract_strided_slice %474 {offsets = [0, 128], sizes = [1, 128], strides = [1, 1]} : vector<1x384xf32> to vector<1x128xf32>
    %484 = vector.extract_strided_slice %472 {offsets = [0, 128], sizes = [1, 128], strides = [1, 1]} : vector<1x384xf32> to vector<1x128xf32>
    %485 = arith.addf %483, %484 : vector<1x128xf32>
    %486 = arith.negf %485 : vector<1x128xf32>
    %487 = math.exp %486 : vector<1x128xf32>
    %cst_199 = arith.constant 1.000000e+00 : f32
    %488 = vector.broadcast %cst_199 : f32 to vector<1x128xf32>
    %489 = arith.addf %488, %487 : vector<1x128xf32>
    %490 = arith.divf %488, %489 : vector<1x128xf32>
    %491 = vector.extract_strided_slice %474 {offsets = [0, 256], sizes = [1, 128], strides = [1, 1]} : vector<1x384xf32> to vector<1x128xf32>
    %492 = vector.extract_strided_slice %472 {offsets = [0, 256], sizes = [1, 128], strides = [1, 1]} : vector<1x384xf32> to vector<1x128xf32>
    %493 = arith.mulf %482, %492 : vector<1x128xf32>
    %494 = arith.addf %491, %493 : vector<1x128xf32>
    %495 = math.tanh %494 : vector<1x128xf32>
    %cst_200 = arith.constant 1.000000e+00 : f32
    %496 = vector.broadcast %cst_200 : f32 to vector<1x128xf32>
    %497 = arith.subf %496, %490 : vector<1x128xf32>
    %498 = arith.mulf %497, %495 : vector<1x128xf32>
    %499 = arith.mulf %490, %463 : vector<1x128xf32>
    %500 = arith.addf %498, %499 : vector<1x128xf32>
    %501 = arith.index_cast %c3_i32_189 : i32 to index
    %c0_201 = arith.constant 0 : index
    %502 = vector.load %arg12[%501, %c0_201] : memref<8x128xf32, #tpu.memory_space<vmem>>, vector<1x128xf32>
    tpu.vector_store %arg12[%501, %c0_201], %500 {strides = array<i32>} : memref<8x128xf32, #tpu.memory_space<vmem>>, vector<1x128xf32>,
    %c4_i32_202 = arith.constant 4 : i32
    %503 = arith.truncf %500 : vector<1x128xf32> to vector<1x128xbf16>
    %c1_203 = arith.constant 1 : index
    %c0_204 = arith.constant 0 : index
    %c0_205 = arith.constant 0 : index
    %504 = vector.load %arg4[%c1_203, %c0_204, %c0_205] : memref<2x128x384xbf16, #tpu.memory_space<vmem>>, vector<1x128x384xbf16>
    %505 = vector.shape_cast %504 : vector<1x128x384xbf16> to vector<128x384xbf16>
    %cst_206 = arith.constant dense<0.000000e+00> : vector<1x384xf32>
    %506 = tpu.matmul %503, %505, %cst_206 {dimension_numbers = #tpu.dot_dimension_numbers<[1], [0], [0], [1], [0, 0, 1, 1], [], []>} : vector<1x128xbf16>, vector<128x384xbf16>, vector<1x384xf32> -> vector<1x384xf32>
    %c1_207 = arith.constant 1 : index
    %c0_208 = arith.constant 0 : index
    %c0_209 = arith.constant 0 : index
    %507 = vector.load %arg6[%c1_207, %c0_208, %c0_209] : memref<2x1x384xf32, #tpu.memory_space<vmem>>, vector<1x1x384xf32>
    %508 = vector.shape_cast %507 : vector<1x1x384xf32> to vector<1x384xf32>
    %509 = arith.addf %506, %508 : vector<1x384xf32>
    %510 = arith.index_cast %c4_i32_202 : i32 to index
    %c0_210 = arith.constant 0 : index
    %511 = vector.load %arg13[%510, %c0_210] : memref<8x384xf32, #tpu.memory_space<vmem>>, vector<1x384xf32>
    %512 = vector.extract_strided_slice %511 {offsets = [0, 0], sizes = [1, 128], strides = [1, 1]} : vector<1x384xf32> to vector<1x128xf32>
    %513 = vector.extract_strided_slice %509 {offsets = [0, 0], sizes = [1, 128], strides = [1, 1]} : vector<1x384xf32> to vector<1x128xf32>
    %514 = arith.addf %512, %513 : vector<1x128xf32>
    %515 = arith.negf %514 : vector<1x128xf32>
    %516 = math.exp %515 : vector<1x128xf32>
    %cst_211 = arith.constant 1.000000e+00 : f32
    %517 = vector.broadcast %cst_211 : f32 to vector<1x128xf32>
    %518 = arith.addf %517, %516 : vector<1x128xf32>
    %519 = arith.divf %517, %518 : vector<1x128xf32>
    %520 = vector.extract_strided_slice %511 {offsets = [0, 128], sizes = [1, 128], strides = [1, 1]} : vector<1x384xf32> to vector<1x128xf32>
    %521 = vector.extract_strided_slice %509 {offsets = [0, 128], sizes = [1, 128], strides = [1, 1]} : vector<1x384xf32> to vector<1x128xf32>
    %522 = arith.addf %520, %521 : vector<1x128xf32>
    %523 = arith.negf %522 : vector<1x128xf32>
    %524 = math.exp %523 : vector<1x128xf32>
    %cst_212 = arith.constant 1.000000e+00 : f32
    %525 = vector.broadcast %cst_212 : f32 to vector<1x128xf32>
    %526 = arith.addf %525, %524 : vector<1x128xf32>
    %527 = arith.divf %525, %526 : vector<1x128xf32>
    %528 = vector.extract_strided_slice %511 {offsets = [0, 256], sizes = [1, 128], strides = [1, 1]} : vector<1x384xf32> to vector<1x128xf32>
    %529 = vector.extract_strided_slice %509 {offsets = [0, 256], sizes = [1, 128], strides = [1, 1]} : vector<1x384xf32> to vector<1x128xf32>
    %530 = arith.mulf %519, %529 : vector<1x128xf32>
    %531 = arith.addf %528, %530 : vector<1x128xf32>
    %532 = math.tanh %531 : vector<1x128xf32>
    %cst_213 = arith.constant 1.000000e+00 : f32
    %533 = vector.broadcast %cst_213 : f32 to vector<1x128xf32>
    %534 = arith.subf %533, %527 : vector<1x128xf32>
    %535 = arith.mulf %534, %532 : vector<1x128xf32>
    %536 = arith.mulf %527, %500 : vector<1x128xf32>
    %537 = arith.addf %535, %536 : vector<1x128xf32>
    %538 = arith.index_cast %c4_i32_202 : i32 to index
    %c0_214 = arith.constant 0 : index
    %539 = vector.load %arg12[%538, %c0_214] : memref<8x128xf32, #tpu.memory_space<vmem>>, vector<1x128xf32>
    tpu.vector_store %arg12[%538, %c0_214], %537 {strides = array<i32>} : memref<8x128xf32, #tpu.memory_space<vmem>>, vector<1x128xf32>,
    %c5_i32_215 = arith.constant 5 : i32
    %540 = arith.truncf %537 : vector<1x128xf32> to vector<1x128xbf16>
    %c1_216 = arith.constant 1 : index
    %c0_217 = arith.constant 0 : index
    %c0_218 = arith.constant 0 : index
    %541 = vector.load %arg4[%c1_216, %c0_217, %c0_218] : memref<2x128x384xbf16, #tpu.memory_space<vmem>>, vector<1x128x384xbf16>
    %542 = vector.shape_cast %541 : vector<1x128x384xbf16> to vector<128x384xbf16>
    %cst_219 = arith.constant dense<0.000000e+00> : vector<1x384xf32>
    %543 = tpu.matmul %540, %542, %cst_219 {dimension_numbers = #tpu.dot_dimension_numbers<[1], [0], [0], [1], [0, 0, 1, 1], [], []>} : vector<1x128xbf16>, vector<128x384xbf16>, vector<1x384xf32> -> vector<1x384xf32>
    %c1_220 = arith.constant 1 : index
    %c0_221 = arith.constant 0 : index
    %c0_222 = arith.constant 0 : index
    %544 = vector.load %arg6[%c1_220, %c0_221, %c0_222] : memref<2x1x384xf32, #tpu.memory_space<vmem>>, vector<1x1x384xf32>
    %545 = vector.shape_cast %544 : vector<1x1x384xf32> to vector<1x384xf32>
    %546 = arith.addf %543, %545 : vector<1x384xf32>
    %547 = arith.index_cast %c5_i32_215 : i32 to index
    %c0_223 = arith.constant 0 : index
    %548 = vector.load %arg13[%547, %c0_223] : memref<8x384xf32, #tpu.memory_space<vmem>>, vector<1x384xf32>
    %549 = vector.extract_strided_slice %548 {offsets = [0, 0], sizes = [1, 128], strides = [1, 1]} : vector<1x384xf32> to vector<1x128xf32>
    %550 = vector.extract_strided_slice %546 {offsets = [0, 0], sizes = [1, 128], strides = [1, 1]} : vector<1x384xf32> to vector<1x128xf32>
    %551 = arith.addf %549, %550 : vector<1x128xf32>
    %552 = arith.negf %551 : vector<1x128xf32>
    %553 = math.exp %552 : vector<1x128xf32>
    %cst_224 = arith.constant 1.000000e+00 : f32
    %554 = vector.broadcast %cst_224 : f32 to vector<1x128xf32>
    %555 = arith.addf %554, %553 : vector<1x128xf32>
    %556 = arith.divf %554, %555 : vector<1x128xf32>
    %557 = vector.extract_strided_slice %548 {offsets = [0, 128], sizes = [1, 128], strides = [1, 1]} : vector<1x384xf32> to vector<1x128xf32>
    %558 = vector.extract_strided_slice %546 {offsets = [0, 128], sizes = [1, 128], strides = [1, 1]} : vector<1x384xf32> to vector<1x128xf32>
    %559 = arith.addf %557, %558 : vector<1x128xf32>
    %560 = arith.negf %559 : vector<1x128xf32>
    %561 = math.exp %560 : vector<1x128xf32>
    %cst_225 = arith.constant 1.000000e+00 : f32
    %562 = vector.broadcast %cst_225 : f32 to vector<1x128xf32>
    %563 = arith.addf %562, %561 : vector<1x128xf32>
    %564 = arith.divf %562, %563 : vector<1x128xf32>
    %565 = vector.extract_strided_slice %548 {offsets = [0, 256], sizes = [1, 128], strides = [1, 1]} : vector<1x384xf32> to vector<1x128xf32>
    %566 = vector.extract_strided_slice %546 {offsets = [0, 256], sizes = [1, 128], strides = [1, 1]} : vector<1x384xf32> to vector<1x128xf32>
    %567 = arith.mulf %556, %566 : vector<1x128xf32>
    %568 = arith.addf %565, %567 : vector<1x128xf32>
    %569 = math.tanh %568 : vector<1x128xf32>
    %cst_226 = arith.constant 1.000000e+00 : f32
    %570 = vector.broadcast %cst_226 : f32 to vector<1x128xf32>
    %571 = arith.subf %570, %564 : vector<1x128xf32>
    %572 = arith.mulf %571, %569 : vector<1x128xf32>
    %573 = arith.mulf %564, %537 : vector<1x128xf32>
    %574 = arith.addf %572, %573 : vector<1x128xf32>
    %575 = arith.index_cast %c5_i32_215 : i32 to index
    %c0_227 = arith.constant 0 : index
    %576 = vector.load %arg12[%575, %c0_227] : memref<8x128xf32, #tpu.memory_space<vmem>>, vector<1x128xf32>
    tpu.vector_store %arg12[%575, %c0_227], %574 {strides = array<i32>} : memref<8x128xf32, #tpu.memory_space<vmem>>, vector<1x128xf32>,
    %c6_i32_228 = arith.constant 6 : i32
    %577 = arith.truncf %574 : vector<1x128xf32> to vector<1x128xbf16>
    %c1_229 = arith.constant 1 : index
    %c0_230 = arith.constant 0 : index
    %c0_231 = arith.constant 0 : index
    %578 = vector.load %arg4[%c1_229, %c0_230, %c0_231] : memref<2x128x384xbf16, #tpu.memory_space<vmem>>, vector<1x128x384xbf16>
    %579 = vector.shape_cast %578 : vector<1x128x384xbf16> to vector<128x384xbf16>
    %cst_232 = arith.constant dense<0.000000e+00> : vector<1x384xf32>
    %580 = tpu.matmul %577, %579, %cst_232 {dimension_numbers = #tpu.dot_dimension_numbers<[1], [0], [0], [1], [0, 0, 1, 1], [], []>} : vector<1x128xbf16>, vector<128x384xbf16>, vector<1x384xf32> -> vector<1x384xf32>
    %c1_233 = arith.constant 1 : index
    %c0_234 = arith.constant 0 : index
    %c0_235 = arith.constant 0 : index
    %581 = vector.load %arg6[%c1_233, %c0_234, %c0_235] : memref<2x1x384xf32, #tpu.memory_space<vmem>>, vector<1x1x384xf32>
    %582 = vector.shape_cast %581 : vector<1x1x384xf32> to vector<1x384xf32>
    %583 = arith.addf %580, %582 : vector<1x384xf32>
    %584 = arith.index_cast %c6_i32_228 : i32 to index
    %c0_236 = arith.constant 0 : index
    %585 = vector.load %arg13[%584, %c0_236] : memref<8x384xf32, #tpu.memory_space<vmem>>, vector<1x384xf32>
    %586 = vector.extract_strided_slice %585 {offsets = [0, 0], sizes = [1, 128], strides = [1, 1]} : vector<1x384xf32> to vector<1x128xf32>
    %587 = vector.extract_strided_slice %583 {offsets = [0, 0], sizes = [1, 128], strides = [1, 1]} : vector<1x384xf32> to vector<1x128xf32>
    %588 = arith.addf %586, %587 : vector<1x128xf32>
    %589 = arith.negf %588 : vector<1x128xf32>
    %590 = math.exp %589 : vector<1x128xf32>
    %cst_237 = arith.constant 1.000000e+00 : f32
    %591 = vector.broadcast %cst_237 : f32 to vector<1x128xf32>
    %592 = arith.addf %591, %590 : vector<1x128xf32>
    %593 = arith.divf %591, %592 : vector<1x128xf32>
    %594 = vector.extract_strided_slice %585 {offsets = [0, 128], sizes = [1, 128], strides = [1, 1]} : vector<1x384xf32> to vector<1x128xf32>
    %595 = vector.extract_strided_slice %583 {offsets = [0, 128], sizes = [1, 128], strides = [1, 1]} : vector<1x384xf32> to vector<1x128xf32>
    %596 = arith.addf %594, %595 : vector<1x128xf32>
    %597 = arith.negf %596 : vector<1x128xf32>
    %598 = math.exp %597 : vector<1x128xf32>
    %cst_238 = arith.constant 1.000000e+00 : f32
    %599 = vector.broadcast %cst_238 : f32 to vector<1x128xf32>
    %600 = arith.addf %599, %598 : vector<1x128xf32>
    %601 = arith.divf %599, %600 : vector<1x128xf32>
    %602 = vector.extract_strided_slice %585 {offsets = [0, 256], sizes = [1, 128], strides = [1, 1]} : vector<1x384xf32> to vector<1x128xf32>
    %603 = vector.extract_strided_slice %583 {offsets = [0, 256], sizes = [1, 128], strides = [1, 1]} : vector<1x384xf32> to vector<1x128xf32>
    %604 = arith.mulf %593, %603 : vector<1x128xf32>
    %605 = arith.addf %602, %604 : vector<1x128xf32>
    %606 = math.tanh %605 : vector<1x128xf32>
    %cst_239 = arith.constant 1.000000e+00 : f32
    %607 = vector.broadcast %cst_239 : f32 to vector<1x128xf32>
    %608 = arith.subf %607, %601 : vector<1x128xf32>
    %609 = arith.mulf %608, %606 : vector<1x128xf32>
    %610 = arith.mulf %601, %574 : vector<1x128xf32>
    %611 = arith.addf %609, %610 : vector<1x128xf32>
    %612 = arith.index_cast %c6_i32_228 : i32 to index
    %c0_240 = arith.constant 0 : index
    %613 = vector.load %arg12[%612, %c0_240] : memref<8x128xf32, #tpu.memory_space<vmem>>, vector<1x128xf32>
    tpu.vector_store %arg12[%612, %c0_240], %611 {strides = array<i32>} : memref<8x128xf32, #tpu.memory_space<vmem>>, vector<1x128xf32>,
    %c7_i32_241 = arith.constant 7 : i32
    %614 = arith.truncf %611 : vector<1x128xf32> to vector<1x128xbf16>
    %c1_242 = arith.constant 1 : index
    %c0_243 = arith.constant 0 : index
    %c0_244 = arith.constant 0 : index
    %615 = vector.load %arg4[%c1_242, %c0_243, %c0_244] : memref<2x128x384xbf16, #tpu.memory_space<vmem>>, vector<1x128x384xbf16>
    %616 = vector.shape_cast %615 : vector<1x128x384xbf16> to vector<128x384xbf16>
    %cst_245 = arith.constant dense<0.000000e+00> : vector<1x384xf32>
    %617 = tpu.matmul %614, %616, %cst_245 {dimension_numbers = #tpu.dot_dimension_numbers<[1], [0], [0], [1], [0, 0, 1, 1], [], []>} : vector<1x128xbf16>, vector<128x384xbf16>, vector<1x384xf32> -> vector<1x384xf32>
    %c1_246 = arith.constant 1 : index
    %c0_247 = arith.constant 0 : index
    %c0_248 = arith.constant 0 : index
    %618 = vector.load %arg6[%c1_246, %c0_247, %c0_248] : memref<2x1x384xf32, #tpu.memory_space<vmem>>, vector<1x1x384xf32>
    %619 = vector.shape_cast %618 : vector<1x1x384xf32> to vector<1x384xf32>
    %620 = arith.addf %617, %619 : vector<1x384xf32>
    %621 = arith.index_cast %c7_i32_241 : i32 to index
    %c0_249 = arith.constant 0 : index
    %622 = vector.load %arg13[%621, %c0_249] : memref<8x384xf32, #tpu.memory_space<vmem>>, vector<1x384xf32>
    %623 = vector.extract_strided_slice %622 {offsets = [0, 0], sizes = [1, 128], strides = [1, 1]} : vector<1x384xf32> to vector<1x128xf32>
    %624 = vector.extract_strided_slice %620 {offsets = [0, 0], sizes = [1, 128], strides = [1, 1]} : vector<1x384xf32> to vector<1x128xf32>
    %625 = arith.addf %623, %624 : vector<1x128xf32>
    %626 = arith.negf %625 : vector<1x128xf32>
    %627 = math.exp %626 : vector<1x128xf32>
    %cst_250 = arith.constant 1.000000e+00 : f32
    %628 = vector.broadcast %cst_250 : f32 to vector<1x128xf32>
    %629 = arith.addf %628, %627 : vector<1x128xf32>
    %630 = arith.divf %628, %629 : vector<1x128xf32>
    %631 = vector.extract_strided_slice %622 {offsets = [0, 128], sizes = [1, 128], strides = [1, 1]} : vector<1x384xf32> to vector<1x128xf32>
    %632 = vector.extract_strided_slice %620 {offsets = [0, 128], sizes = [1, 128], strides = [1, 1]} : vector<1x384xf32> to vector<1x128xf32>
    %633 = arith.addf %631, %632 : vector<1x128xf32>
    %634 = arith.negf %633 : vector<1x128xf32>
    %635 = math.exp %634 : vector<1x128xf32>
    %cst_251 = arith.constant 1.000000e+00 : f32
    %636 = vector.broadcast %cst_251 : f32 to vector<1x128xf32>
    %637 = arith.addf %636, %635 : vector<1x128xf32>
    %638 = arith.divf %636, %637 : vector<1x128xf32>
    %639 = vector.extract_strided_slice %622 {offsets = [0, 256], sizes = [1, 128], strides = [1, 1]} : vector<1x384xf32> to vector<1x128xf32>
    %640 = vector.extract_strided_slice %620 {offsets = [0, 256], sizes = [1, 128], strides = [1, 1]} : vector<1x384xf32> to vector<1x128xf32>
    %641 = arith.mulf %630, %640 : vector<1x128xf32>
    %642 = arith.addf %639, %641 : vector<1x128xf32>
    %643 = math.tanh %642 : vector<1x128xf32>
    %cst_252 = arith.constant 1.000000e+00 : f32
    %644 = vector.broadcast %cst_252 : f32 to vector<1x128xf32>
    %645 = arith.subf %644, %638 : vector<1x128xf32>
    %646 = arith.mulf %645, %643 : vector<1x128xf32>
    %647 = arith.mulf %638, %611 : vector<1x128xf32>
    %648 = arith.addf %646, %647 : vector<1x128xf32>
    %649 = arith.index_cast %c7_i32_241 : i32 to index
    %c0_253 = arith.constant 0 : index
    %650 = vector.load %arg12[%649, %c0_253] : memref<8x128xf32, #tpu.memory_space<vmem>>, vector<1x128xf32>
    tpu.vector_store %arg12[%649, %c0_253], %648 {strides = array<i32>} : memref<8x128xf32, #tpu.memory_space<vmem>>, vector<1x128xf32>,
    %c8_i32_254 = arith.constant 8 : i32
    %c1_255 = arith.constant 1 : index
    %c0_256 = arith.constant 0 : index
    %c0_257 = arith.constant 0 : index
    %651 = vector.load %arg11[%c1_255, %c0_256, %c0_257] : memref<2x1x128xf32, #tpu.memory_space<vmem>>, vector<1x1x128xf32>
    %652 = vector.shape_cast %651 : vector<1x1x128xf32> to vector<1x128xf32>
    %653 = vector.shape_cast %648 : vector<1x128xf32> to vector<1x1x128xf32>
    tpu.vector_store %arg11[%c1_255, %c0_256, %c0_257], %653 {strides = array<i32>} : memref<2x1x128xf32, #tpu.memory_space<vmem>>, vector<1x1x128xf32>,
    %c0_258 = arith.constant 0 : index
    %c0_259 = arith.constant 0 : index
    %654 = vector.load %arg12[%c0_258, %c0_259] : memref<8x128xf32, #tpu.memory_space<vmem>>, vector<8x128xf32>
    %655 = arith.truncf %654 : vector<8x128xf32> to vector<8x128xbf16>
    %c0_260 = arith.constant 0 : index
    %c0_261 = arith.constant 0 : index
    %656 = vector.load %arg7[%c0_260, %c0_261] : memref<128x128xbf16, #tpu.memory_space<vmem>>, vector<128x128xbf16>
    %cst_262 = arith.constant dense<0.000000e+00> : vector<8x128xf32>
    %657 = tpu.matmul %655, %656, %cst_262 {dimension_numbers = #tpu.dot_dimension_numbers<[1], [0], [0], [1], [0, 0, 1, 1], [], []>} : vector<8x128xbf16>, vector<128x128xbf16>, vector<8x128xf32> -> vector<8x128xf32>
    %c0_263 = arith.constant 0 : index
    %c0_264 = arith.constant 0 : index
    %658 = vector.load %arg8[%c0_263, %c0_264] : memref<1x128xf32, #tpu.memory_space<vmem>>, vector<1x128xf32>
    %659 = vector.broadcast %658 : vector<1x128xf32> to vector<8x128xf32>
    %660 = arith.addf %657, %659 : vector<8x128xf32>
    %c0_265 = arith.constant 0 : index
    %c0_266 = arith.constant 0 : index
    %661 = vector.load %arg10[%c0_265, %c0_266] : memref<8x128xf32, #tpu.memory_space<vmem>>, vector<8x128xf32>
    tpu.vector_store %arg10[%c0_265, %c0_266], %660 {strides = array<i32>} : memref<8x128xf32, #tpu.memory_space<vmem>>, vector<8x128xf32>,
    return
  }
  func.func @transform_0(%arg0: i32, %arg1: memref<8xi32, #tpu.memory_space<smem>>) -> (i32, i32) {
    %c0_i32 = arith.constant 0 : i32
    %c0_i32_0 = arith.constant 0 : i32
    %c0_i32_1 = arith.constant 0 : i32
    return %c0_i32, %c0_i32_0 : i32, i32
  }
  func.func @transform_1(%arg0: i32, %arg1: memref<8xi32, #tpu.memory_space<smem>>) -> (i32, i32, i32) {
    %c0_i32 = arith.constant 0 : i32
    %c0_i32_0 = arith.constant 0 : i32
    %c0_i32_1 = arith.constant 0 : i32
    %c0_i32_2 = arith.constant 0 : i32
    return %c0_i32, %c0_i32_0, %c0_i32_1 : i32, i32, i32
  }
  func.func @transform_2(%arg0: i32, %arg1: memref<8xi32, #tpu.memory_space<smem>>) -> (i32, i32, i32) {
    %c0_i32 = arith.constant 0 : i32
    %c0_i32_0 = arith.constant 0 : i32
    %c0_i32_1 = arith.constant 0 : i32
    %c0_i32_2 = arith.constant 0 : i32
    return %c0_i32, %c0_i32_0, %c0_i32_1 : i32, i32, i32
  }
  func.func @transform_3(%arg0: i32, %arg1: memref<8xi32, #tpu.memory_space<smem>>) -> (i32, i32, i32) {
    %c0_i32 = arith.constant 0 : i32
    %c0_i32_0 = arith.constant 0 : i32
    %c0_i32_1 = arith.constant 0 : i32
    %c0_i32_2 = arith.constant 0 : i32
    return %c0_i32, %c0_i32_0, %c0_i32_1 : i32, i32, i32
  }
  func.func @transform_4(%arg0: i32, %arg1: memref<8xi32, #tpu.memory_space<smem>>) -> (i32, i32, i32) {
    %c0_i32 = arith.constant 0 : i32
    %c0_i32_0 = arith.constant 0 : i32
    %c0_i32_1 = arith.constant 0 : i32
    %c0_i32_2 = arith.constant 0 : i32
    return %c0_i32, %c0_i32_0, %c0_i32_1 : i32, i32, i32
  }
  func.func @transform_5(%arg0: i32, %arg1: memref<8xi32, #tpu.memory_space<smem>>) -> (i32, i32) {
    %c0_i32 = arith.constant 0 : i32
    %c0_i32_0 = arith.constant 0 : i32
    %c0_i32_1 = arith.constant 0 : i32
    return %c0_i32, %c0_i32_0 : i32, i32
  }
  func.func @transform_6(%arg0: i32, %arg1: memref<8xi32, #tpu.memory_space<smem>>) -> (i32, i32) {
    %c0_i32 = arith.constant 0 : i32
    %c0_i32_0 = arith.constant 0 : i32
    %c0_i32_1 = arith.constant 0 : i32
    return %c0_i32, %c0_i32_0 : i32, i32
  }
  func.func @transform_7(%arg0: i32, %arg1: memref<8xi32, #tpu.memory_space<smem>>) -> (i32, i32, i32) {
    %c0_i32 = arith.constant 0 : i32
    %c0_i32_0 = arith.constant 0 : i32
    %c0_i32_1 = arith.constant 0 : i32
    %c0_i32_2 = arith.constant 0 : i32
    return %c0_i32, %c0_i32_0, %c0_i32_1 : i32, i32, i32
  }
  func.func @transform_8(%arg0: i32, %arg1: memref<8xi32, #tpu.memory_space<smem>>) -> (i32, i32) {
    %c0_i32 = arith.constant 0 : i32
    %c0_i32_0 = arith.constant 0 : i32
    %c0_i32_1 = arith.constant 0 : i32
    return %c0_i32, %c0_i32_0 : i32, i32
  }
  func.func @transform_9(%arg0: i32, %arg1: memref<8xi32, #tpu.memory_space<smem>>) -> (i32, i32, i32) {
    %c0_i32 = arith.constant 0 : i32
    %c0_i32_0 = arith.constant 0 : i32
    %c0_i32_1 = arith.constant 0 : i32
    %c0_i32_2 = arith.constant 0 : i32
    return %c0_i32, %c0_i32_0, %c0_i32_1 : i32, i32, i32
  }
}

</mosaic_0001>

<llo_original>
// kernel: tpu_custom_call.1
$region0: #{tpu_custom_call.1}
  #allocation0 [shape = 'u32[]', space=smem, size = 0x4, offset = 0x4, fixed_abs, tag = 'smem constant byte address 0x4 - core index']
  #allocation1 [shape = 'u32[144,128]{1,0:T(1,128)}', space=vmem, size = 0x12000, scoped, tag = 'internal scratch']
  #allocation2 [shape = 'f32[8,128]{1,0:T(8,128)}', space=vmem, size = 0x1000, scoped, tag = 'scratch operand']
  #allocation3 [shape = 'f32[8,384]{1,0:T(8,128)}', space=vmem, size = 0x3000, scoped, tag = 'scratch operand']
  #allocation4 [shape = 's32[1]{0}', space=sflag, size = 0x4, scoped, tag = 'scoped memory for tpu_custom_call.1']
  #allocation5 [shape = 'u8[512]{0}', space=smem, size = 0x200, scoped, tag = 'prefetched SMEM operand 0']
  %s0 = inlined_call_operand.hbm [shape: s32[8], index: 0, kind: input, shape index: {}]
  %s1 = inlined_call_operand.hbm [shape: f32[16,128], index: 1, kind: input, shape index: {}]
  %s2 = inlined_call_operand.hbm [shape: bf16[2,128,384], index: 2, kind: input, shape index: {}]
  %s3 = inlined_call_operand.hbm [shape: bf16[2,128,384], index: 3, kind: input, shape index: {}]
  %s4 = inlined_call_operand.vmem [shape: f32[2,1,384], index: 4, kind: input, shape index: {}]
  %s5 = inlined_call_operand.vmem [shape: f32[2,1,384], index: 5, kind: input, shape index: {}]
  %s6 = inlined_call_operand.hbm [shape: bf16[128,128], index: 6, kind: input, shape index: {}]
  %s7 = inlined_call_operand.vmem [shape: f32[1,128], index: 7, kind: input, shape index: {}]
  %s8 = inlined_call_operand.vmem [shape: f32[2,1,128], index: 8, kind: input, shape index: {}]
  %s9 = inlined_call_operand.hbm [shape: f32[8,128], index: 9, kind: output, shape index: {0}]
  %s10 = inlined_call_operand.hbm [shape: f32[2,1,128], index: 10, kind: output, shape index: {1}]
  %11 = xla_tuple %s9, %s10
  %s12 = sld [smem:[#allocation0]]
  $region66: #{tpu_custom_call.1} parent=0
    _
  %s14 = ssub.s32 1, %s12
  %s15 = scalar_select 0, %s14, %s12
  %17 = dma.hbm_to_smem %s0, 16, [#allocation5], [#allocation4]
  %18 = dma.done [#allocation4], 16
  %19 = sfence
  $region1: #{tpu_custom_call.1} parent=0
    #allocation6 [shape = 'u8[8192]{0}', space=vmem, size = 0x2000, scoped, tag = 'input window, operand 1, single buffered']
    #allocation7 [shape = 's32[1]{0}', space=sflag, size = 0x4, scoped, tag = 'scoped memory for tpu_custom_call.1']
    #allocation8 [shape = 's32[1]{0}', space=sflag, size = 0x4, scoped, tag = 'scoped memory for tpu_custom_call.1']
    #allocation9 [shape = 'u8[196608]{0}', space=vmem, size = 0x30000, scoped, tag = 'input window, operand 2, single buffered']
    #allocation10 [shape = 's32[1]{0}', space=sflag, size = 0x4, scoped, tag = 'scoped memory for tpu_custom_call.1']
    #allocation11 [shape = 'u8[196608]{0}', space=vmem, size = 0x30000, scoped, tag = 'input window, operand 3, single buffered']
    #allocation12 [shape = 'u8[32768]{0}', space=vmem, size = 0x8000, scoped, tag = 'input window, operand 6, single buffered']
    #allocation13 [shape = 's32[1]{0}', space=sflag, size = 0x4, scoped, tag = 'scoped memory for tpu_custom_call.1']
    #allocation14 [shape = 'u8[4096]{0}', space=vmem, size = 0x1000, scoped, tag = 'output window, operand 0, single buffered']
    #allocation15 [shape = 'u8[1024]{0}', space=vmem, size = 0x400, scoped, tag = 'output window, operand 1, single buffered']
    #allocation16 [shape = 's32[1]{0}', space=sflag, size = 0x4, scoped, tag = 'scoped memory for tpu_custom_call.1']
    %20 = vsyncpa [#allocation7], 0
    %21 = vsyncpa [#allocation10], 0
    %22 = vsyncpa [#allocation13], 0
    %23 = vsyncpa [#allocation8], 0
    %24 = vsyncpa [#allocation16], 0
    // Predicated region
    $region2: #{tpu_custom_call.1} parent=1 // pred_check
      _
    $region3: #{tpu_custom_call.1} parent=1 // pred_check_branch
      %26 = sbr.rel (0) target = $region5
    $region4: #{tpu_custom_call.1} parent=1 // pred_region
      %s28 = ssub.s32 256, 256
      %29 = vsyncadd [#allocation7], %s28
      %s30 = sshll.u32 [#allocation6], 4
      %s31 = int_to_ptr.vmem [resolvable:$true] %s30
      %36 = dma.hbm_to_vmem [thread:$0]  %s1, 256, %s31, [#allocation7], 128, 128, 8
    $region5: #{tpu_custom_call.1} parent=1 // pred_fallthru
      _
    // Predicated region
    $region6: #{tpu_custom_call.1} parent=1 // pred_check
      _
    $region7: #{tpu_custom_call.1} parent=1 // pred_check_branch
      %38 = sbr.rel (0) target = $region9
    $region8: #{tpu_custom_call.1} parent=1 // pred_region
      %s40 = ssub.s32 6144, 6144
      %41 = vsyncadd [#allocation10], %s40
      %s42 = sshll.u32 [#allocation9], 4
      %s43 = int_to_ptr.vmem [resolvable:$true] %s42
      %48 = dma.hbm_to_vmem [thread:$0]  %s2, 6144, %s43, [#allocation10], 192, 192, 12
    $region9: #{tpu_custom_call.1} parent=1 // pred_fallthru
      _
    // Predicated region
    $region10: #{tpu_custom_call.1} parent=1 // pred_check
      _
    $region11: #{tpu_custom_call.1} parent=1 // pred_check_branch
      %50 = sbr.rel (0) target = $region13
    $region12: #{tpu_custom_call.1} parent=1 // pred_region
      %s52 = ssub.s32 6144, 6144
      %53 = vsyncadd [#allocation10], %s52
      %s54 = sshll.u32 [#allocation11], 4
      %s55 = int_to_ptr.vmem [resolvable:$true] %s54
      %60 = dma.hbm_to_vmem [thread:$0]  %s3, 6144, %s55, [#allocation10], 192, 192, 12
    $region13: #{tpu_custom_call.1} parent=1 // pred_fallthru
      _
    // Predicated region
    $region14: #{tpu_custom_call.1} parent=1 // pred_check
      _
    $region15: #{tpu_custom_call.1} parent=1 // pred_check_branch
      %62 = sbr.rel (0) target = $region17
    $region16: #{tpu_custom_call.1} parent=1 // pred_region
      _
    $region17: #{tpu_custom_call.1} parent=1 // pred_fallthru
      _
    // Predicated region
    $region18: #{tpu_custom_call.1} parent=1 // pred_check
      _
    $region19: #{tpu_custom_call.1} parent=1 // pred_check_branch
      %64 = sbr.rel (0) target = $region21
    $region20: #{tpu_custom_call.1} parent=1 // pred_region
      _
    $region21: #{tpu_custom_call.1} parent=1 // pred_fallthru
      _
    // Predicated region
    $region22: #{tpu_custom_call.1} parent=1 // pred_check
      _
    $region23: #{tpu_custom_call.1} parent=1 // pred_check_branch
      %66 = sbr.rel (0) target = $region25
    $region24: #{tpu_custom_call.1} parent=1 // pred_region
      %s68 = ssub.s32 1024, 1024
      %69 = vsyncadd [#allocation13], %s68
      %s70 = sshll.u32 [#allocation12], 4
      %s71 = int_to_ptr.vmem [resolvable:$true] %s70
      %76 = dma.hbm_to_vmem [thread:$0]  %s6, 1024, %s71, [#allocation13], 64, 64, 4
    $region25: #{tpu_custom_call.1} parent=1 // pred_fallthru
      _
    // Predicated region
    $region26: #{tpu_custom_call.1} parent=1 // pred_check
      _
    $region27: #{tpu_custom_call.1} parent=1 // pred_check_branch
      %78 = sbr.rel (0) target = $region29
    $region28: #{tpu_custom_call.1} parent=1 // pred_region
      _
    $region29: #{tpu_custom_call.1} parent=1 // pred_fallthru
      _
    // Predicated region
    $region30: #{tpu_custom_call.1} parent=1 // pred_check
      _
    $region31: #{tpu_custom_call.1} parent=1 // pred_check_branch
      %80 = sbr.rel (0) target = $region33
    $region32: #{tpu_custom_call.1} parent=1 // pred_region
      _
    $region33: #{tpu_custom_call.1} parent=1 // pred_fallthru
      _
    // Predicated region
    $region34: #{tpu_custom_call.1} parent=1 // pred_check
      _
    $region35: #{tpu_custom_call.1} parent=1 // pred_check_branch
      %82 = sbr.rel (0) target = $region37
    $region36: #{tpu_custom_call.1} parent=1 // pred_region
      %83 = dma.done [#allocation7], 256
    $region37: #{tpu_custom_call.1} parent=1 // pred_fallthru
      _
    // Predicated region
    $region38: #{tpu_custom_call.1} parent=1 // pred_check
      _
    $region39: #{tpu_custom_call.1} parent=1 // pred_check_branch
      %85 = sbr.rel (0) target = $region41
    $region40: #{tpu_custom_call.1} parent=1 // pred_region
      %86 = dma.done [#allocation10], 6144
    $region41: #{tpu_custom_call.1} parent=1 // pred_fallthru
      _
    // Predicated region
    $region42: #{tpu_custom_call.1} parent=1 // pred_check
      _
    $region43: #{tpu_custom_call.1} parent=1 // pred_check_branch
      %88 = sbr.rel (0) target = $region45
    $region44: #{tpu_custom_call.1} parent=1 // pred_region
      %89 = dma.done [#allocation10], 6144
    $region45: #{tpu_custom_call.1} parent=1 // pred_fallthru
      _
    // Predicated region
    $region46: #{tpu_custom_call.1} parent=1 // pred_check
      _
    $region47: #{tpu_custom_call.1} parent=1 // pred_check_branch
      %91 = sbr.rel (0) target = $region49
    $region48: #{tpu_custom_call.1} parent=1 // pred_region
      %92 = dma.done [#allocation13], 1024
    $region49: #{tpu_custom_call.1} parent=1 // pred_fallthru
      _
    %s94 = sld [smem:[#allocation5]]
    %s95 = scalar_lea.vmem [#allocation6], %s94
    %v96 = vld [vmem:[%s95] sm:$0x1]
    %97 = vst [vmem:[#allocation2] sm:$0x1] %v96
    %s98 = sld [smem:[#allocation5 + $0x1]]
    %s99 = scalar_lea.vmem [#allocation6], %s98
    %v100 = vld [vmem:[%s99] sm:$0x1]
    %101 = vst [vmem:[#allocation2 + $0x1] sm:$0x1] %v100
    %s102 = sld [smem:[#allocation5 + $0x2]]
    %s103 = scalar_lea.vmem [#allocation6], %s102
    %v104 = vld [vmem:[%s103] sm:$0x1]
    %105 = vst [vmem:[#allocation2 + $0x2] sm:$0x1] %v104
    %s106 = sld [smem:[#allocation5 + $0x3]]
    %s107 = scalar_lea.vmem [#allocation6], %s106
    %v108 = vld [vmem:[%s107] sm:$0x1]
    %109 = vst [vmem:[#allocation2 + $0x3] sm:$0x1] %v108
    %s110 = sld [smem:[#allocation5 + $0x4]]
    %s111 = scalar_lea.vmem [#allocation6], %s110
    %v112 = vld [vmem:[%s111] sm:$0x1]
    %113 = vst [vmem:[#allocation2 + $0x4] sm:$0x1] %v112
    %s114 = sld [smem:[#allocation5 + $0x5]]
    %s115 = scalar_lea.vmem [#allocation6], %s114
    %v116 = vld [vmem:[%s115] sm:$0x1]
    %117 = vst [vmem:[#allocation2 + $0x5] sm:$0x1] %v116
    %s118 = sld [smem:[#allocation5 + $0x6]]
    %s119 = scalar_lea.vmem [#allocation6], %s118
    %v120 = vld [vmem:[%s119] sm:$0x1]
    %121 = vst [vmem:[#allocation2 + $0x6] sm:$0x1] %v120
    %s122 = sld [smem:[#allocation5 + $0x7]]
    %s123 = scalar_lea.vmem [#allocation6], %s122
    %v124 = vld [vmem:[%s123] sm:$0x1]
    %125 = vst [vmem:[#allocation2 + $0x7] sm:$0x1] %v124
    %v126 = vld [vmem:[#allocation2] sm:$0xff]
    %v127 = vpack.c.bf16 %v126, %v126
    %v128 = vld [vmem:[#allocation9] sm:$0xff]
    %v129 = vld [vmem:[#allocation9 + $0x8] sm:$0xf]
    %v130 = vld [vmem:[#allocation9 + $0xc] sm:$0xff]
    %v131 = vld [vmem:[#allocation9 + $0x14] sm:$0xf]
    %v132 = vld [vmem:[#allocation9 + $0x18] sm:$0xff]
    %v133 = vld [vmem:[#allocation9 + $0x20] sm:$0xf]
    %v134 = vld [vmem:[#allocation9 + $0x24] sm:$0xff]
    %v135 = vld [vmem:[#allocation9 + $0x2c] sm:$0xf]
    %v136 = vld [vmem:[#allocation9 + $0x30] sm:$0xff]
    %v137 = vld [vmem:[#allocation9 + $0x38] sm:$0xf]
    %v138 = vld [vmem:[#allocation9 + $0x3c] sm:$0xff]
    %v139 = vld [vmem:[#allocation9 + $0x44] sm:$0xf]
    %v140 = vld [vmem:[#allocation9 + $0x48] sm:$0xff]
    %v141 = vld [vmem:[#allocation9 + $0x50] sm:$0xf]
    %v142 = vld [vmem:[#allocation9 + $0x54] sm:$0xff]
    %v143 = vld [vmem:[#allocation9 + $0x5c] sm:$0xf]
    %v144 = vld [vmem:[#allocation9 + $0x60] sm:$0xff]
    %v145 = vld [vmem:[#allocation9 + $0x68] sm:$0xf]
    %v146 = vld [vmem:[#allocation9 + $0x6c] sm:$0xff]
    %v147 = vld [vmem:[#allocation9 + $0x74] sm:$0xf]
    %v148 = vld [vmem:[#allocation9 + $0x78] sm:$0xff]
    %v149 = vld [vmem:[#allocation9 + $0x80] sm:$0xf]
    %v150 = vld [vmem:[#allocation9 + $0x84] sm:$0xff]
    %v151 = vld [vmem:[#allocation9 + $0x8c] sm:$0xf]
    %v152 = vld [vmem:[#allocation9 + $0x90] sm:$0xff]
    %v153 = vld [vmem:[#allocation9 + $0x98] sm:$0xf]
    %v154 = vld [vmem:[#allocation9 + $0x9c] sm:$0xff]
    %v155 = vld [vmem:[#allocation9 + $0xa4] sm:$0xf]
    %v156 = vld [vmem:[#allocation9 + $0xa8] sm:$0xff]
    %v157 = vld [vmem:[#allocation9 + $0xb0] sm:$0xf]
    %v158 = vld [vmem:[#allocation9 + $0xb4] sm:$0xff]
    %v159 = vld [vmem:[#allocation9 + $0xbc] sm:$0xf]
    %v160 = vld [vmem:[%s4] sm:$0x7]
    %v162 = vlaneseq
    %v163 = vshrl.u32 %v162, 7
    %v164 = vsub.s32 0, %v163
    %v165 = vrot.slane %v160, %v164
    %v166 = vlaneseq
    %v167 = vshrl.u32 %v166, 7
    %v168 = vsub.s32 1, %v167
    %v169 = vrot.slane %v160, %v168
    %v170 = vlaneseq
    %v171 = vshrl.u32 %v170, 7
    %v172 = vsub.s32 2, %v171
    %v173 = vrot.slane %v160, %v172
    %v209 = vunpack.c.l.b16 %v128
    %v210 = vunpack.c.h.b16 %v128
    %v211 = vunpack.c.l.b16 %v129
    %v212 = vunpack.c.l.b16 %v130
    %v213 = vunpack.c.h.b16 %v130
    %v214 = vunpack.c.l.b16 %v131
    %v215 = vunpack.c.l.b16 %v132
    %v216 = vunpack.c.h.b16 %v132
    %v217 = vunpack.c.l.b16 %v133
    %v218 = vunpack.c.l.b16 %v134
    %v219 = vunpack.c.h.b16 %v134
    %v220 = vunpack.c.l.b16 %v135
    %v221 = vunpack.c.l.b16 %v136
    %v222 = vunpack.c.h.b16 %v136
    %v223 = vunpack.c.l.b16 %v137
    %v224 = vunpack.c.l.b16 %v138
    %v225 = vunpack.c.h.b16 %v138
    %v226 = vunpack.c.l.b16 %v139
    %v227 = vunpack.c.l.b16 %v140
    %v228 = vunpack.c.h.b16 %v140
    %v229 = vunpack.c.l.b16 %v141
    %v230 = vunpack.c.l.b16 %v142
    %v231 = vunpack.c.h.b16 %v142
    %v232 = vunpack.c.l.b16 %v143
    %v233 = vunpack.c.l.b16 %v144
    %v234 = vunpack.c.h.b16 %v144
    %v235 = vunpack.c.l.b16 %v145
    %v236 = vunpack.c.l.b16 %v146
    %v237 = vunpack.c.h.b16 %v146
    %v238 = vunpack.c.l.b16 %v147
    %v239 = vunpack.c.l.b16 %v148
    %v240 = vunpack.c.h.b16 %v148
    %v241 = vunpack.c.l.b16 %v149
    %v242 = vunpack.c.l.b16 %v150
    %v243 = vunpack.c.h.b16 %v150
    %v244 = vunpack.c.l.b16 %v151
    %v245 = vunpack.c.l.b16 %v152
    %v246 = vunpack.c.h.b16 %v152
    %v247 = vunpack.c.l.b16 %v153
    %v248 = vunpack.c.l.b16 %v154
    %v249 = vunpack.c.h.b16 %v154
    %v250 = vunpack.c.l.b16 %v155
    %v251 = vunpack.c.l.b16 %v156
    %v252 = vunpack.c.h.b16 %v156
    %v253 = vunpack.c.l.b16 %v157
    %v254 = vunpack.c.l.b16 %v158
    %v255 = vunpack.c.h.b16 %v158
    %v256 = vunpack.c.l.b16 %v159
    %v257 = vpack.c.b16 %v212, %v209
    %v258 = vpack.c.b16 %v213, %v210
    %v259 = vpack.c.b16 %v214, %v211
    %v260 = vpack.c.b16 %v218, %v215
    %v261 = vpack.c.b16 %v219, %v216
    %v262 = vpack.c.b16 %v220, %v217
    %v263 = vpack.c.b16 %v224, %v221
    %v264 = vpack.c.b16 %v225, %v222
    %v265 = vpack.c.b16 %v226, %v223
    %v266 = vpack.c.b16 %v230, %v227
    %v267 = vpack.c.b16 %v231, %v228
    %v268 = vpack.c.b16 %v232, %v229
    %v269 = vpack.c.b16 %v236, %v233
    %v270 = vpack.c.b16 %v237, %v234
    %v271 = vpack.c.b16 %v238, %v235
    %v272 = vpack.c.b16 %v242, %v239
    %v273 = vpack.c.b16 %v243, %v240
    %v274 = vpack.c.b16 %v244, %v241
    %v275 = vpack.c.b16 %v248, %v245
    %v276 = vpack.c.b16 %v249, %v246
    %v277 = vpack.c.b16 %v250, %v247
    %v278 = vpack.c.b16 %v254, %v251
    %v279 = vpack.c.b16 %v255, %v252
    %v280 = vpack.c.b16 %v256, %v253
    %305 = vmatprep.subr.bf16.mxu0 %v258
    %306 = vmatpush1.bf16.msra.mxu0 %v257
    %307 = vmatprep.subr.bf16.mxu0 %v261
    %308 = vmatpush1.bf16.msra.mxu0 %v260
    %309 = vmatprep.subr.bf16.mxu0 %v264
    %310 = vmatpush1.bf16.msra.mxu0 %v263
    %311 = vmatprep.subr.bf16.mxu0 %v267
    %312 = vmatpush1.bf16.msra.mxu0 %v266
    %313 = vmatprep.subr.bf16.mxu0 %v270
    %314 = vmatpush1.bf16.msra.mxu0 %v269
    %315 = vmatprep.subr.bf16.mxu0 %v273
    %316 = vmatpush1.bf16.msra.mxu0 %v272
    %317 = vmatprep.subr.bf16.mxu0 %v276
    %318 = vmatpush1.bf16.msra.mxu0 %v275
    %319 = vmatprep.subr.bf16.mxu0 %v279
    %320 = vmatpush1.bf16.msra.mxu0 %v278
    %321 = vmatprep.subr.bf16.mxu0 0
    %322 = vmatpush1.bf16.msra.mxu0 0
    %323 = vmatprep.subr.bf16.mxu0 0
    %324 = vmatpush1.bf16.msra.mxu0 0
    %325 = vmatprep.subr.bf16.mxu0 0
    %326 = vmatpush1.bf16.msra.mxu0 0
    %327 = vmatprep.subr.bf16.mxu0 0
    %328 = vmatpush1.bf16.msra.mxu0 0
    %329 = vmatprep.subr.bf16.mxu0 0
    %330 = vmatpush1.bf16.msra.mxu0 0
    %331 = vmatprep.subr.bf16.mxu0 0
    %332 = vmatpush1.bf16.msra.mxu0 0
    %333 = vmatprep.subr.bf16.mxu0 0
    %334 = vmatpush1.bf16.msra.mxu0 0
    %335 = vmatprep.subr.bf16.mxu0 0
    %336 = vmatpush1.bf16.msra.mxu0 0
    %337 = vmatprep.mubr.bf16.mxu0 0
    %338 = vmatmul.mubr.bf16.gmra.mrb[0].mxu0 %v127
    %v339 = vpop.f32.mrb[0].mxu0
    %v340 = vadd.f32 %v165, %v339
    %v341 = vpop.f32.mrb[0].mxu0
    %v342 = vadd.f32 %v169, %v341
    %v343 = vpop.f32.mrb[0].mxu0
    %v344 = vpop.f32.mrb[0].mxu0
    %345 = vdwg.mxu0
    %346 = vmatprep.subr.bf16.mxu0 0
    %347 = vmatpush1.bf16.msra.mxu0 %v259
    %348 = vmatprep.subr.bf16.mxu0 0
    %349 = vmatpush1.bf16.msra.mxu0 %v262
    %350 = vmatprep.subr.bf16.mxu0 0
    %351 = vmatpush1.bf16.msra.mxu0 %v265
    %352 = vmatprep.subr.bf16.mxu0 0
    %353 = vmatpush1.bf16.msra.mxu0 %v268
    %354 = vmatprep.subr.bf16.mxu0 0
    %355 = vmatpush1.bf16.msra.mxu0 %v271
    %356 = vmatprep.subr.bf16.mxu0 0
    %357 = vmatpush1.bf16.msra.mxu0 %v274
    %358 = vmatprep.subr.bf16.mxu0 0
    %359 = vmatpush1.bf16.msra.mxu0 %v277
    %360 = vmatprep.subr.bf16.mxu0 0
    %361 = vmatpush1.bf16.msra.mxu0 %v280
    %362 = vmatprep.subr.bf16.mxu0 0
    %363 = vmatpush1.bf16.msra.mxu0 0
    %364 = vmatprep.subr.bf16.mxu0 0
    %365 = vmatpush1.bf16.msra.mxu0 0
    %366 = vmatprep.subr.bf16.mxu0 0
    %367 = vmatpush1.bf16.msra.mxu0 0
    %368 = vmatprep.subr.bf16.mxu0 0
    %369 = vmatpush1.bf16.msra.mxu0 0
    %370 = vmatprep.subr.bf16.mxu0 0
    %371 = vmatpush1.bf16.msra.mxu0 0
    %372 = vmatprep.subr.bf16.mxu0 0
    %373 = vmatpush1.bf16.msra.mxu0 0
    %374 = vmatprep.subr.bf16.mxu0 0
    %375 = vmatpush1.bf16.msra.mxu0 0
    %376 = vmatprep.subr.bf16.mxu0 0
    %377 = vmatpush1.bf16.msra.mxu0 0
    %378 = vmatprep.mubr.bf16.mxu0 0
    %379 = vmatmul.mubr.bf16.gmra.mrb[0].mxu0 %v127
    %v380 = vpop.f32.mrb[0].mxu0
    %v381 = vadd.f32 %v173, %v380
    %v382 = vpop.f32.mrb[0].mxu0
    %v383 = vpop.f32.mrb[0].mxu0
    %v384 = vpop.f32.mrb[0].mxu0
    %385 = vdwg.mxu0
    %386 = vst [vmem:[#allocation3] sm:$0xff] %v340
    %387 = vst [vmem:[#allocation3 + $0x8] sm:$0xff] %v342
    %388 = vst [vmem:[#allocation3 + $0x10] sm:$0xff] %v381
    %v389 = vld [vmem:[%s8] sm:$0x1]
    %v390 = vpack.c.bf16 %v389, %v389
    %v391 = vld [vmem:[#allocation11] sm:$0xff]
    %v392 = vld [vmem:[#allocation11 + $0x8] sm:$0xf]
    %v393 = vld [vmem:[#allocation11 + $0xc] sm:$0xff]
    %v394 = vld [vmem:[#allocation11 + $0x14] sm:$0xf]
    %v395 = vld [vmem:[#allocation11 + $0x18] sm:$0xff]
    %v396 = vld [vmem:[#allocation11 + $0x20] sm:$0xf]
    %v397 = vld [vmem:[#allocation11 + $0x24] sm:$0xff]
    %v398 = vld [vmem:[#allocation11 + $0x2c] sm:$0xf]
    %v399 = vld [vmem:[#allocation11 + $0x30] sm:$0xff]
    %v400 = vld [vmem:[#allocation11 + $0x38] sm:$0xf]
    %v401 = vld [vmem:[#allocation11 + $0x3c] sm:$0xff]
    %v402 = vld [vmem:[#allocation11 + $0x44] sm:$0xf]
    %v403 = vld [vmem:[#allocation11 + $0x48] sm:$0xff]
    %v404 = vld [vmem:[#allocation11 + $0x50] sm:$0xf]
    %v405 = vld [vmem:[#allocation11 + $0x54] sm:$0xff]
    %v406 = vld [vmem:[#allocation11 + $0x5c] sm:$0xf]
    %v407 = vld [vmem:[#allocation11 + $0x60] sm:$0xff]
    %v408 = vld [vmem:[#allocation11 + $0x68] sm:$0xf]
    %v409 = vld [vmem:[#allocation11 + $0x6c] sm:$0xff]
    %v410 = vld [vmem:[#allocation11 + $0x74] sm:$0xf]
    %v411 = vld [vmem:[#allocation11 + $0x78] sm:$0xff]
    %v412 = vld [vmem:[#allocation11 + $0x80] sm:$0xf]
    %v413 = vld [vmem:[#allocation11 + $0x84] sm:$0xff]
    %v414 = vld [vmem:[#allocation11 + $0x8c] sm:$0xf]
    %v415 = vld [vmem:[#allocation11 + $0x90] sm:$0xff]
    %v416 = vld [vmem:[#allocation11 + $0x98] sm:$0xf]
    %v417 = vld [vmem:[#allocation11 + $0x9c] sm:$0xff]
    %v418 = vld [vmem:[#allocation11 + $0xa4] sm:$0xf]
    %v419 = vld [vmem:[#allocation11 + $0xa8] sm:$0xff]
    %v420 = vld [vmem:[#allocation11 + $0xb0] sm:$0xf]
    %v421 = vld [vmem:[#allocation11 + $0xb4] sm:$0xff]
    %v422 = vld [vmem:[#allocation11 + $0xbc] sm:$0xf]
    %v423 = vld [vmem:[%s5] sm:$0x7]
    %v456 = vunpack.c.l.b16 %v391
    %v457 = vunpack.c.h.b16 %v391
    %v458 = vunpack.c.l.b16 %v392
    %v459 = vunpack.c.l.b16 %v393
    %v460 = vunpack.c.h.b16 %v393
    %v461 = vunpack.c.l.b16 %v394
    %v462 = vunpack.c.l.b16 %v395
    %v463 = vunpack.c.h.b16 %v395
    %v464 = vunpack.c.l.b16 %v396
    %v465 = vunpack.c.l.b16 %v397
    %v466 = vunpack.c.h.b16 %v397
    %v467 = vunpack.c.l.b16 %v398
    %v468 = vunpack.c.l.b16 %v399
    %v469 = vunpack.c.h.b16 %v399
    %v470 = vunpack.c.l.b16 %v400
    %v471 = vunpack.c.l.b16 %v401
    %v472 = vunpack.c.h.b16 %v401
    %v473 = vunpack.c.l.b16 %v402
    %v474 = vunpack.c.l.b16 %v403
    %v475 = vunpack.c.h.b16 %v403
    %v476 = vunpack.c.l.b16 %v404
    %v477 = vunpack.c.l.b16 %v405
    %v478 = vunpack.c.h.b16 %v405
    %v479 = vunpack.c.l.b16 %v406
    %v480 = vunpack.c.l.b16 %v407
    %v481 = vunpack.c.h.b16 %v407
    %v482 = vunpack.c.l.b16 %v408
    %v483 = vunpack.c.l.b16 %v409
    %v484 = vunpack.c.h.b16 %v409
    %v485 = vunpack.c.l.b16 %v410
    %v486 = vunpack.c.l.b16 %v411
    %v487 = vunpack.c.h.b16 %v411
    %v488 = vunpack.c.l.b16 %v412
    %v489 = vunpack.c.l.b16 %v413
    %v490 = vunpack.c.h.b16 %v413
    %v491 = vunpack.c.l.b16 %v414
    %v492 = vunpack.c.l.b16 %v415
    %v493 = vunpack.c.h.b16 %v415
    %v494 = vunpack.c.l.b16 %v416
    %v495 = vunpack.c.l.b16 %v417
    %v496 = vunpack.c.h.b16 %v417
    %v497 = vunpack.c.l.b16 %v418
    %v498 = vunpack.c.l.b16 %v419
    %v499 = vunpack.c.h.b16 %v419
    %v500 = vunpack.c.l.b16 %v420
    %v501 = vunpack.c.l.b16 %v421
    %v502 = vunpack.c.h.b16 %v421
    %v503 = vunpack.c.l.b16 %v422
    %v504 = vpack.c.b16 %v459, %v456
    %v505 = vpack.c.b16 %v460, %v457
    %v506 = vpack.c.b16 %v461, %v458
    %v507 = vpack.c.b16 %v465, %v462
    %v508 = vpack.c.b16 %v466, %v463
    %v509 = vpack.c.b16 %v467, %v464
    %v510 = vpack.c.b16 %v471, %v468
    %v511 = vpack.c.b16 %v472, %v469
    %v512 = vpack.c.b16 %v473, %v470
    %v513 = vpack.c.b16 %v477, %v474
    %v514 = vpack.c.b16 %v478, %v475
    %v515 = vpack.c.b16 %v479, %v476
    %v516 = vpack.c.b16 %v483, %v480
    %v517 = vpack.c.b16 %v484, %v481
    %v518 = vpack.c.b16 %v485, %v482
    %v519 = vpack.c.b16 %v489, %v486
    %v520 = vpack.c.b16 %v490, %v487
    %v521 = vpack.c.b16 %v491, %v488
    %v522 = vpack.c.b16 %v495, %v492
    %v523 = vpack.c.b16 %v496, %v493
    %v524 = vpack.c.b16 %v497, %v494
    %v525 = vpack.c.b16 %v501, %v498
    %v526 = vpack.c.b16 %v502, %v499
    %v527 = vpack.c.b16 %v503, %v500
    %v553 = vlaneseq
    %v554 = vshrl.u32 %v553, 7
    %v555 = vsub.s32 0, %v554
    %v556 = vrot.slane %v423, %v555
    %v557 = vlaneseq
    %v558 = vshrl.u32 %v557, 7
    %v559 = vsub.s32 1, %v558
    %v560 = vrot.slane %v423, %v559
    %v561 = vlaneseq
    %v562 = vshrl.u32 %v561, 7
    %v563 = vsub.s32 2, %v562
    %v564 = vrot.slane %v423, %v563
    %568 = vmatprep.subr.bf16.mxu0 %v505
    %569 = vmatpush1.bf16.msra.mxu0 %v504
    %570 = vmatprep.subr.bf16.mxu0 %v508
    %571 = vmatpush1.bf16.msra.mxu0 %v507
    %572 = vmatprep.subr.bf16.mxu0 %v511
    %573 = vmatpush1.bf16.msra.mxu0 %v510
    %574 = vmatprep.subr.bf16.mxu0 %v514
    %575 = vmatpush1.bf16.msra.mxu0 %v513
    %576 = vmatprep.subr.bf16.mxu0 %v517
    %577 = vmatpush1.bf16.msra.mxu0 %v516
    %578 = vmatprep.subr.bf16.mxu0 %v520
    %579 = vmatpush1.bf16.msra.mxu0 %v519
    %580 = vmatprep.subr.bf16.mxu0 %v523
    %581 = vmatpush1.bf16.msra.mxu0 %v522
    %582 = vmatprep.subr.bf16.mxu0 %v526
    %583 = vmatpush1.bf16.msra.mxu0 %v525
    %584 = vmatprep.subr.bf16.mxu0 0
    %585 = vmatpush1.bf16.msra.mxu0 0
    %586 = vmatprep.subr.bf16.mxu0 0
    %587 = vmatpush1.bf16.msra.mxu0 0
    %588 = vmatprep.subr.bf16.mxu0 0
    %589 = vmatpush1.bf16.msra.mxu0 0
    %590 = vmatprep.subr.bf16.mxu0 0
    %591 = vmatpush1.bf16.msra.mxu0 0
    %592 = vmatprep.subr.bf16.mxu0 0
    %593 = vmatpush1.bf16.msra.mxu0 0
    %594 = vmatprep.subr.bf16.mxu0 0
    %595 = vmatpush1.bf16.msra.mxu0 0
    %596 = vmatprep.subr.bf16.mxu0 0
    %597 = vmatpush1.bf16.msra.mxu0 0
    %598 = vmatprep.subr.bf16.mxu0 0
    %599 = vmatpush1.bf16.msra.mxu0 0
    %600 = vmatprep.mubr.bf16.mxu0 0
    %601 = vmatmul.mubr.bf16.gmra.mrb[0].mxu0 %v390
    %v602 = vpop.f32.mrb[0].mxu0
    %v603 = vadd.f32 %v556, %v602
    %v604 = vpop.f32.mrb[0].mxu0
    %v605 = vadd.f32 %v560, %v604
    %v606 = vpop.f32.mrb[0].mxu0
    %v607 = vpop.f32.mrb[0].mxu0
    %608 = vdwg.mxu0
    %609 = vmatprep.subr.bf16.mxu0 0
    %610 = vmatpush1.bf16.msra.mxu0 %v506
    %611 = vmatprep.subr.bf16.mxu0 0
    %612 = vmatpush1.bf16.msra.mxu0 %v509
    %613 = vmatprep.subr.bf16.mxu0 0
    %614 = vmatpush1.bf16.msra.mxu0 %v512
    %615 = vmatprep.subr.bf16.mxu0 0
    %616 = vmatpush1.bf16.msra.mxu0 %v515
    %617 = vmatprep.subr.bf16.mxu0 0
    %618 = vmatpush1.bf16.msra.mxu0 %v518
    %619 = vmatprep.subr.bf16.mxu0 0
    %620 = vmatpush1.bf16.msra.mxu0 %v521
    %621 = vmatprep.subr.bf16.mxu0 0
    %622 = vmatpush1.bf16.msra.mxu0 %v524
    %623 = vmatprep.subr.bf16.mxu0 0
    %624 = vmatpush1.bf16.msra.mxu0 %v527
    %625 = vmatprep.subr.bf16.mxu0 0
    %626 = vmatpush1.bf16.msra.mxu0 0
    %627 = vmatprep.subr.bf16.mxu0 0
    %628 = vmatpush1.bf16.msra.mxu0 0
    %629 = vmatprep.subr.bf16.mxu0 0
    %630 = vmatpush1.bf16.msra.mxu0 0
    %631 = vmatprep.subr.bf16.mxu0 0
    %632 = vmatpush1.bf16.msra.mxu0 0
    %633 = vmatprep.subr.bf16.mxu0 0
    %634 = vmatpush1.bf16.msra.mxu0 0
    %635 = vmatprep.subr.bf16.mxu0 0
    %636 = vmatpush1.bf16.msra.mxu0 0
    %637 = vmatprep.subr.bf16.mxu0 0
    %638 = vmatpush1.bf16.msra.mxu0 0
    %639 = vmatprep.subr.bf16.mxu0 0
    %640 = vmatpush1.bf16.msra.mxu0 0
    %641 = vmatprep.mubr.bf16.mxu0 0
    %642 = vmatmul.mubr.bf16.gmra.mrb[0].mxu0 %v390
    %v643 = vpop.f32.mrb[0].mxu0
    %v644 = vadd.f32 %v564, %v643
    %v645 = vpop.f32.mrb[0].mxu0
    %v646 = vpop.f32.mrb[0].mxu0
    %v647 = vpop.f32.mrb[0].mxu0
    %648 = vdwg.mxu0
    %v649 = vld [vmem:[#allocation3] ss:$8 sm:$0x7]
    %v650 = vadd.f32 %v649, %v603
    %v651 = vxor.u32 %v650, 2147483648
    %v652 = vmul.f32 %v651, 1.442695
    %v653 = vpow.pop %v652
    %v654 = vadd.f32 %v653, 1.0
    %v655 = vrcp.pop %v654
    %v656 = vmul.f32 1.0, %v655
    %v658 = vrot.slane %v649, 1
    %v660 = vadd.f32 %v658, %v605
    %v661 = vxor.u32 %v660, 2147483648
    %v662 = vmul.f32 %v661, 1.442695
    %v663 = vpow.pop %v662
    %v664 = vadd.f32 %v663, 1.0
    %v665 = vrcp.pop %v664
    %v666 = vmul.f32 1.0, %v665
    %v667 = vmul.f32 %v656, %v644
    %v668 = vrot.slane %v649, 2
    %v670 = vadd.f32 %v668, %v667
    %v671 = vtanh.pop %v670
    %v672 = vsub.f32 1.0, %v666
    %v673 = vmul.f32 %v672, %v671
    %v674 = vmul.f32 %v666, %v389
    %v675 = vadd.f32 %v673, %v674
    %676 = vst [vmem:[#allocation2] sm:$0x1] %v675
    %v677 = vpack.c.bf16 %v675, %v675
    %v678 = vld [vmem:[#allocation11] sm:$0xff]
    %v679 = vld [vmem:[#allocation11 + $0x8] sm:$0xf]
    %v680 = vld [vmem:[#allocation11 + $0xc] sm:$0xff]
    %v681 = vld [vmem:[#allocation11 + $0x14] sm:$0xf]
    %v682 = vld [vmem:[#allocation11 + $0x18] sm:$0xff]
    %v683 = vld [vmem:[#allocation11 + $0x20] sm:$0xf]
    %v684 = vld [vmem:[#allocation11 + $0x24] sm:$0xff]
    %v685 = vld [vmem:[#allocation11 + $0x2c] sm:$0xf]
    %v686 = vld [vmem:[#allocation11 + $0x30] sm:$0xff]
    %v687 = vld [vmem:[#allocation11 + $0x38] sm:$0xf]
    %v688 = vld [vmem:[#allocation11 + $0x3c] sm:$0xff]
    %v689 = vld [vmem:[#allocation11 + $0x44] sm:$0xf]
    %v690 = vld [vmem:[#allocation11 + $0x48] sm:$0xff]
    %v691 = vld [vmem:[#allocation11 + $0x50] sm:$0xf]
    %v692 = vld [vmem:[#allocation11 + $0x54] sm:$0xff]
    %v693 = vld [vmem:[#allocation11 + $0x5c] sm:$0xf]
    %v694 = vld [vmem:[#allocation11 + $0x60] sm:$0xff]
    %v695 = vld [vmem:[#allocation11 + $0x68] sm:$0xf]
    %v696 = vld [vmem:[#allocation11 + $0x6c] sm:$0xff]
    %v697 = vld [vmem:[#allocation11 + $0x74] sm:$0xf]
    %v698 = vld [vmem:[#allocation11 + $0x78] sm:$0xff]
    %v699 = vld [vmem:[#allocation11 + $0x80] sm:$0xf]
    %v700 = vld [vmem:[#allocation11 + $0x84] sm:$0xff]
    %v701 = vld [vmem:[#allocation11 + $0x8c] sm:$0xf]
    %v702 = vld [vmem:[#allocation11 + $0x90] sm:$0xff]
    %v703 = vld [vmem:[#allocation11 + $0x98] sm:$0xf]
    %v704 = vld [vmem:[#allocation11 + $0x9c] sm:$0xff]
    %v705 = vld [vmem:[#allocation11 + $0xa4] sm:$0xf]
    %v706 = vld [vmem:[#allocation11 + $0xa8] sm:$0xff]
    %v707 = vld [vmem:[#allocation11 + $0xb0] sm:$0xf]
    %v708 = vld [vmem:[#allocation11 + $0xb4] sm:$0xff]
    %v709 = vld [vmem:[#allocation11 + $0xbc] sm:$0xf]
    %v710 = vld [vmem:[%s5] sm:$0x7]
    %v743 = vunpack.c.l.b16 %v678
    %v744 = vunpack.c.h.b16 %v678
    %v745 = vunpack.c.l.b16 %v679
    %v746 = vunpack.c.l.b16 %v680
    %v747 = vunpack.c.h.b16 %v680
    %v748 = vunpack.c.l.b16 %v681
    %v749 = vunpack.c.l.b16 %v682
    %v750 = vunpack.c.h.b16 %v682
    %v751 = vunpack.c.l.b16 %v683
    %v752 = vunpack.c.l.b16 %v684
    %v753 = vunpack.c.h.b16 %v684
    %v754 = vunpack.c.l.b16 %v685
    %v755 = vunpack.c.l.b16 %v686
    %v756 = vunpack.c.h.b16 %v686
    %v757 = vunpack.c.l.b16 %v687
    %v758 = vunpack.c.l.b16 %v688
    %v759 = vunpack.c.h.b16 %v688
    %v760 = vunpack.c.l.b16 %v689
    %v761 = vunpack.c.l.b16 %v690
    %v762 = vunpack.c.h.b16 %v690
    %v763 = vunpack.c.l.b16 %v691
    %v764 = vunpack.c.l.b16 %v692
    %v765 = vunpack.c.h.b16 %v692
    %v766 = vunpack.c.l.b16 %v693
    %v767 = vunpack.c.l.b16 %v694
    %v768 = vunpack.c.h.b16 %v694
    %v769 = vunpack.c.l.b16 %v695
    %v770 = vunpack.c.l.b16 %v696
    %v771 = vunpack.c.h.b16 %v696
    %v772 = vunpack.c.l.b16 %v697
    %v773 = vunpack.c.l.b16 %v698
    %v774 = vunpack.c.h.b16 %v698
    %v775 = vunpack.c.l.b16 %v699
    %v776 = vunpack.c.l.b16 %v700
    %v777 = vunpack.c.h.b16 %v700
    %v778 = vunpack.c.l.b16 %v701
    %v779 = vunpack.c.l.b16 %v702
    %v780 = vunpack.c.h.b16 %v702
    %v781 = vunpack.c.l.b16 %v703
    %v782 = vunpack.c.l.b16 %v704
    %v783 = vunpack.c.h.b16 %v704
    %v784 = vunpack.c.l.b16 %v705
    %v785 = vunpack.c.l.b16 %v706
    %v786 = vunpack.c.h.b16 %v706
    %v787 = vunpack.c.l.b16 %v707
    %v788 = vunpack.c.l.b16 %v708
    %v789 = vunpack.c.h.b16 %v708
    %v790 = vunpack.c.l.b16 %v709
    %v791 = vpack.c.b16 %v746, %v743
    %v792 = vpack.c.b16 %v747, %v744
    %v793 = vpack.c.b16 %v748, %v745
    %v794 = vpack.c.b16 %v752, %v749
    %v795 = vpack.c.b16 %v753, %v750
    %v796 = vpack.c.b16 %v754, %v751
    %v797 = vpack.c.b16 %v758, %v755
    %v798 = vpack.c.b16 %v759, %v756
    %v799 = vpack.c.b16 %v760, %v757
    %v800 = vpack.c.b16 %v764, %v761
    %v801 = vpack.c.b16 %v765, %v762
    %v802 = vpack.c.b16 %v766, %v763
    %v803 = vpack.c.b16 %v770, %v767
    %v804 = vpack.c.b16 %v771, %v768
    %v805 = vpack.c.b16 %v772, %v769
    %v806 = vpack.c.b16 %v776, %v773
    %v807 = vpack.c.b16 %v777, %v774
    %v808 = vpack.c.b16 %v778, %v775
    %v809 = vpack.c.b16 %v782, %v779
    %v810 = vpack.c.b16 %v783, %v780
    %v811 = vpack.c.b16 %v784, %v781
    %v812 = vpack.c.b16 %v788, %v785
    %v813 = vpack.c.b16 %v789, %v786
    %v814 = vpack.c.b16 %v790, %v787
    %v840 = vlaneseq
    %v841 = vshrl.u32 %v840, 7
    %v842 = vsub.s32 0, %v841
    %v843 = vrot.slane %v710, %v842
    %v844 = vlaneseq
    %v845 = vshrl.u32 %v844, 7
    %v846 = vsub.s32 1, %v845
    %v847 = vrot.slane %v710, %v846
    %v848 = vlaneseq
    %v849 = vshrl.u32 %v848, 7
    %v850 = vsub.s32 2, %v849
    %v851 = vrot.slane %v710, %v850
    %855 = vmatprep.subr.bf16.mxu0 %v792
    %856 = vmatpush1.bf16.msra.mxu0 %v791
    %857 = vmatprep.subr.bf16.mxu0 %v795
    %858 = vmatpush1.bf16.msra.mxu0 %v794
    %859 = vmatprep.subr.bf16.mxu0 %v798
    %860 = vmatpush1.bf16.msra.mxu0 %v797
    %861 = vmatprep.subr.bf16.mxu0 %v801
    %862 = vmatpush1.bf16.msra.mxu0 %v800
    %863 = vmatprep.subr.bf16.mxu0 %v804
    %864 = vmatpush1.bf16.msra.mxu0 %v803
    %865 = vmatprep.subr.bf16.mxu0 %v807
    %866 = vmatpush1.bf16.msra.mxu0 %v806
    %867 = vmatprep.subr.bf16.mxu0 %v810
    %868 = vmatpush1.bf16.msra.mxu0 %v809
    %869 = vmatprep.subr.bf16.mxu0 %v813
    %870 = vmatpush1.bf16.msra.mxu0 %v812
    %871 = vmatprep.subr.bf16.mxu0 0
    %872 = vmatpush1.bf16.msra.mxu0 0
    %873 = vmatprep.subr.bf16.mxu0 0
    %874 = vmatpush1.bf16.msra.mxu0 0
    %875 = vmatprep.subr.bf16.mxu0 0
    %876 = vmatpush1.bf16.msra.mxu0 0
    %877 = vmatprep.subr.bf16.mxu0 0
    %878 = vmatpush1.bf16.msra.mxu0 0
    %879 = vmatprep.subr.bf16.mxu0 0
    %880 = vmatpush1.bf16.msra.mxu0 0
    %881 = vmatprep.subr.bf16.mxu0 0
    %882 = vmatpush1.bf16.msra.mxu0 0
    %883 = vmatprep.subr.bf16.mxu0 0
    %884 = vmatpush1.bf16.msra.mxu0 0
    %885 = vmatprep.subr.bf16.mxu0 0
    %886 = vmatpush1.bf16.msra.mxu0 0
    %887 = vmatprep.mubr.bf16.mxu0 0
    %888 = vmatmul.mubr.bf16.gmra.mrb[0].mxu0 %v677
    %v889 = vpop.f32.mrb[0].mxu0
    %v890 = vadd.f32 %v843, %v889
    %v891 = vpop.f32.mrb[0].mxu0
    %v892 = vadd.f32 %v847, %v891
    %v893 = vpop.f32.mrb[0].mxu0
    %v894 = vpop.f32.mrb[0].mxu0
    %895 = vdwg.mxu0
    %896 = vmatprep.subr.bf16.mxu0 0
    %897 = vmatpush1.bf16.msra.mxu0 %v793
    %898 = vmatprep.subr.bf16.mxu0 0
    %899 = vmatpush1.bf16.msra.mxu0 %v796
    %900 = vmatprep.subr.bf16.mxu0 0
    %901 = vmatpush1.bf16.msra.mxu0 %v799
    %902 = vmatprep.subr.bf16.mxu0 0
    %903 = vmatpush1.bf16.msra.mxu0 %v802
    %904 = vmatprep.subr.bf16.mxu0 0
    %905 = vmatpush1.bf16.msra.mxu0 %v805
    %906 = vmatprep.subr.bf16.mxu0 0
    %907 = vmatpush1.bf16.msra.mxu0 %v808
    %908 = vmatprep.subr.bf16.mxu0 0
    %909 = vmatpush1.bf16.msra.mxu0 %v811
    %910 = vmatprep.subr.bf16.mxu0 0
    %911 = vmatpush1.bf16.msra.mxu0 %v814
    %912 = vmatprep.subr.bf16.mxu0 0
    %913 = vmatpush1.bf16.msra.mxu0 0
    %914 = vmatprep.subr.bf16.mxu0 0
    %915 = vmatpush1.bf16.msra.mxu0 0
    %916 = vmatprep.subr.bf16.mxu0 0
    %917 = vmatpush1.bf16.msra.mxu0 0
    %918 = vmatprep.subr.bf16.mxu0 0
    %919 = vmatpush1.bf16.msra.mxu0 0
    %920 = vmatprep.subr.bf16.mxu0 0
    %921 = vmatpush1.bf16.msra.mxu0 0
    %922 = vmatprep.subr.bf16.mxu0 0
    %923 = vmatpush1.bf16.msra.mxu0 0
    %924 = vmatprep.subr.bf16.mxu0 0
    %925 = vmatpush1.bf16.msra.mxu0 0
    %926 = vmatprep.subr.bf16.mxu0 0
    %927 = vmatpush1.bf16.msra.mxu0 0
    %928 = vmatprep.mubr.bf16.mxu0 0
    %929 = vmatmul.mubr.bf16.gmra.mrb[0].mxu0 %v677
    %v930 = vpop.f32.mrb[0].mxu0
    %v931 = vadd.f32 %v851, %v930
    %v932 = vpop.f32.mrb[0].mxu0
    %v933 = vpop.f32.mrb[0].mxu0
    %v934 = vpop.f32.mrb[0].mxu0
    %935 = vdwg.mxu0
    %s936 = scalar_lea.vmem [#allocation3], 1
    %v937 = vld [vmem:[%s936] ss:$8 sm:$0x7]
    %v938 = vadd.f32 %v937, %v890
    %v939 = vxor.u32 %v938, 2147483648
    %v940 = vmul.f32 %v939, 1.442695
    %v941 = vpow.pop %v940
    %v942 = vadd.f32 %v941, 1.0
    %v943 = vrcp.pop %v942
    %v944 = vmul.f32 1.0, %v943
    %v946 = vrot.slane %v937, 1
    %v948 = vadd.f32 %v946, %v892
    %v949 = vxor.u32 %v948, 2147483648
    %v950 = vmul.f32 %v949, 1.442695
    %v951 = vpow.pop %v950
    %v952 = vadd.f32 %v951, 1.0
    %v953 = vrcp.pop %v952
    %v954 = vmul.f32 1.0, %v953
    %v955 = vmul.f32 %v944, %v931
    %v956 = vrot.slane %v937, 2
    %v958 = vadd.f32 %v956, %v955
    %v959 = vtanh.pop %v958
    %v960 = vsub.f32 1.0, %v954
    %v961 = vmul.f32 %v960, %v959
    %v962 = vmul.f32 %v954, %v675
    %v963 = vadd.f32 %v961, %v962
    %964 = vst [vmem:[#allocation2 + $0x1] sm:$0x1] %v963
    %v965 = vpack.c.bf16 %v963, %v963
    %v966 = vld [vmem:[#allocation11] sm:$0xff]
    %v967 = vld [vmem:[#allocation11 + $0x8] sm:$0xf]
    %v968 = vld [vmem:[#allocation11 + $0xc] sm:$0xff]
    %v969 = vld [vmem:[#allocation11 + $0x14] sm:$0xf]
    %v970 = vld [vmem:[#allocation11 + $0x18] sm:$0xff]
    %v971 = vld [vmem:[#allocation11 + $0x20] sm:$0xf]
    %v972 = vld [vmem:[#allocation11 + $0x24] sm:$0xff]
    %v973 = vld [vmem:[#allocation11 + $0x2c] sm:$0xf]
    %v974 = vld [vmem:[#allocation11 + $0x30] sm:$0xff]
    %v975 = vld [vmem:[#allocation11 + $0x38] sm:$0xf]
    %v976 = vld [vmem:[#allocation11 + $0x3c] sm:$0xff]
    %v977 = vld [vmem:[#allocation11 + $0x44] sm:$0xf]
    %v978 = vld [vmem:[#allocation11 + $0x48] sm:$0xff]
    %v979 = vld [vmem:[#allocation11 + $0x50] sm:$0xf]
    %v980 = vld [vmem:[#allocation11 + $0x54] sm:$0xff]
    %v981 = vld [vmem:[#allocation11 + $0x5c] sm:$0xf]
    %v982 = vld [vmem:[#allocation11 + $0x60] sm:$0xff]
    %v983 = vld [vmem:[#allocation11 + $0x68] sm:$0xf]
    %v984 = vld [vmem:[#allocation11 + $0x6c] sm:$0xff]
    %v985 = vld [vmem:[#allocation11 + $0x74] sm:$0xf]
    %v986 = vld [vmem:[#allocation11 + $0x78] sm:$0xff]
    %v987 = vld [vmem:[#allocation11 + $0x80] sm:$0xf]
    %v988 = vld [vmem:[#allocation11 + $0x84] sm:$0xff]
    %v989 = vld [vmem:[#allocation11 + $0x8c] sm:$0xf]
    %v990 = vld [vmem:[#allocation11 + $0x90] sm:$0xff]
    %v991 = vld [vmem:[#allocation11 + $0x98] sm:$0xf]
    %v992 = vld [vmem:[#allocation11 + $0x9c] sm:$0xff]
    %v993 = vld [vmem:[#allocation11 + $0xa4] sm:$0xf]
    %v994 = vld [vmem:[#allocation11 + $0xa8] sm:$0xff]
    %v995 = vld [vmem:[#allocation11 + $0xb0] sm:$0xf]
    %v996 = vld [vmem:[#allocation11 + $0xb4] sm:$0xff]
    %v997 = vld [vmem:[#allocation11 + $0xbc] sm:$0xf]
    %v998 = vld [vmem:[%s5] sm:$0x7]
    %v1031 = vunpack.c.l.b16 %v966
    %v1032 = vunpack.c.h.b16 %v966
    %v1033 = vunpack.c.l.b16 %v967
    %v1034 = vunpack.c.l.b16 %v968
    %v1035 = vunpack.c.h.b16 %v968
    %v1036 = vunpack.c.l.b16 %v969
    %v1037 = vunpack.c.l.b16 %v970
    %v1038 = vunpack.c.h.b16 %v970
    %v1039 = vunpack.c.l.b16 %v971
    %v1040 = vunpack.c.l.b16 %v972
    %v1041 = vunpack.c.h.b16 %v972
    %v1042 = vunpack.c.l.b16 %v973
    %v1043 = vunpack.c.l.b16 %v974
    %v1044 = vunpack.c.h.b16 %v974
    %v1045 = vunpack.c.l.b16 %v975
    %v1046 = vunpack.c.l.b16 %v976
    %v1047 = vunpack.c.h.b16 %v976
    %v1048 = vunpack.c.l.b16 %v977
    %v1049 = vunpack.c.l.b16 %v978
    %v1050 = vunpack.c.h.b16 %v978
    %v1051 = vunpack.c.l.b16 %v979
    %v1052 = vunpack.c.l.b16 %v980
    %v1053 = vunpack.c.h.b16 %v980
    %v1054 = vunpack.c.l.b16 %v981
    %v1055 = vunpack.c.l.b16 %v982
    %v1056 = vunpack.c.h.b16 %v982
    %v1057 = vunpack.c.l.b16 %v983
    %v1058 = vunpack.c.l.b16 %v984
    %v1059 = vunpack.c.h.b16 %v984
    %v1060 = vunpack.c.l.b16 %v985
    %v1061 = vunpack.c.l.b16 %v986
    %v1062 = vunpack.c.h.b16 %v986
    %v1063 = vunpack.c.l.b16 %v987
    %v1064 = vunpack.c.l.b16 %v988
    %v1065 = vunpack.c.h.b16 %v988
    %v1066 = vunpack.c.l.b16 %v989
    %v1067 = vunpack.c.l.b16 %v990
    %v1068 = vunpack.c.h.b16 %v990
    %v1069 = vunpack.c.l.b16 %v991
    %v1070 = vunpack.c.l.b16 %v992
    %v1071 = vunpack.c.h.b16 %v992
    %v1072 = vunpack.c.l.b16 %v993
    %v1073 = vunpack.c.l.b16 %v994
    %v1074 = vunpack.c.h.b16 %v994
    %v1075 = vunpack.c.l.b16 %v995
    %v1076 = vunpack.c.l.b16 %v996
    %v1077 = vunpack.c.h.b16 %v996
    %v1078 = vunpack.c.l.b16 %v997
    %v1079 = vpack.c.b16 %v1034, %v1031
    %v1080 = vpack.c.b16 %v1035, %v1032
    %v1081 = vpack.c.b16 %v1036, %v1033
    %v1082 = vpack.c.b16 %v1040, %v1037
    %v1083 = vpack.c.b16 %v1041, %v1038
    %v1084 = vpack.c.b16 %v1042, %v1039
    %v1085 = vpack.c.b16 %v1046, %v1043
    %v1086 = vpack.c.b16 %v1047, %v1044
    %v1087 = vpack.c.b16 %v1048, %v1045
    %v1088 = vpack.c.b16 %v1052, %v1049
    %v1089 = vpack.c.b16 %v1053, %v1050
    %v1090 = vpack.c.b16 %v1054, %v1051
    %v1091 = vpack.c.b16 %v1058, %v1055
    %v1092 = vpack.c.b16 %v1059, %v1056
    %v1093 = vpack.c.b16 %v1060, %v1057
    %v1094 = vpack.c.b16 %v1064, %v1061
    %v1095 = vpack.c.b16 %v1065, %v1062
    %v1096 = vpack.c.b16 %v1066, %v1063
    %v1097 = vpack.c.b16 %v1070, %v1067
    %v1098 = vpack.c.b16 %v1071, %v1068
    %v1099 = vpack.c.b16 %v1072, %v1069
    %v1100 = vpack.c.b16 %v1076, %v1073
    %v1101 = vpack.c.b16 %v1077, %v1074
    %v1102 = vpack.c.b16 %v1078, %v1075
    %v1128 = vlaneseq
    %v1129 = vshrl.u32 %v1128, 7
    %v1130 = vsub.s32 0, %v1129
    %v1131 = vrot.slane %v998, %v1130
    %v1132 = vlaneseq
    %v1133 = vshrl.u32 %v1132, 7
    %v1134 = vsub.s32 1, %v1133
    %v1135 = vrot.slane %v998, %v1134
    %v1136 = vlaneseq
    %v1137 = vshrl.u32 %v1136, 7
    %v1138 = vsub.s32 2, %v1137
    %v1139 = vrot.slane %v998, %v1138
    %1143 = vmatprep.subr.bf16.mxu0 %v1080
    %1144 = vmatpush1.bf16.msra.mxu0 %v1079
    %1145 = vmatprep.subr.bf16.mxu0 %v1083
    %1146 = vmatpush1.bf16.msra.mxu0 %v1082
    %1147 = vmatprep.subr.bf16.mxu0 %v1086
    %1148 = vmatpush1.bf16.msra.mxu0 %v1085
    %1149 = vmatprep.subr.bf16.mxu0 %v1089
    %1150 = vmatpush1.bf16.msra.mxu0 %v1088
    %1151 = vmatprep.subr.bf16.mxu0 %v1092
    %1152 = vmatpush1.bf16.msra.mxu0 %v1091
    %1153 = vmatprep.subr.bf16.mxu0 %v1095
    %1154 = vmatpush1.bf16.msra.mxu0 %v1094
    %1155 = vmatprep.subr.bf16.mxu0 %v1098
    %1156 = vmatpush1.bf16.msra.mxu0 %v1097
    %1157 = vmatprep.subr.bf16.mxu0 %v1101
    %1158 = vmatpush1.bf16.msra.mxu0 %v1100
    %1159 = vmatprep.subr.bf16.mxu0 0
    %1160 = vmatpush1.bf16.msra.mxu0 0
    %1161 = vmatprep.subr.bf16.mxu0 0
    %1162 = vmatpush1.bf16.msra.mxu0 0
    %1163 = vmatprep.subr.bf16.mxu0 0
    %1164 = vmatpush1.bf16.msra.mxu0 0
    %1165 = vmatprep.subr.bf16.mxu0 0
    %1166 = vmatpush1.bf16.msra.mxu0 0
    %1167 = vmatprep.subr.bf16.mxu0 0
    %1168 = vmatpush1.bf16.msra.mxu0 0
    %1169 = vmatprep.subr.bf16.mxu0 0
    %1170 = vmatpush1.bf16.msra.mxu0 0
    %1171 = vmatprep.subr.bf16.mxu0 0
    %1172 = vmatpush1.bf16.msra.mxu0 0
    %1173 = vmatprep.subr.bf16.mxu0 0
    %1174 = vmatpush1.bf16.msra.mxu0 0
    %1175 = vmatprep.mubr.bf16.mxu0 0
    %1176 = vmatmul.mubr.bf16.gmra.mrb[0].mxu0 %v965
    %v1177 = vpop.f32.mrb[0].mxu0
    %v1178 = vadd.f32 %v1131, %v1177
    %v1179 = vpop.f32.mrb[0].mxu0
    %v1180 = vadd.f32 %v1135, %v1179
    %v1181 = vpop.f32.mrb[0].mxu0
    %v1182 = vpop.f32.mrb[0].mxu0
    %1183 = vdwg.mxu0
    %1184 = vmatprep.subr.bf16.mxu0 0
    %1185 = vmatpush1.bf16.msra.mxu0 %v1081
    %1186 = vmatprep.subr.bf16.mxu0 0
    %1187 = vmatpush1.bf16.msra.mxu0 %v1084
    %1188 = vmatprep.subr.bf16.mxu0 0
    %1189 = vmatpush1.bf16.msra.mxu0 %v1087
    %1190 = vmatprep.subr.bf16.mxu0 0
    %1191 = vmatpush1.bf16.msra.mxu0 %v1090
    %1192 = vmatprep.subr.bf16.mxu0 0
    %1193 = vmatpush1.bf16.msra.mxu0 %v1093
    %1194 = vmatprep.subr.bf16.mxu0 0
    %1195 = vmatpush1.bf16.msra.mxu0 %v1096
    %1196 = vmatprep.subr.bf16.mxu0 0
    %1197 = vmatpush1.bf16.msra.mxu0 %v1099
    %1198 = vmatprep.subr.bf16.mxu0 0
    %1199 = vmatpush1.bf16.msra.mxu0 %v1102
    %1200 = vmatprep.subr.bf16.mxu0 0
    %1201 = vmatpush1.bf16.msra.mxu0 0
    %1202 = vmatprep.subr.bf16.mxu0 0
    %1203 = vmatpush1.bf16.msra.mxu0 0
    %1204 = vmatprep.subr.bf16.mxu0 0
    %1205 = vmatpush1.bf16.msra.mxu0 0
    %1206 = vmatprep.subr.bf16.mxu0 0
    %1207 = vmatpush1.bf16.msra.mxu0 0
    %1208 = vmatprep.subr.bf16.mxu0 0
    %1209 = vmatpush1.bf16.msra.mxu0 0
    %1210 = vmatprep.subr.bf16.mxu0 0
    %1211 = vmatpush1.bf16.msra.mxu0 0
    %1212 = vmatprep.subr.bf16.mxu0 0
    %1213 = vmatpush1.bf16.msra.mxu0 0
    %1214 = vmatprep.subr.bf16.mxu0 0
    %1215 = vmatpush1.bf16.msra.mxu0 0
    %1216 = vmatprep.mubr.bf16.mxu0 0
    %1217 = vmatmul.mubr.bf16.gmra.mrb[0].mxu0 %v965
    %v1218 = vpop.f32.mrb[0].mxu0
    %v1219 = vadd.f32 %v1139, %v1218
    %v1220 = vpop.f32.mrb[0].mxu0
    %v1221 = vpop.f32.mrb[0].mxu0
    %v1222 = vpop.f32.mrb[0].mxu0
    %1223 = vdwg.mxu0
    %s1224 = scalar_lea.vmem [#allocation3], 2
    %v1225 = vld [vmem:[%s1224] ss:$8 sm:$0x7]
    %v1226 = vadd.f32 %v1225, %v1178
    %v1227 = vxor.u32 %v1226, 2147483648
    %v1228 = vmul.f32 %v1227, 1.442695
    %v1229 = vpow.pop %v1228
    %v1230 = vadd.f32 %v1229, 1.0
    %v1231 = vrcp.pop %v1230
    %v1232 = vmul.f32 1.0, %v1231
    %v1234 = vrot.slane %v1225, 1
    %v1236 = vadd.f32 %v1234, %v1180
    %v1237 = vxor.u32 %v1236, 2147483648
    %v1238 = vmul.f32 %v1237, 1.442695
    %v1239 = vpow.pop %v1238
    %v1240 = vadd.f32 %v1239, 1.0
    %v1241 = vrcp.pop %v1240
    %v1242 = vmul.f32 1.0, %v1241
    %v1243 = vmul.f32 %v1232, %v1219
    %v1244 = vrot.slane %v1225, 2
    %v1246 = vadd.f32 %v1244, %v1243
    %v1247 = vtanh.pop %v1246
    %v1248 = vsub.f32 1.0, %v1242
    %v1249 = vmul.f32 %v1248, %v1247
    %v1250 = vmul.f32 %v1242, %v963
    %v1251 = vadd.f32 %v1249, %v1250
    %1252 = vst [vmem:[#allocation2 + $0x2] sm:$0x1] %v1251
    %v1253 = vpack.c.bf16 %v1251, %v1251
    %v1254 = vld [vmem:[#allocation11] sm:$0xff]
    %v1255 = vld [vmem:[#allocation11 + $0x8] sm:$0xf]
    %v1256 = vld [vmem:[#allocation11 + $0xc] sm:$0xff]
    %v1257 = vld [vmem:[#allocation11 + $0x14] sm:$0xf]
    %v1258 = vld [vmem:[#allocation11 + $0x18] sm:$0xff]
    %v1259 = vld [vmem:[#allocation11 + $0x20] sm:$0xf]
    %v1260 = vld [vmem:[#allocation11 + $0x24] sm:$0xff]
    %v1261 = vld [vmem:[#allocation11 + $0x2c] sm:$0xf]
    %v1262 = vld [vmem:[#allocation11 + $0x30] sm:$0xff]
    %v1263 = vld [vmem:[#allocation11 + $0x38] sm:$0xf]
    %v1264 = vld [vmem:[#allocation11 + $0x3c] sm:$0xff]
    %v1265 = vld [vmem:[#allocation11 + $0x44] sm:$0xf]
    %v1266 = vld [vmem:[#allocation11 + $0x48] sm:$0xff]
    %v1267 = vld [vmem:[#allocation11 + $0x50] sm:$0xf]
    %v1268 = vld [vmem:[#allocation11 + $0x54] sm:$0xff]
    %v1269 = vld [vmem:[#allocation11 + $0x5c] sm:$0xf]
    %v1270 = vld [vmem:[#allocation11 + $0x60] sm:$0xff]
    %v1271 = vld [vmem:[#allocation11 + $0x68] sm:$0xf]
    %v1272 = vld [vmem:[#allocation11 + $0x6c] sm:$0xff]
    %v1273 = vld [vmem:[#allocation11 + $0x74] sm:$0xf]
    %v1274 = vld [vmem:[#allocation11 + $0x78] sm:$0xff]
    %v1275 = vld [vmem:[#allocation11 + $0x80] sm:$0xf]
    %v1276 = vld [vmem:[#allocation11 + $0x84] sm:$0xff]
    %v1277 = vld [vmem:[#allocation11 + $0x8c] sm:$0xf]
    %v1278 = vld [vmem:[#allocation11 + $0x90] sm:$0xff]
    %v1279 = vld [vmem:[#allocation11 + $0x98] sm:$0xf]
    %v1280 = vld [vmem:[#allocation11 + $0x9c] sm:$0xff]
    %v1281 = vld [vmem:[#allocation11 + $0xa4] sm:$0xf]
    %v1282 = vld [vmem:[#allocation11 + $0xa8] sm:$0xff]
    %v1283 = vld [vmem:[#allocation11 + $0xb0] sm:$0xf]
    %v1284 = vld [vmem:[#allocation11 + $0xb4] sm:$0xff]
    %v1285 = vld [vmem:[#allocation11 + $0xbc] sm:$0xf]
    %v1286 = vld [vmem:[%s5] sm:$0x7]
    %v1319 = vunpack.c.l.b16 %v1254
    %v1320 = vunpack.c.h.b16 %v1254
    %v1321 = vunpack.c.l.b16 %v1255
    %v1322 = vunpack.c.l.b16 %v1256
    %v1323 = vunpack.c.h.b16 %v1256
    %v1324 = vunpack.c.l.b16 %v1257
    %v1325 = vunpack.c.l.b16 %v1258
    %v1326 = vunpack.c.h.b16 %v1258
    %v1327 = vunpack.c.l.b16 %v1259
    %v1328 = vunpack.c.l.b16 %v1260
    %v1329 = vunpack.c.h.b16 %v1260
    %v1330 = vunpack.c.l.b16 %v1261
    %v1331 = vunpack.c.l.b16 %v1262
    %v1332 = vunpack.c.h.b16 %v1262
    %v1333 = vunpack.c.l.b16 %v1263
    %v1334 = vunpack.c.l.b16 %v1264
    %v1335 = vunpack.c.h.b16 %v1264
    %v1336 = vunpack.c.l.b16 %v1265
    %v1337 = vunpack.c.l.b16 %v1266
    %v1338 = vunpack.c.h.b16 %v1266
    %v1339 = vunpack.c.l.b16 %v1267
    %v1340 = vunpack.c.l.b16 %v1268
    %v1341 = vunpack.c.h.b16 %v1268
    %v1342 = vunpack.c.l.b16 %v1269
    %v1343 = vunpack.c.l.b16 %v1270
    %v1344 = vunpack.c.h.b16 %v1270
    %v1345 = vunpack.c.l.b16 %v1271
    %v1346 = vunpack.c.l.b16 %v1272
    %v1347 = vunpack.c.h.b16 %v1272
    %v1348 = vunpack.c.l.b16 %v1273
    %v1349 = vunpack.c.l.b16 %v1274
    %v1350 = vunpack.c.h.b16 %v1274
    %v1351 = vunpack.c.l.b16 %v1275
    %v1352 = vunpack.c.l.b16 %v1276
    %v1353 = vunpack.c.h.b16 %v1276
    %v1354 = vunpack.c.l.b16 %v1277
    %v1355 = vunpack.c.l.b16 %v1278
    %v1356 = vunpack.c.h.b16 %v1278
    %v1357 = vunpack.c.l.b16 %v1279
    %v1358 = vunpack.c.l.b16 %v1280
    %v1359 = vunpack.c.h.b16 %v1280
    %v1360 = vunpack.c.l.b16 %v1281
    %v1361 = vunpack.c.l.b16 %v1282
    %v1362 = vunpack.c.h.b16 %v1282
    %v1363 = vunpack.c.l.b16 %v1283
    %v1364 = vunpack.c.l.b16 %v1284
    %v1365 = vunpack.c.h.b16 %v1284
    %v1366 = vunpack.c.l.b16 %v1285
    %v1367 = vpack.c.b16 %v1322, %v1319
    %v1368 = vpack.c.b16 %v1323, %v1320
    %v1369 = vpack.c.b16 %v1324, %v1321
    %v1370 = vpack.c.b16 %v1328, %v1325
    %v1371 = vpack.c.b16 %v1329, %v1326
    %v1372 = vpack.c.b16 %v1330, %v1327
    %v1373 = vpack.c.b16 %v1334, %v1331
    %v1374 = vpack.c.b16 %v1335, %v1332
    %v1375 = vpack.c.b16 %v1336, %v1333
    %v1376 = vpack.c.b16 %v1340, %v1337
    %v1377 = vpack.c.b16 %v1341, %v1338
    %v1378 = vpack.c.b16 %v1342, %v1339
    %v1379 = vpack.c.b16 %v1346, %v1343
    %v1380 = vpack.c.b16 %v1347, %v1344
    %v1381 = vpack.c.b16 %v1348, %v1345
    %v1382 = vpack.c.b16 %v1352, %v1349
    %v1383 = vpack.c.b16 %v1353, %v1350
    %v1384 = vpack.c.b16 %v1354, %v1351
    %v1385 = vpack.c.b16 %v1358, %v1355
    %v1386 = vpack.c.b16 %v1359, %v1356
    %v1387 = vpack.c.b16 %v1360, %v1357
    %v1388 = vpack.c.b16 %v1364, %v1361
    %v1389 = vpack.c.b16 %v1365, %v1362
    %v1390 = vpack.c.b16 %v1366, %v1363
    %v1416 = vlaneseq
    %v1417 = vshrl.u32 %v1416, 7
    %v1418 = vsub.s32 0, %v1417
    %v1419 = vrot.slane %v1286, %v1418
    %v1420 = vlaneseq
    %v1421 = vshrl.u32 %v1420, 7
    %v1422 = vsub.s32 1, %v1421
    %v1423 = vrot.slane %v1286, %v1422
    %v1424 = vlaneseq
    %v1425 = vshrl.u32 %v1424, 7
    %v1426 = vsub.s32 2, %v1425
    %v1427 = vrot.slane %v1286, %v1426
    %1431 = vmatprep.subr.bf16.mxu0 %v1368
    %1432 = vmatpush1.bf16.msra.mxu0 %v1367
    %1433 = vmatprep.subr.bf16.mxu0 %v1371
    %1434 = vmatpush1.bf16.msra.mxu0 %v1370
    %1435 = vmatprep.subr.bf16.mxu0 %v1374
    %1436 = vmatpush1.bf16.msra.mxu0 %v1373
    %1437 = vmatprep.subr.bf16.mxu0 %v1377
    %1438 = vmatpush1.bf16.msra.mxu0 %v1376
    %1439 = vmatprep.subr.bf16.mxu0 %v1380
    %1440 = vmatpush1.bf16.msra.mxu0 %v1379
    %1441 = vmatprep.subr.bf16.mxu0 %v1383
    %1442 = vmatpush1.bf16.msra.mxu0 %v1382
    %1443 = vmatprep.subr.bf16.mxu0 %v1386
    %1444 = vmatpush1.bf16.msra.mxu0 %v1385
    %1445 = vmatprep.subr.bf16.mxu0 %v1389
    %1446 = vmatpush1.bf16.msra.mxu0 %v1388
    %1447 = vmatprep.subr.bf16.mxu0 0
    %1448 = vmatpush1.bf16.msra.mxu0 0
    %1449 = vmatprep.subr.bf16.mxu0 0
    %1450 = vmatpush1.bf16.msra.mxu0 0
    %1451 = vmatprep.subr.bf16.mxu0 0
    %1452 = vmatpush1.bf16.msra.mxu0 0
    %1453 = vmatprep.subr.bf16.mxu0 0
    %1454 = vmatpush1.bf16.msra.mxu0 0
    %1455 = vmatprep.subr.bf16.mxu0 0
    %1456 = vmatpush1.bf16.msra.mxu0 0
    %1457 = vmatprep.subr.bf16.mxu0 0
    %1458 = vmatpush1.bf16.msra.mxu0 0
    %1459 = vmatprep.subr.bf16.mxu0 0
    %1460 = vmatpush1.bf16.msra.mxu0 0
    %1461 = vmatprep.subr.bf16.mxu0 0
    %1462 = vmatpush1.bf16.msra.mxu0 0
    %1463 = vmatprep.mubr.bf16.mxu0 0
    %1464 = vmatmul.mubr.bf16.gmra.mrb[0].mxu0 %v1253
    %v1465 = vpop.f32.mrb[0].mxu0
    %v1466 = vadd.f32 %v1419, %v1465
    %v1467 = vpop.f32.mrb[0].mxu0
    %v1468 = vadd.f32 %v1423, %v1467
    %v1469 = vpop.f32.mrb[0].mxu0
    %v1470 = vpop.f32.mrb[0].mxu0
    %1471 = vdwg.mxu0
    %1472 = vmatprep.subr.bf16.mxu0 0
    %1473 = vmatpush1.bf16.msra.mxu0 %v1369
    %1474 = vmatprep.subr.bf16.mxu0 0
    %1475 = vmatpush1.bf16.msra.mxu0 %v1372
    %1476 = vmatprep.subr.bf16.mxu0 0
    %1477 = vmatpush1.bf16.msra.mxu0 %v1375
    %1478 = vmatprep.subr.bf16.mxu0 0
    %1479 = vmatpush1.bf16.msra.mxu0 %v1378
    %1480 = vmatprep.subr.bf16.mxu0 0
    %1481 = vmatpush1.bf16.msra.mxu0 %v1381
    %1482 = vmatprep.subr.bf16.mxu0 0
    %1483 = vmatpush1.bf16.msra.mxu0 %v1384
    %1484 = vmatprep.subr.bf16.mxu0 0
    %1485 = vmatpush1.bf16.msra.mxu0 %v1387
    %1486 = vmatprep.subr.bf16.mxu0 0
    %1487 = vmatpush1.bf16.msra.mxu0 %v1390
    %1488 = vmatprep.subr.bf16.mxu0 0
    %1489 = vmatpush1.bf16.msra.mxu0 0
    %1490 = vmatprep.subr.bf16.mxu0 0
    %1491 = vmatpush1.bf16.msra.mxu0 0
    %1492 = vmatprep.subr.bf16.mxu0 0
    %1493 = vmatpush1.bf16.msra.mxu0 0
    %1494 = vmatprep.subr.bf16.mxu0 0
    %1495 = vmatpush1.bf16.msra.mxu0 0
    %1496 = vmatprep.subr.bf16.mxu0 0
    %1497 = vmatpush1.bf16.msra.mxu0 0
    %1498 = vmatprep.subr.bf16.mxu0 0
    %1499 = vmatpush1.bf16.msra.mxu0 0
    %1500 = vmatprep.subr.bf16.mxu0 0
    %1501 = vmatpush1.bf16.msra.mxu0 0
    %1502 = vmatprep.subr.bf16.mxu0 0
    %1503 = vmatpush1.bf16.msra.mxu0 0
    %1504 = vmatprep.mubr.bf16.mxu0 0
    %1505 = vmatmul.mubr.bf16.gmra.mrb[0].mxu0 %v1253
    %v1506 = vpop.f32.mrb[0].mxu0
    %v1507 = vadd.f32 %v1427, %v1506
    %v1508 = vpop.f32.mrb[0].mxu0
    %v1509 = vpop.f32.mrb[0].mxu0
    %v1510 = vpop.f32.mrb[0].mxu0
    %1511 = vdwg.mxu0
    %s1512 = scalar_lea.vmem [#allocation3], 3
    %v1513 = vld [vmem:[%s1512] ss:$8 sm:$0x7]
    %v1514 = vadd.f32 %v1513, %v1466
    %v1515 = vxor.u32 %v1514, 2147483648
    %v1516 = vmul.f32 %v1515, 1.442695
    %v1517 = vpow.pop %v1516
    %v1518 = vadd.f32 %v1517, 1.0
    %v1519 = vrcp.pop %v1518
    %v1520 = vmul.f32 1.0, %v1519
    %v1522 = vrot.slane %v1513, 1
    %v1524 = vadd.f32 %v1522, %v1468
    %v1525 = vxor.u32 %v1524, 2147483648
    %v1526 = vmul.f32 %v1525, 1.442695
    %v1527 = vpow.pop %v1526
    %v1528 = vadd.f32 %v1527, 1.0
    %v1529 = vrcp.pop %v1528
    %v1530 = vmul.f32 1.0, %v1529
    %v1531 = vmul.f32 %v1520, %v1507
    %v1532 = vrot.slane %v1513, 2
    %v1534 = vadd.f32 %v1532, %v1531
    %v1535 = vtanh.pop %v1534
    %v1536 = vsub.f32 1.0, %v1530
    %v1537 = vmul.f32 %v1536, %v1535
    %v1538 = vmul.f32 %v1530, %v1251
    %v1539 = vadd.f32 %v1537, %v1538
    %1540 = vst [vmem:[#allocation2 + $0x3] sm:$0x1] %v1539
    %v1541 = vpack.c.bf16 %v1539, %v1539
    %v1542 = vld [vmem:[#allocation11] sm:$0xff]
    %v1543 = vld [vmem:[#allocation11 + $0x8] sm:$0xf]
    %v1544 = vld [vmem:[#allocation11 + $0xc] sm:$0xff]
    %v1545 = vld [vmem:[#allocation11 + $0x14] sm:$0xf]
    %v1546 = vld [vmem:[#allocation11 + $0x18] sm:$0xff]
    %v1547 = vld [vmem:[#allocation11 + $0x20] sm:$0xf]
    %v1548 = vld [vmem:[#allocation11 + $0x24] sm:$0xff]
    %v1549 = vld [vmem:[#allocation11 + $0x2c] sm:$0xf]
    %v1550 = vld [vmem:[#allocation11 + $0x30] sm:$0xff]
    %v1551 = vld [vmem:[#allocation11 + $0x38] sm:$0xf]
    %v1552 = vld [vmem:[#allocation11 + $0x3c] sm:$0xff]
    %v1553 = vld [vmem:[#allocation11 + $0x44] sm:$0xf]
    %v1554 = vld [vmem:[#allocation11 + $0x48] sm:$0xff]
    %v1555 = vld [vmem:[#allocation11 + $0x50] sm:$0xf]
    %v1556 = vld [vmem:[#allocation11 + $0x54] sm:$0xff]
    %v1557 = vld [vmem:[#allocation11 + $0x5c] sm:$0xf]
    %v1558 = vld [vmem:[#allocation11 + $0x60] sm:$0xff]
    %v1559 = vld [vmem:[#allocation11 + $0x68] sm:$0xf]
    %v1560 = vld [vmem:[#allocation11 + $0x6c] sm:$0xff]
    %v1561 = vld [vmem:[#allocation11 + $0x74] sm:$0xf]
    %v1562 = vld [vmem:[#allocation11 + $0x78] sm:$0xff]
    %v1563 = vld [vmem:[#allocation11 + $0x80] sm:$0xf]
    %v1564 = vld [vmem:[#allocation11 + $0x84] sm:$0xff]
    %v1565 = vld [vmem:[#allocation11 + $0x8c] sm:$0xf]
    %v1566 = vld [vmem:[#allocation11 + $0x90] sm:$0xff]
    %v1567 = vld [vmem:[#allocation11 + $0x98] sm:$0xf]
    %v1568 = vld [vmem:[#allocation11 + $0x9c] sm:$0xff]
    %v1569 = vld [vmem:[#allocation11 + $0xa4] sm:$0xf]
    %v1570 = vld [vmem:[#allocation11 + $0xa8] sm:$0xff]
    %v1571 = vld [vmem:[#allocation11 + $0xb0] sm:$0xf]
    %v1572 = vld [vmem:[#allocation11 + $0xb4] sm:$0xff]
    %v1573 = vld [vmem:[#allocation11 + $0xbc] sm:$0xf]
    %v1574 = vld [vmem:[%s5] sm:$0x7]
    %v1607 = vunpack.c.l.b16 %v1542
    %v1608 = vunpack.c.h.b16 %v1542
    %v1609 = vunpack.c.l.b16 %v1543
    %v1610 = vunpack.c.l.b16 %v1544
    %v1611 = vunpack.c.h.b16 %v1544
    %v1612 = vunpack.c.l.b16 %v1545
    %v1613 = vunpack.c.l.b16 %v1546
    %v1614 = vunpack.c.h.b16 %v1546
    %v1615 = vunpack.c.l.b16 %v1547
    %v1616 = vunpack.c.l.b16 %v1548
    %v1617 = vunpack.c.h.b16 %v1548
    %v1618 = vunpack.c.l.b16 %v1549
    %v1619 = vunpack.c.l.b16 %v1550
    %v1620 = vunpack.c.h.b16 %v1550
    %v1621 = vunpack.c.l.b16 %v1551
    %v1622 = vunpack.c.l.b16 %v1552
    %v1623 = vunpack.c.h.b16 %v1552
    %v1624 = vunpack.c.l.b16 %v1553
    %v1625 = vunpack.c.l.b16 %v1554
    %v1626 = vunpack.c.h.b16 %v1554
    %v1627 = vunpack.c.l.b16 %v1555
    %v1628 = vunpack.c.l.b16 %v1556
    %v1629 = vunpack.c.h.b16 %v1556
    %v1630 = vunpack.c.l.b16 %v1557
    %v1631 = vunpack.c.l.b16 %v1558
    %v1632 = vunpack.c.h.b16 %v1558
    %v1633 = vunpack.c.l.b16 %v1559
    %v1634 = vunpack.c.l.b16 %v1560
    %v1635 = vunpack.c.h.b16 %v1560
    %v1636 = vunpack.c.l.b16 %v1561
    %v1637 = vunpack.c.l.b16 %v1562
    %v1638 = vunpack.c.h.b16 %v1562
    %v1639 = vunpack.c.l.b16 %v1563
    %v1640 = vunpack.c.l.b16 %v1564
    %v1641 = vunpack.c.h.b16 %v1564
    %v1642 = vunpack.c.l.b16 %v1565
    %v1643 = vunpack.c.l.b16 %v1566
    %v1644 = vunpack.c.h.b16 %v1566
    %v1645 = vunpack.c.l.b16 %v1567
    %v1646 = vunpack.c.l.b16 %v1568
    %v1647 = vunpack.c.h.b16 %v1568
    %v1648 = vunpack.c.l.b16 %v1569
    %v1649 = vunpack.c.l.b16 %v1570
    %v1650 = vunpack.c.h.b16 %v1570
    %v1651 = vunpack.c.l.b16 %v1571
    %v1652 = vunpack.c.l.b16 %v1572
    %v1653 = vunpack.c.h.b16 %v1572
    %v1654 = vunpack.c.l.b16 %v1573
    %v1655 = vpack.c.b16 %v1610, %v1607
    %v1656 = vpack.c.b16 %v1611, %v1608
    %v1657 = vpack.c.b16 %v1612, %v1609
    %v1658 = vpack.c.b16 %v1616, %v1613
    %v1659 = vpack.c.b16 %v1617, %v1614
    %v1660 = vpack.c.b16 %v1618, %v1615
    %v1661 = vpack.c.b16 %v1622, %v1619
    %v1662 = vpack.c.b16 %v1623, %v1620
    %v1663 = vpack.c.b16 %v1624, %v1621
    %v1664 = vpack.c.b16 %v1628, %v1625
    %v1665 = vpack.c.b16 %v1629, %v1626
    %v1666 = vpack.c.b16 %v1630, %v1627
    %v1667 = vpack.c.b16 %v1634, %v1631
    %v1668 = vpack.c.b16 %v1635, %v1632
    %v1669 = vpack.c.b16 %v1636, %v1633
    %v1670 = vpack.c.b16 %v1640, %v1637
    %v1671 = vpack.c.b16 %v1641, %v1638
    %v1672 = vpack.c.b16 %v1642, %v1639
    %v1673 = vpack.c.b16 %v1646, %v1643
    %v1674 = vpack.c.b16 %v1647, %v1644
    %v1675 = vpack.c.b16 %v1648, %v1645
    %v1676 = vpack.c.b16 %v1652, %v1649
    %v1677 = vpack.c.b16 %v1653, %v1650
    %v1678 = vpack.c.b16 %v1654, %v1651
    %v1704 = vlaneseq
    %v1705 = vshrl.u32 %v1704, 7
    %v1706 = vsub.s32 0, %v1705
    %v1707 = vrot.slane %v1574, %v1706
    %v1708 = vlaneseq
    %v1709 = vshrl.u32 %v1708, 7
    %v1710 = vsub.s32 1, %v1709
    %v1711 = vrot.slane %v1574, %v1710
    %v1712 = vlaneseq
    %v1713 = vshrl.u32 %v1712, 7
    %v1714 = vsub.s32 2, %v1713
    %v1715 = vrot.slane %v1574, %v1714
    %1719 = vmatprep.subr.bf16.mxu0 %v1656
    %1720 = vmatpush1.bf16.msra.mxu0 %v1655
    %1721 = vmatprep.subr.bf16.mxu0 %v1659
    %1722 = vmatpush1.bf16.msra.mxu0 %v1658
    %1723 = vmatprep.subr.bf16.mxu0 %v1662
    %1724 = vmatpush1.bf16.msra.mxu0 %v1661
    %1725 = vmatprep.subr.bf16.mxu0 %v1665
    %1726 = vmatpush1.bf16.msra.mxu0 %v1664
    %1727 = vmatprep.subr.bf16.mxu0 %v1668
    %1728 = vmatpush1.bf16.msra.mxu0 %v1667
    %1729 = vmatprep.subr.bf16.mxu0 %v1671
    %1730 = vmatpush1.bf16.msra.mxu0 %v1670
    %1731 = vmatprep.subr.bf16.mxu0 %v1674
    %1732 = vmatpush1.bf16.msra.mxu0 %v1673
    %1733 = vmatprep.subr.bf16.mxu0 %v1677
    %1734 = vmatpush1.bf16.msra.mxu0 %v1676
    %1735 = vmatprep.subr.bf16.mxu0 0
    %1736 = vmatpush1.bf16.msra.mxu0 0
    %1737 = vmatprep.subr.bf16.mxu0 0
    %1738 = vmatpush1.bf16.msra.mxu0 0
    %1739 = vmatprep.subr.bf16.mxu0 0
    %1740 = vmatpush1.bf16.msra.mxu0 0
    %1741 = vmatprep.subr.bf16.mxu0 0
    %1742 = vmatpush1.bf16.msra.mxu0 0
    %1743 = vmatprep.subr.bf16.mxu0 0
    %1744 = vmatpush1.bf16.msra.mxu0 0
    %1745 = vmatprep.subr.bf16.mxu0 0
    %1746 = vmatpush1.bf16.msra.mxu0 0
    %1747 = vmatprep.subr.bf16.mxu0 0
    %1748 = vmatpush1.bf16.msra.mxu0 0
    %1749 = vmatprep.subr.bf16.mxu0 0
    %1750 = vmatpush1.bf16.msra.mxu0 0
    %1751 = vmatprep.mubr.bf16.mxu0 0
    %1752 = vmatmul.mubr.bf16.gmra.mrb[0].mxu0 %v1541
    %v1753 = vpop.f32.mrb[0].mxu0
    %v1754 = vadd.f32 %v1707, %v1753
    %v1755 = vpop.f32.mrb[0].mxu0
    %v1756 = vadd.f32 %v1711, %v1755
    %v1757 = vpop.f32.mrb[0].mxu0
    %v1758 = vpop.f32.mrb[0].mxu0
    %1759 = vdwg.mxu0
    %1760 = vmatprep.subr.bf16.mxu0 0
    %1761 = vmatpush1.bf16.msra.mxu0 %v1657
    %1762 = vmatprep.subr.bf16.mxu0 0
    %1763 = vmatpush1.bf16.msra.mxu0 %v1660
    %1764 = vmatprep.subr.bf16.mxu0 0
    %1765 = vmatpush1.bf16.msra.mxu0 %v1663
    %1766 = vmatprep.subr.bf16.mxu0 0
    %1767 = vmatpush1.bf16.msra.mxu0 %v1666
    %1768 = vmatprep.subr.bf16.mxu0 0
    %1769 = vmatpush1.bf16.msra.mxu0 %v1669
    %1770 = vmatprep.subr.bf16.mxu0 0
    %1771 = vmatpush1.bf16.msra.mxu0 %v1672
    %1772 = vmatprep.subr.bf16.mxu0 0
    %1773 = vmatpush1.bf16.msra.mxu0 %v1675
    %1774 = vmatprep.subr.bf16.mxu0 0
    %1775 = vmatpush1.bf16.msra.mxu0 %v1678
    %1776 = vmatprep.subr.bf16.mxu0 0
    %1777 = vmatpush1.bf16.msra.mxu0 0
    %1778 = vmatprep.subr.bf16.mxu0 0
    %1779 = vmatpush1.bf16.msra.mxu0 0
    %1780 = vmatprep.subr.bf16.mxu0 0
    %1781 = vmatpush1.bf16.msra.mxu0 0
    %1782 = vmatprep.subr.bf16.mxu0 0
    %1783 = vmatpush1.bf16.msra.mxu0 0
    %1784 = vmatprep.subr.bf16.mxu0 0
    %1785 = vmatpush1.bf16.msra.mxu0 0
    %1786 = vmatprep.subr.bf16.mxu0 0
    %1787 = vmatpush1.bf16.msra.mxu0 0
    %1788 = vmatprep.subr.bf16.mxu0 0
    %1789 = vmatpush1.bf16.msra.mxu0 0
    %1790 = vmatprep.subr.bf16.mxu0 0
    %1791 = vmatpush1.bf16.msra.mxu0 0
    %1792 = vmatprep.mubr.bf16.mxu0 0
    %1793 = vmatmul.mubr.bf16.gmra.mrb[0].mxu0 %v1541
    %v1794 = vpop.f32.mrb[0].mxu0
    %v1795 = vadd.f32 %v1715, %v1794
    %v1796 = vpop.f32.mrb[0].mxu0
    %v1797 = vpop.f32.mrb[0].mxu0
    %v1798 = vpop.f32.mrb[0].mxu0
    %1799 = vdwg.mxu0
    %s1800 = scalar_lea.vmem [#allocation3], 4
    %v1801 = vld [vmem:[%s1800] ss:$8 sm:$0x7]
    %v1802 = vadd.f32 %v1801, %v1754
    %v1803 = vxor.u32 %v1802, 2147483648
    %v1804 = vmul.f32 %v1803, 1.442695
    %v1805 = vpow.pop %v1804
    %v1806 = vadd.f32 %v1805, 1.0
    %v1807 = vrcp.pop %v1806
    %v1808 = vmul.f32 1.0, %v1807
    %v1810 = vrot.slane %v1801, 1
    %v1812 = vadd.f32 %v1810, %v1756
    %v1813 = vxor.u32 %v1812, 2147483648
    %v1814 = vmul.f32 %v1813, 1.442695
    %v1815 = vpow.pop %v1814
    %v1816 = vadd.f32 %v1815, 1.0
    %v1817 = vrcp.pop %v1816
    %v1818 = vmul.f32 1.0, %v1817
    %v1819 = vmul.f32 %v1808, %v1795
    %v1820 = vrot.slane %v1801, 2
    %v1822 = vadd.f32 %v1820, %v1819
    %v1823 = vtanh.pop %v1822
    %v1824 = vsub.f32 1.0, %v1818
    %v1825 = vmul.f32 %v1824, %v1823
    %v1826 = vmul.f32 %v1818, %v1539
    %v1827 = vadd.f32 %v1825, %v1826
    %1828 = vst [vmem:[#allocation2 + $0x4] sm:$0x1] %v1827
    %v1829 = vpack.c.bf16 %v1827, %v1827
    %v1830 = vld [vmem:[#allocation11] sm:$0xff]
    %v1831 = vld [vmem:[#allocation11 + $0x8] sm:$0xf]
    %v1832 = vld [vmem:[#allocation11 + $0xc] sm:$0xff]
    %v1833 = vld [vmem:[#allocation11 + $0x14] sm:$0xf]
    %v1834 = vld [vmem:[#allocation11 + $0x18] sm:$0xff]
    %v1835 = vld [vmem:[#allocation11 + $0x20] sm:$0xf]
    %v1836 = vld [vmem:[#allocation11 + $0x24] sm:$0xff]
    %v1837 = vld [vmem:[#allocation11 + $0x2c] sm:$0xf]
    %v1838 = vld [vmem:[#allocation11 + $0x30] sm:$0xff]
    %v1839 = vld [vmem:[#allocation11 + $0x38] sm:$0xf]
    %v1840 = vld [vmem:[#allocation11 + $0x3c] sm:$0xff]
    %v1841 = vld [vmem:[#allocation11 + $0x44] sm:$0xf]
    %v1842 = vld [vmem:[#allocation11 + $0x48] sm:$0xff]
    %v1843 = vld [vmem:[#allocation11 + $0x50] sm:$0xf]
    %v1844 = vld [vmem:[#allocation11 + $0x54] sm:$0xff]
    %v1845 = vld [vmem:[#allocation11 + $0x5c] sm:$0xf]
    %v1846 = vld [vmem:[#allocation11 + $0x60] sm:$0xff]
    %v1847 = vld [vmem:[#allocation11 + $0x68] sm:$0xf]
    %v1848 = vld [vmem:[#allocation11 + $0x6c] sm:$0xff]
    %v1849 = vld [vmem:[#allocation11 + $0x74] sm:$0xf]
    %v1850 = vld [vmem:[#allocation11 + $0x78] sm:$0xff]
    %v1851 = vld [vmem:[#allocation11 + $0x80] sm:$0xf]
    %v1852 = vld [vmem:[#allocation11 + $0x84] sm:$0xff]
    %v1853 = vld [vmem:[#allocation11 + $0x8c] sm:$0xf]
    %v1854 = vld [vmem:[#allocation11 + $0x90] sm:$0xff]
    %v1855 = vld [vmem:[#allocation11 + $0x98] sm:$0xf]
    %v1856 = vld [vmem:[#allocation11 + $0x9c] sm:$0xff]
    %v1857 = vld [vmem:[#allocation11 + $0xa4] sm:$0xf]
    %v1858 = vld [vmem:[#allocation11 + $0xa8] sm:$0xff]
    %v1859 = vld [vmem:[#allocation11 + $0xb0] sm:$0xf]
    %v1860 = vld [vmem:[#allocation11 + $0xb4] sm:$0xff]
    %v1861 = vld [vmem:[#allocation11 + $0xbc] sm:$0xf]
    %v1862 = vld [vmem:[%s5] sm:$0x7]
    %v1895 = vunpack.c.l.b16 %v1830
    %v1896 = vunpack.c.h.b16 %v1830
    %v1897 = vunpack.c.l.b16 %v1831
    %v1898 = vunpack.c.l.b16 %v1832
    %v1899 = vunpack.c.h.b16 %v1832
    %v1900 = vunpack.c.l.b16 %v1833
    %v1901 = vunpack.c.l.b16 %v1834
    %v1902 = vunpack.c.h.b16 %v1834
    %v1903 = vunpack.c.l.b16 %v1835
    %v1904 = vunpack.c.l.b16 %v1836
    %v1905 = vunpack.c.h.b16 %v1836
    %v1906 = vunpack.c.l.b16 %v1837
    %v1907 = vunpack.c.l.b16 %v1838
    %v1908 = vunpack.c.h.b16 %v1838
    %v1909 = vunpack.c.l.b16 %v1839
    %v1910 = vunpack.c.l.b16 %v1840
    %v1911 = vunpack.c.h.b16 %v1840
    %v1912 = vunpack.c.l.b16 %v1841
    %v1913 = vunpack.c.l.b16 %v1842
    %v1914 = vunpack.c.h.b16 %v1842
    %v1915 = vunpack.c.l.b16 %v1843
    %v1916 = vunpack.c.l.b16 %v1844
    %v1917 = vunpack.c.h.b16 %v1844
    %v1918 = vunpack.c.l.b16 %v1845
    %v1919 = vunpack.c.l.b16 %v1846
    %v1920 = vunpack.c.h.b16 %v1846
    %v1921 = vunpack.c.l.b16 %v1847
    %v1922 = vunpack.c.l.b16 %v1848
    %v1923 = vunpack.c.h.b16 %v1848
    %v1924 = vunpack.c.l.b16 %v1849
    %v1925 = vunpack.c.l.b16 %v1850
    %v1926 = vunpack.c.h.b16 %v1850
    %v1927 = vunpack.c.l.b16 %v1851
    %v1928 = vunpack.c.l.b16 %v1852
    %v1929 = vunpack.c.h.b16 %v1852
    %v1930 = vunpack.c.l.b16 %v1853
    %v1931 = vunpack.c.l.b16 %v1854
    %v1932 = vunpack.c.h.b16 %v1854
    %v1933 = vunpack.c.l.b16 %v1855
    %v1934 = vunpack.c.l.b16 %v1856
    %v1935 = vunpack.c.h.b16 %v1856
    %v1936 = vunpack.c.l.b16 %v1857
    %v1937 = vunpack.c.l.b16 %v1858
    %v1938 = vunpack.c.h.b16 %v1858
    %v1939 = vunpack.c.l.b16 %v1859
    %v1940 = vunpack.c.l.b16 %v1860
    %v1941 = vunpack.c.h.b16 %v1860
    %v1942 = vunpack.c.l.b16 %v1861
    %v1943 = vpack.c.b16 %v1898, %v1895
    %v1944 = vpack.c.b16 %v1899, %v1896
    %v1945 = vpack.c.b16 %v1900, %v1897
    %v1946 = vpack.c.b16 %v1904, %v1901
    %v1947 = vpack.c.b16 %v1905, %v1902
    %v1948 = vpack.c.b16 %v1906, %v1903
    %v1949 = vpack.c.b16 %v1910, %v1907
    %v1950 = vpack.c.b16 %v1911, %v1908
    %v1951 = vpack.c.b16 %v1912, %v1909
    %v1952 = vpack.c.b16 %v1916, %v1913
    %v1953 = vpack.c.b16 %v1917, %v1914
    %v1954 = vpack.c.b16 %v1918, %v1915
    %v1955 = vpack.c.b16 %v1922, %v1919
    %v1956 = vpack.c.b16 %v1923, %v1920
    %v1957 = vpack.c.b16 %v1924, %v1921
    %v1958 = vpack.c.b16 %v1928, %v1925
    %v1959 = vpack.c.b16 %v1929, %v1926
    %v1960 = vpack.c.b16 %v1930, %v1927
    %v1961 = vpack.c.b16 %v1934, %v1931
    %v1962 = vpack.c.b16 %v1935, %v1932
    %v1963 = vpack.c.b16 %v1936, %v1933
    %v1964 = vpack.c.b16 %v1940, %v1937
    %v1965 = vpack.c.b16 %v1941, %v1938
    %v1966 = vpack.c.b16 %v1942, %v1939
    %v1992 = vlaneseq
    %v1993 = vshrl.u32 %v1992, 7
    %v1994 = vsub.s32 0, %v1993
    %v1995 = vrot.slane %v1862, %v1994
    %v1996 = vlaneseq
    %v1997 = vshrl.u32 %v1996, 7
    %v1998 = vsub.s32 1, %v1997
    %v1999 = vrot.slane %v1862, %v1998
    %v2000 = vlaneseq
    %v2001 = vshrl.u32 %v2000, 7
    %v2002 = vsub.s32 2, %v2001
    %v2003 = vrot.slane %v1862, %v2002
    %2007 = vmatprep.subr.bf16.mxu0 %v1944
    %2008 = vmatpush1.bf16.msra.mxu0 %v1943
    %2009 = vmatprep.subr.bf16.mxu0 %v1947
    %2010 = vmatpush1.bf16.msra.mxu0 %v1946
    %2011 = vmatprep.subr.bf16.mxu0 %v1950
    %2012 = vmatpush1.bf16.msra.mxu0 %v1949
    %2013 = vmatprep.subr.bf16.mxu0 %v1953
    %2014 = vmatpush1.bf16.msra.mxu0 %v1952
    %2015 = vmatprep.subr.bf16.mxu0 %v1956
    %2016 = vmatpush1.bf16.msra.mxu0 %v1955
    %2017 = vmatprep.subr.bf16.mxu0 %v1959
    %2018 = vmatpush1.bf16.msra.mxu0 %v1958
    %2019 = vmatprep.subr.bf16.mxu0 %v1962
    %2020 = vmatpush1.bf16.msra.mxu0 %v1961
    %2021 = vmatprep.subr.bf16.mxu0 %v1965
    %2022 = vmatpush1.bf16.msra.mxu0 %v1964
    %2023 = vmatprep.subr.bf16.mxu0 0
    %2024 = vmatpush1.bf16.msra.mxu0 0
    %2025 = vmatprep.subr.bf16.mxu0 0
    %2026 = vmatpush1.bf16.msra.mxu0 0
    %2027 = vmatprep.subr.bf16.mxu0 0
    %2028 = vmatpush1.bf16.msra.mxu0 0
    %2029 = vmatprep.subr.bf16.mxu0 0
    %2030 = vmatpush1.bf16.msra.mxu0 0
    %2031 = vmatprep.subr.bf16.mxu0 0
    %2032 = vmatpush1.bf16.msra.mxu0 0
    %2033 = vmatprep.subr.bf16.mxu0 0
    %2034 = vmatpush1.bf16.msra.mxu0 0
    %2035 = vmatprep.subr.bf16.mxu0 0
    %2036 = vmatpush1.bf16.msra.mxu0 0
    %2037 = vmatprep.subr.bf16.mxu0 0
    %2038 = vmatpush1.bf16.msra.mxu0 0
    %2039 = vmatprep.mubr.bf16.mxu0 0
    %2040 = vmatmul.mubr.bf16.gmra.mrb[0].mxu0 %v1829
    %v2041 = vpop.f32.mrb[0].mxu0
    %v2042 = vadd.f32 %v1995, %v2041
    %v2043 = vpop.f32.mrb[0].mxu0
    %v2044 = vadd.f32 %v1999, %v2043
    %v2045 = vpop.f32.mrb[0].mxu0
    %v2046 = vpop.f32.mrb[0].mxu0
    %2047 = vdwg.mxu0
    %2048 = vmatprep.subr.bf16.mxu0 0
    %2049 = vmatpush1.bf16.msra.mxu0 %v1945
    %2050 = vmatprep.subr.bf16.mxu0 0
    %2051 = vmatpush1.bf16.msra.mxu0 %v1948
    %2052 = vmatprep.subr.bf16.mxu0 0
    %2053 = vmatpush1.bf16.msra.mxu0 %v1951
    %2054 = vmatprep.subr.bf16.mxu0 0
    %2055 = vmatpush1.bf16.msra.mxu0 %v1954
    %2056 = vmatprep.subr.bf16.mxu0 0
    %2057 = vmatpush1.bf16.msra.mxu0 %v1957
    %2058 = vmatprep.subr.bf16.mxu0 0
    %2059 = vmatpush1.bf16.msra.mxu0 %v1960
    %2060 = vmatprep.subr.bf16.mxu0 0
    %2061 = vmatpush1.bf16.msra.mxu0 %v1963
    %2062 = vmatprep.subr.bf16.mxu0 0
    %2063 = vmatpush1.bf16.msra.mxu0 %v1966
    %2064 = vmatprep.subr.bf16.mxu0 0
    %2065 = vmatpush1.bf16.msra.mxu0 0
    %2066 = vmatprep.subr.bf16.mxu0 0
    %2067 = vmatpush1.bf16.msra.mxu0 0
    %2068 = vmatprep.subr.bf16.mxu0 0
    %2069 = vmatpush1.bf16.msra.mxu0 0
    %2070 = vmatprep.subr.bf16.mxu0 0
    %2071 = vmatpush1.bf16.msra.mxu0 0
    %2072 = vmatprep.subr.bf16.mxu0 0
    %2073 = vmatpush1.bf16.msra.mxu0 0
    %2074 = vmatprep.subr.bf16.mxu0 0
    %2075 = vmatpush1.bf16.msra.mxu0 0
    %2076 = vmatprep.subr.bf16.mxu0 0
    %2077 = vmatpush1.bf16.msra.mxu0 0
    %2078 = vmatprep.subr.bf16.mxu0 0
    %2079 = vmatpush1.bf16.msra.mxu0 0
    %2080 = vmatprep.mubr.bf16.mxu0 0
    %2081 = vmatmul.mubr.bf16.gmra.mrb[0].mxu0 %v1829
    %v2082 = vpop.f32.mrb[0].mxu0
    %v2083 = vadd.f32 %v2003, %v2082
    %v2084 = vpop.f32.mrb[0].mxu0
    %v2085 = vpop.f32.mrb[0].mxu0
    %v2086 = vpop.f32.mrb[0].mxu0
    %2087 = vdwg.mxu0
    %s2088 = scalar_lea.vmem [#allocation3], 5
    %v2089 = vld [vmem:[%s2088] ss:$8 sm:$0x7]
    %v2090 = vadd.f32 %v2089, %v2042
    %v2091 = vxor.u32 %v2090, 2147483648
    %v2092 = vmul.f32 %v2091, 1.442695
    %v2093 = vpow.pop %v2092
    %v2094 = vadd.f32 %v2093, 1.0
    %v2095 = vrcp.pop %v2094
    %v2096 = vmul.f32 1.0, %v2095
    %v2098 = vrot.slane %v2089, 1
    %v2100 = vadd.f32 %v2098, %v2044
    %v2101 = vxor.u32 %v2100, 2147483648
    %v2102 = vmul.f32 %v2101, 1.442695
    %v2103 = vpow.pop %v2102
    %v2104 = vadd.f32 %v2103, 1.0
    %v2105 = vrcp.pop %v2104
    %v2106 = vmul.f32 1.0, %v2105
    %v2107 = vmul.f32 %v2096, %v2083
    %v2108 = vrot.slane %v2089, 2
    %v2110 = vadd.f32 %v2108, %v2107
    %v2111 = vtanh.pop %v2110
    %v2112 = vsub.f32 1.0, %v2106
    %v2113 = vmul.f32 %v2112, %v2111
    %v2114 = vmul.f32 %v2106, %v1827
    %v2115 = vadd.f32 %v2113, %v2114
    %2116 = vst [vmem:[#allocation2 + $0x5] sm:$0x1] %v2115
    %v2117 = vpack.c.bf16 %v2115, %v2115
    %v2118 = vld [vmem:[#allocation11] sm:$0xff]
    %v2119 = vld [vmem:[#allocation11 + $0x8] sm:$0xf]
    %v2120 = vld [vmem:[#allocation11 + $0xc] sm:$0xff]
    %v2121 = vld [vmem:[#allocation11 + $0x14] sm:$0xf]
    %v2122 = vld [vmem:[#allocation11 + $0x18] sm:$0xff]
    %v2123 = vld [vmem:[#allocation11 + $0x20] sm:$0xf]
    %v2124 = vld [vmem:[#allocation11 + $0x24] sm:$0xff]
    %v2125 = vld [vmem:[#allocation11 + $0x2c] sm:$0xf]
    %v2126 = vld [vmem:[#allocation11 + $0x30] sm:$0xff]
    %v2127 = vld [vmem:[#allocation11 + $0x38] sm:$0xf]
    %v2128 = vld [vmem:[#allocation11 + $0x3c] sm:$0xff]
    %v2129 = vld [vmem:[#allocation11 + $0x44] sm:$0xf]
    %v2130 = vld [vmem:[#allocation11 + $0x48] sm:$0xff]
    %v2131 = vld [vmem:[#allocation11 + $0x50] sm:$0xf]
    %v2132 = vld [vmem:[#allocation11 + $0x54] sm:$0xff]
    %v2133 = vld [vmem:[#allocation11 + $0x5c] sm:$0xf]
    %v2134 = vld [vmem:[#allocation11 + $0x60] sm:$0xff]
    %v2135 = vld [vmem:[#allocation11 + $0x68] sm:$0xf]
    %v2136 = vld [vmem:[#allocation11 + $0x6c] sm:$0xff]
    %v2137 = vld [vmem:[#allocation11 + $0x74] sm:$0xf]
    %v2138 = vld [vmem:[#allocation11 + $0x78] sm:$0xff]
    %v2139 = vld [vmem:[#allocation11 + $0x80] sm:$0xf]
    %v2140 = vld [vmem:[#allocation11 + $0x84] sm:$0xff]
    %v2141 = vld [vmem:[#allocation11 + $0x8c] sm:$0xf]
    %v2142 = vld [vmem:[#allocation11 + $0x90] sm:$0xff]
    %v2143 = vld [vmem:[#allocation11 + $0x98] sm:$0xf]
    %v2144 = vld [vmem:[#allocation11 + $0x9c] sm:$0xff]
    %v2145 = vld [vmem:[#allocation11 + $0xa4] sm:$0xf]
    %v2146 = vld [vmem:[#allocation11 + $0xa8] sm:$0xff]
    %v2147 = vld [vmem:[#allocation11 + $0xb0] sm:$0xf]
    %v2148 = vld [vmem:[#allocation11 + $0xb4] sm:$0xff]
    %v2149 = vld [vmem:[#allocation11 + $0xbc] sm:$0xf]
    %v2150 = vld [vmem:[%s5] sm:$0x7]
    %v2183 = vunpack.c.l.b16 %v2118
    %v2184 = vunpack.c.h.b16 %v2118
    %v2185 = vunpack.c.l.b16 %v2119
    %v2186 = vunpack.c.l.b16 %v2120
    %v2187 = vunpack.c.h.b16 %v2120
    %v2188 = vunpack.c.l.b16 %v2121
    %v2189 = vunpack.c.l.b16 %v2122
    %v2190 = vunpack.c.h.b16 %v2122
    %v2191 = vunpack.c.l.b16 %v2123
    %v2192 = vunpack.c.l.b16 %v2124
    %v2193 = vunpack.c.h.b16 %v2124
    %v2194 = vunpack.c.l.b16 %v2125
    %v2195 = vunpack.c.l.b16 %v2126
    %v2196 = vunpack.c.h.b16 %v2126
    %v2197 = vunpack.c.l.b16 %v2127
    %v2198 = vunpack.c.l.b16 %v2128
    %v2199 = vunpack.c.h.b16 %v2128
    %v2200 = vunpack.c.l.b16 %v2129
    %v2201 = vunpack.c.l.b16 %v2130
    %v2202 = vunpack.c.h.b16 %v2130
    %v2203 = vunpack.c.l.b16 %v2131
    %v2204 = vunpack.c.l.b16 %v2132
    %v2205 = vunpack.c.h.b16 %v2132
    %v2206 = vunpack.c.l.b16 %v2133
    %v2207 = vunpack.c.l.b16 %v2134
    %v2208 = vunpack.c.h.b16 %v2134
    %v2209 = vunpack.c.l.b16 %v2135
    %v2210 = vunpack.c.l.b16 %v2136
    %v2211 = vunpack.c.h.b16 %v2136
    %v2212 = vunpack.c.l.b16 %v2137
    %v2213 = vunpack.c.l.b16 %v2138
    %v2214 = vunpack.c.h.b16 %v2138
    %v2215 = vunpack.c.l.b16 %v2139
    %v2216 = vunpack.c.l.b16 %v2140
    %v2217 = vunpack.c.h.b16 %v2140
    %v2218 = vunpack.c.l.b16 %v2141
    %v2219 = vunpack.c.l.b16 %v2142
    %v2220 = vunpack.c.h.b16 %v2142
    %v2221 = vunpack.c.l.b16 %v2143
    %v2222 = vunpack.c.l.b16 %v2144
    %v2223 = vunpack.c.h.b16 %v2144
    %v2224 = vunpack.c.l.b16 %v2145
    %v2225 = vunpack.c.l.b16 %v2146
    %v2226 = vunpack.c.h.b16 %v2146
    %v2227 = vunpack.c.l.b16 %v2147
    %v2228 = vunpack.c.l.b16 %v2148
    %v2229 = vunpack.c.h.b16 %v2148
    %v2230 = vunpack.c.l.b16 %v2149
    %v2231 = vpack.c.b16 %v2186, %v2183
    %v2232 = vpack.c.b16 %v2187, %v2184
    %v2233 = vpack.c.b16 %v2188, %v2185
    %v2234 = vpack.c.b16 %v2192, %v2189
    %v2235 = vpack.c.b16 %v2193, %v2190
    %v2236 = vpack.c.b16 %v2194, %v2191
    %v2237 = vpack.c.b16 %v2198, %v2195
    %v2238 = vpack.c.b16 %v2199, %v2196
    %v2239 = vpack.c.b16 %v2200, %v2197
    %v2240 = vpack.c.b16 %v2204, %v2201
    %v2241 = vpack.c.b16 %v2205, %v2202
    %v2242 = vpack.c.b16 %v2206, %v2203
    %v2243 = vpack.c.b16 %v2210, %v2207
    %v2244 = vpack.c.b16 %v2211, %v2208
    %v2245 = vpack.c.b16 %v2212, %v2209
    %v2246 = vpack.c.b16 %v2216, %v2213
    %v2247 = vpack.c.b16 %v2217, %v2214
    %v2248 = vpack.c.b16 %v2218, %v2215
    %v2249 = vpack.c.b16 %v2222, %v2219
    %v2250 = vpack.c.b16 %v2223, %v2220
    %v2251 = vpack.c.b16 %v2224, %v2221
    %v2252 = vpack.c.b16 %v2228, %v2225
    %v2253 = vpack.c.b16 %v2229, %v2226
    %v2254 = vpack.c.b16 %v2230, %v2227
    %v2280 = vlaneseq
    %v2281 = vshrl.u32 %v2280, 7
    %v2282 = vsub.s32 0, %v2281
    %v2283 = vrot.slane %v2150, %v2282
    %v2284 = vlaneseq
    %v2285 = vshrl.u32 %v2284, 7
    %v2286 = vsub.s32 1, %v2285
    %v2287 = vrot.slane %v2150, %v2286
    %v2288 = vlaneseq
    %v2289 = vshrl.u32 %v2288, 7
    %v2290 = vsub.s32 2, %v2289
    %v2291 = vrot.slane %v2150, %v2290
    %2295 = vmatprep.subr.bf16.mxu0 %v2232
    %2296 = vmatpush1.bf16.msra.mxu0 %v2231
    %2297 = vmatprep.subr.bf16.mxu0 %v2235
    %2298 = vmatpush1.bf16.msra.mxu0 %v2234
    %2299 = vmatprep.subr.bf16.mxu0 %v2238
    %2300 = vmatpush1.bf16.msra.mxu0 %v2237
    %2301 = vmatprep.subr.bf16.mxu0 %v2241
    %2302 = vmatpush1.bf16.msra.mxu0 %v2240
    %2303 = vmatprep.subr.bf16.mxu0 %v2244
    %2304 = vmatpush1.bf16.msra.mxu0 %v2243
    %2305 = vmatprep.subr.bf16.mxu0 %v2247
    %2306 = vmatpush1.bf16.msra.mxu0 %v2246
    %2307 = vmatprep.subr.bf16.mxu0 %v2250
    %2308 = vmatpush1.bf16.msra.mxu0 %v2249
    %2309 = vmatprep.subr.bf16.mxu0 %v2253
    %2310 = vmatpush1.bf16.msra.mxu0 %v2252
    %2311 = vmatprep.subr.bf16.mxu0 0
    %2312 = vmatpush1.bf16.msra.mxu0 0
    %2313 = vmatprep.subr.bf16.mxu0 0
    %2314 = vmatpush1.bf16.msra.mxu0 0
    %2315 = vmatprep.subr.bf16.mxu0 0
    %2316 = vmatpush1.bf16.msra.mxu0 0
    %2317 = vmatprep.subr.bf16.mxu0 0
    %2318 = vmatpush1.bf16.msra.mxu0 0
    %2319 = vmatprep.subr.bf16.mxu0 0
    %2320 = vmatpush1.bf16.msra.mxu0 0
    %2321 = vmatprep.subr.bf16.mxu0 0
    %2322 = vmatpush1.bf16.msra.mxu0 0
    %2323 = vmatprep.subr.bf16.mxu0 0
    %2324 = vmatpush1.bf16.msra.mxu0 0
    %2325 = vmatprep.subr.bf16.mxu0 0
    %2326 = vmatpush1.bf16.msra.mxu0 0
    %2327 = vmatprep.mubr.bf16.mxu0 0
    %2328 = vmatmul.mubr.bf16.gmra.mrb[0].mxu0 %v2117
    %v2329 = vpop.f32.mrb[0].mxu0
    %v2330 = vadd.f32 %v2283, %v2329
    %v2331 = vpop.f32.mrb[0].mxu0
    %v2332 = vadd.f32 %v2287, %v2331
    %v2333 = vpop.f32.mrb[0].mxu0
    %v2334 = vpop.f32.mrb[0].mxu0
    %2335 = vdwg.mxu0
    %2336 = vmatprep.subr.bf16.mxu0 0
    %2337 = vmatpush1.bf16.msra.mxu0 %v2233
    %2338 = vmatprep.subr.bf16.mxu0 0
    %2339 = vmatpush1.bf16.msra.mxu0 %v2236
    %2340 = vmatprep.subr.bf16.mxu0 0
    %2341 = vmatpush1.bf16.msra.mxu0 %v2239
    %2342 = vmatprep.subr.bf16.mxu0 0
    %2343 = vmatpush1.bf16.msra.mxu0 %v2242
    %2344 = vmatprep.subr.bf16.mxu0 0
    %2345 = vmatpush1.bf16.msra.mxu0 %v2245
    %2346 = vmatprep.subr.bf16.mxu0 0
    %2347 = vmatpush1.bf16.msra.mxu0 %v2248
    %2348 = vmatprep.subr.bf16.mxu0 0
    %2349 = vmatpush1.bf16.msra.mxu0 %v2251
    %2350 = vmatprep.subr.bf16.mxu0 0
    %2351 = vmatpush1.bf16.msra.mxu0 %v2254
    %2352 = vmatprep.subr.bf16.mxu0 0
    %2353 = vmatpush1.bf16.msra.mxu0 0
    %2354 = vmatprep.subr.bf16.mxu0 0
    %2355 = vmatpush1.bf16.msra.mxu0 0
    %2356 = vmatprep.subr.bf16.mxu0 0
    %2357 = vmatpush1.bf16.msra.mxu0 0
    %2358 = vmatprep.subr.bf16.mxu0 0
    %2359 = vmatpush1.bf16.msra.mxu0 0
    %2360 = vmatprep.subr.bf16.mxu0 0
    %2361 = vmatpush1.bf16.msra.mxu0 0
    %2362 = vmatprep.subr.bf16.mxu0 0
    %2363 = vmatpush1.bf16.msra.mxu0 0
    %2364 = vmatprep.subr.bf16.mxu0 0
    %2365 = vmatpush1.bf16.msra.mxu0 0
    %2366 = vmatprep.subr.bf16.mxu0 0
    %2367 = vmatpush1.bf16.msra.mxu0 0
    %2368 = vmatprep.mubr.bf16.mxu0 0
    %2369 = vmatmul.mubr.bf16.gmra.mrb[0].mxu0 %v2117
    %v2370 = vpop.f32.mrb[0].mxu0
    %v2371 = vadd.f32 %v2291, %v2370
    %v2372 = vpop.f32.mrb[0].mxu0
    %v2373 = vpop.f32.mrb[0].mxu0
    %v2374 = vpop.f32.mrb[0].mxu0
    %2375 = vdwg.mxu0
    %s2376 = scalar_lea.vmem [#allocation3], 6
    %v2377 = vld [vmem:[%s2376] ss:$8 sm:$0x7]
    %v2378 = vadd.f32 %v2377, %v2330
    %v2379 = vxor.u32 %v2378, 2147483648
    %v2380 = vmul.f32 %v2379, 1.442695
    %v2381 = vpow.pop %v2380
    %v2382 = vadd.f32 %v2381, 1.0
    %v2383 = vrcp.pop %v2382
    %v2384 = vmul.f32 1.0, %v2383
    %v2386 = vrot.slane %v2377, 1
    %v2388 = vadd.f32 %v2386, %v2332
    %v2389 = vxor.u32 %v2388, 2147483648
    %v2390 = vmul.f32 %v2389, 1.442695
    %v2391 = vpow.pop %v2390
    %v2392 = vadd.f32 %v2391, 1.0
    %v2393 = vrcp.pop %v2392
    %v2394 = vmul.f32 1.0, %v2393
    %v2395 = vmul.f32 %v2384, %v2371
    %v2396 = vrot.slane %v2377, 2
    %v2398 = vadd.f32 %v2396, %v2395
    %v2399 = vtanh.pop %v2398
    %v2400 = vsub.f32 1.0, %v2394
    %v2401 = vmul.f32 %v2400, %v2399
    %v2402 = vmul.f32 %v2394, %v2115
    %v2403 = vadd.f32 %v2401, %v2402
    %2404 = vst [vmem:[#allocation2 + $0x6] sm:$0x1] %v2403
    %v2405 = vpack.c.bf16 %v2403, %v2403
    %v2406 = vld [vmem:[#allocation11] sm:$0xff]
    %v2407 = vld [vmem:[#allocation11 + $0x8] sm:$0xf]
    %v2408 = vld [vmem:[#allocation11 + $0xc] sm:$0xff]
    %v2409 = vld [vmem:[#allocation11 + $0x14] sm:$0xf]
    %v2410 = vld [vmem:[#allocation11 + $0x18] sm:$0xff]
    %v2411 = vld [vmem:[#allocation11 + $0x20] sm:$0xf]
    %v2412 = vld [vmem:[#allocation11 + $0x24] sm:$0xff]
    %v2413 = vld [vmem:[#allocation11 + $0x2c] sm:$0xf]
    %v2414 = vld [vmem:[#allocation11 + $0x30] sm:$0xff]
    %v2415 = vld [vmem:[#allocation11 + $0x38] sm:$0xf]
    %v2416 = vld [vmem:[#allocation11 + $0x3c] sm:$0xff]
    %v2417 = vld [vmem:[#allocation11 + $0x44] sm:$0xf]
    %v2418 = vld [vmem:[#allocation11 + $0x48] sm:$0xff]
    %v2419 = vld [vmem:[#allocation11 + $0x50] sm:$0xf]
    %v2420 = vld [vmem:[#allocation11 + $0x54] sm:$0xff]
    %v2421 = vld [vmem:[#allocation11 + $0x5c] sm:$0xf]
    %v2422 = vld [vmem:[#allocation11 + $0x60] sm:$0xff]
    %v2423 = vld [vmem:[#allocation11 + $0x68] sm:$0xf]
    %v2424 = vld [vmem:[#allocation11 + $0x6c] sm:$0xff]
    %v2425 = vld [vmem:[#allocation11 + $0x74] sm:$0xf]
    %v2426 = vld [vmem:[#allocation11 + $0x78] sm:$0xff]
    %v2427 = vld [vmem:[#allocation11 + $0x80] sm:$0xf]
    %v2428 = vld [vmem:[#allocation11 + $0x84] sm:$0xff]
    %v2429 = vld [vmem:[#allocation11 + $0x8c] sm:$0xf]
    %v2430 = vld [vmem:[#allocation11 + $0x90] sm:$0xff]
    %v2431 = vld [vmem:[#allocation11 + $0x98] sm:$0xf]
    %v2432 = vld [vmem:[#allocation11 + $0x9c] sm:$0xff]
    %v2433 = vld [vmem:[#allocation11 + $0xa4] sm:$0xf]
    %v2434 = vld [vmem:[#allocation11 + $0xa8] sm:$0xff]
    %v2435 = vld [vmem:[#allocation11 + $0xb0] sm:$0xf]
    %v2436 = vld [vmem:[#allocation11 + $0xb4] sm:$0xff]
    %v2437 = vld [vmem:[#allocation11 + $0xbc] sm:$0xf]
    %v2438 = vld [vmem:[%s5] sm:$0x7]
    %v2471 = vunpack.c.l.b16 %v2406
    %v2472 = vunpack.c.h.b16 %v2406
    %v2473 = vunpack.c.l.b16 %v2407
    %v2474 = vunpack.c.l.b16 %v2408
    %v2475 = vunpack.c.h.b16 %v2408
    %v2476 = vunpack.c.l.b16 %v2409
    %v2477 = vunpack.c.l.b16 %v2410
    %v2478 = vunpack.c.h.b16 %v2410
    %v2479 = vunpack.c.l.b16 %v2411
    %v2480 = vunpack.c.l.b16 %v2412
    %v2481 = vunpack.c.h.b16 %v2412
    %v2482 = vunpack.c.l.b16 %v2413
    %v2483 = vunpack.c.l.b16 %v2414
    %v2484 = vunpack.c.h.b16 %v2414
    %v2485 = vunpack.c.l.b16 %v2415
    %v2486 = vunpack.c.l.b16 %v2416
    %v2487 = vunpack.c.h.b16 %v2416
    %v2488 = vunpack.c.l.b16 %v2417
    %v2489 = vunpack.c.l.b16 %v2418
    %v2490 = vunpack.c.h.b16 %v2418
    %v2491 = vunpack.c.l.b16 %v2419
    %v2492 = vunpack.c.l.b16 %v2420
    %v2493 = vunpack.c.h.b16 %v2420
    %v2494 = vunpack.c.l.b16 %v2421
    %v2495 = vunpack.c.l.b16 %v2422
    %v2496 = vunpack.c.h.b16 %v2422
    %v2497 = vunpack.c.l.b16 %v2423
    %v2498 = vunpack.c.l.b16 %v2424
    %v2499 = vunpack.c.h.b16 %v2424
    %v2500 = vunpack.c.l.b16 %v2425
    %v2501 = vunpack.c.l.b16 %v2426
    %v2502 = vunpack.c.h.b16 %v2426
    %v2503 = vunpack.c.l.b16 %v2427
    %v2504 = vunpack.c.l.b16 %v2428
    %v2505 = vunpack.c.h.b16 %v2428
    %v2506 = vunpack.c.l.b16 %v2429
    %v2507 = vunpack.c.l.b16 %v2430
    %v2508 = vunpack.c.h.b16 %v2430
    %v2509 = vunpack.c.l.b16 %v2431
    %v2510 = vunpack.c.l.b16 %v2432
    %v2511 = vunpack.c.h.b16 %v2432
    %v2512 = vunpack.c.l.b16 %v2433
    %v2513 = vunpack.c.l.b16 %v2434
    %v2514 = vunpack.c.h.b16 %v2434
    %v2515 = vunpack.c.l.b16 %v2435
    %v2516 = vunpack.c.l.b16 %v2436
    %v2517 = vunpack.c.h.b16 %v2436
    %v2518 = vunpack.c.l.b16 %v2437
    %v2519 = vpack.c.b16 %v2474, %v2471
    %v2520 = vpack.c.b16 %v2475, %v2472
    %v2521 = vpack.c.b16 %v2476, %v2473
    %v2522 = vpack.c.b16 %v2480, %v2477
    %v2523 = vpack.c.b16 %v2481, %v2478
    %v2524 = vpack.c.b16 %v2482, %v2479
    %v2525 = vpack.c.b16 %v2486, %v2483
    %v2526 = vpack.c.b16 %v2487, %v2484
    %v2527 = vpack.c.b16 %v2488, %v2485
    %v2528 = vpack.c.b16 %v2492, %v2489
    %v2529 = vpack.c.b16 %v2493, %v2490
    %v2530 = vpack.c.b16 %v2494, %v2491
    %v2531 = vpack.c.b16 %v2498, %v2495
    %v2532 = vpack.c.b16 %v2499, %v2496
    %v2533 = vpack.c.b16 %v2500, %v2497
    %v2534 = vpack.c.b16 %v2504, %v2501
    %v2535 = vpack.c.b16 %v2505, %v2502
    %v2536 = vpack.c.b16 %v2506, %v2503
    %v2537 = vpack.c.b16 %v2510, %v2507
    %v2538 = vpack.c.b16 %v2511, %v2508
    %v2539 = vpack.c.b16 %v2512, %v2509
    %v2540 = vpack.c.b16 %v2516, %v2513
    %v2541 = vpack.c.b16 %v2517, %v2514
    %v2542 = vpack.c.b16 %v2518, %v2515
    %v2568 = vlaneseq
    %v2569 = vshrl.u32 %v2568, 7
    %v2570 = vsub.s32 0, %v2569
    %v2571 = vrot.slane %v2438, %v2570
    %v2572 = vlaneseq
    %v2573 = vshrl.u32 %v2572, 7
    %v2574 = vsub.s32 1, %v2573
    %v2575 = vrot.slane %v2438, %v2574
    %v2576 = vlaneseq
    %v2577 = vshrl.u32 %v2576, 7
    %v2578 = vsub.s32 2, %v2577
    %v2579 = vrot.slane %v2438, %v2578
    %2583 = vmatprep.subr.bf16.mxu0 %v2520
    %2584 = vmatpush1.bf16.msra.mxu0 %v2519
    %2585 = vmatprep.subr.bf16.mxu0 %v2523
    %2586 = vmatpush1.bf16.msra.mxu0 %v2522
    %2587 = vmatprep.subr.bf16.mxu0 %v2526
    %2588 = vmatpush1.bf16.msra.mxu0 %v2525
    %2589 = vmatprep.subr.bf16.mxu0 %v2529
    %2590 = vmatpush1.bf16.msra.mxu0 %v2528
    %2591 = vmatprep.subr.bf16.mxu0 %v2532
    %2592 = vmatpush1.bf16.msra.mxu0 %v2531
    %2593 = vmatprep.subr.bf16.mxu0 %v2535
    %2594 = vmatpush1.bf16.msra.mxu0 %v2534
    %2595 = vmatprep.subr.bf16.mxu0 %v2538
    %2596 = vmatpush1.bf16.msra.mxu0 %v2537
    %2597 = vmatprep.subr.bf16.mxu0 %v2541
    %2598 = vmatpush1.bf16.msra.mxu0 %v2540
    %2599 = vmatprep.subr.bf16.mxu0 0
    %2600 = vmatpush1.bf16.msra.mxu0 0
    %2601 = vmatprep.subr.bf16.mxu0 0
    %2602 = vmatpush1.bf16.msra.mxu0 0
    %2603 = vmatprep.subr.bf16.mxu0 0
    %2604 = vmatpush1.bf16.msra.mxu0 0
    %2605 = vmatprep.subr.bf16.mxu0 0
    %2606 = vmatpush1.bf16.msra.mxu0 0
    %2607 = vmatprep.subr.bf16.mxu0 0
    %2608 = vmatpush1.bf16.msra.mxu0 0
    %2609 = vmatprep.subr.bf16.mxu0 0
    %2610 = vmatpush1.bf16.msra.mxu0 0
    %2611 = vmatprep.subr.bf16.mxu0 0
    %2612 = vmatpush1.bf16.msra.mxu0 0
    %2613 = vmatprep.subr.bf16.mxu0 0
    %2614 = vmatpush1.bf16.msra.mxu0 0
    %2615 = vmatprep.mubr.bf16.mxu0 0
    %2616 = vmatmul.mubr.bf16.gmra.mrb[0].mxu0 %v2405
    %v2617 = vpop.f32.mrb[0].mxu0
    %v2618 = vadd.f32 %v2571, %v2617
    %v2619 = vpop.f32.mrb[0].mxu0
    %v2620 = vadd.f32 %v2575, %v2619
    %v2621 = vpop.f32.mrb[0].mxu0
    %v2622 = vpop.f32.mrb[0].mxu0
    %2623 = vdwg.mxu0
    %2624 = vmatprep.subr.bf16.mxu0 0
    %2625 = vmatpush1.bf16.msra.mxu0 %v2521
    %2626 = vmatprep.subr.bf16.mxu0 0
    %2627 = vmatpush1.bf16.msra.mxu0 %v2524
    %2628 = vmatprep.subr.bf16.mxu0 0
    %2629 = vmatpush1.bf16.msra.mxu0 %v2527
    %2630 = vmatprep.subr.bf16.mxu0 0
    %2631 = vmatpush1.bf16.msra.mxu0 %v2530
    %2632 = vmatprep.subr.bf16.mxu0 0
    %2633 = vmatpush1.bf16.msra.mxu0 %v2533
    %2634 = vmatprep.subr.bf16.mxu0 0
    %2635 = vmatpush1.bf16.msra.mxu0 %v2536
    %2636 = vmatprep.subr.bf16.mxu0 0
    %2637 = vmatpush1.bf16.msra.mxu0 %v2539
    %2638 = vmatprep.subr.bf16.mxu0 0
    %2639 = vmatpush1.bf16.msra.mxu0 %v2542
    %2640 = vmatprep.subr.bf16.mxu0 0
    %2641 = vmatpush1.bf16.msra.mxu0 0
    %2642 = vmatprep.subr.bf16.mxu0 0
    %2643 = vmatpush1.bf16.msra.mxu0 0
    %2644 = vmatprep.subr.bf16.mxu0 0
    %2645 = vmatpush1.bf16.msra.mxu0 0
    %2646 = vmatprep.subr.bf16.mxu0 0
    %2647 = vmatpush1.bf16.msra.mxu0 0
    %2648 = vmatprep.subr.bf16.mxu0 0
    %2649 = vmatpush1.bf16.msra.mxu0 0
    %2650 = vmatprep.subr.bf16.mxu0 0
    %2651 = vmatpush1.bf16.msra.mxu0 0
    %2652 = vmatprep.subr.bf16.mxu0 0
    %2653 = vmatpush1.bf16.msra.mxu0 0
    %2654 = vmatprep.subr.bf16.mxu0 0
    %2655 = vmatpush1.bf16.msra.mxu0 0
    %2656 = vmatprep.mubr.bf16.mxu0 0
    %2657 = vmatmul.mubr.bf16.gmra.mrb[0].mxu0 %v2405
    %v2658 = vpop.f32.mrb[0].mxu0
    %v2659 = vadd.f32 %v2579, %v2658
    %v2660 = vpop.f32.mrb[0].mxu0
    %v2661 = vpop.f32.mrb[0].mxu0
    %v2662 = vpop.f32.mrb[0].mxu0
    %2663 = vdwg.mxu0
    %s2664 = scalar_lea.vmem [#allocation3], 7
    %v2665 = vld [vmem:[%s2664] ss:$8 sm:$0x7]
    %v2666 = vadd.f32 %v2665, %v2618
    %v2667 = vxor.u32 %v2666, 2147483648
    %v2668 = vmul.f32 %v2667, 1.442695
    %v2669 = vpow.pop %v2668
    %v2670 = vadd.f32 %v2669, 1.0
    %v2671 = vrcp.pop %v2670
    %v2672 = vmul.f32 1.0, %v2671
    %v2674 = vrot.slane %v2665, 1
    %v2676 = vadd.f32 %v2674, %v2620
    %v2677 = vxor.u32 %v2676, 2147483648
    %v2678 = vmul.f32 %v2677, 1.442695
    %v2679 = vpow.pop %v2678
    %v2680 = vadd.f32 %v2679, 1.0
    %v2681 = vrcp.pop %v2680
    %v2682 = vmul.f32 1.0, %v2681
    %v2683 = vmul.f32 %v2672, %v2659
    %v2684 = vrot.slane %v2665, 2
    %v2686 = vadd.f32 %v2684, %v2683
    %v2687 = vtanh.pop %v2686
    %v2688 = vsub.f32 1.0, %v2682
    %v2689 = vmul.f32 %v2688, %v2687
    %v2690 = vmul.f32 %v2682, %v2403
    %v2691 = vadd.f32 %v2689, %v2690
    %2692 = vst [vmem:[#allocation2 + $0x7] sm:$0x1] %v2691
    %2693 = vst [vmem:[#allocation15] sm:$0x1] %v2691
    %v2694 = vld [vmem:[#allocation2] sm:$0xff]
    %v2695 = vpack.c.bf16 %v2694, %v2694
    %s2696 = scalar_lea.vmem [#allocation9], 192
    %v2697 = vld [vmem:[%s2696] sm:$0xff]
    %v2698 = vld [vmem:[%s2696 + $0x8] sm:$0xf]
    %v2699 = vld [vmem:[%s2696 + $0xc] sm:$0xff]
    %v2700 = vld [vmem:[%s2696 + $0x14] sm:$0xf]
    %v2701 = vld [vmem:[%s2696 + $0x18] sm:$0xff]
    %v2702 = vld [vmem:[%s2696 + $0x20] sm:$0xf]
    %v2703 = vld [vmem:[%s2696 + $0x24] sm:$0xff]
    %v2704 = vld [vmem:[%s2696 + $0x2c] sm:$0xf]
    %v2705 = vld [vmem:[%s2696 + $0x30] sm:$0xff]
    %v2706 = vld [vmem:[%s2696 + $0x38] sm:$0xf]
    %v2707 = vld [vmem:[%s2696 + $0x3c] sm:$0xff]
    %v2708 = vld [vmem:[%s2696 + $0x44] sm:$0xf]
    %v2709 = vld [vmem:[%s2696 + $0x48] sm:$0xff]
    %v2710 = vld [vmem:[%s2696 + $0x50] sm:$0xf]
    %v2711 = vld [vmem:[%s2696 + $0x54] sm:$0xff]
    %v2712 = vld [vmem:[%s2696 + $0x5c] sm:$0xf]
    %v2713 = vld [vmem:[%s2696 + $0x60] sm:$0xff]
    %v2714 = vld [vmem:[%s2696 + $0x68] sm:$0xf]
    %v2715 = vld [vmem:[%s2696 + $0x6c] sm:$0xff]
    %v2716 = vld [vmem:[%s2696 + $0x74] sm:$0xf]
    %v2717 = vld [vmem:[%s2696 + $0x78] sm:$0xff]
    %v2718 = vld [vmem:[%s2696 + $0x80] sm:$0xf]
    %v2719 = vld [vmem:[%s2696 + $0x84] sm:$0xff]
    %v2720 = vld [vmem:[%s2696 + $0x8c] sm:$0xf]
    %v2721 = vld [vmem:[%s2696 + $0x90] sm:$0xff]
    %v2722 = vld [vmem:[%s2696 + $0x98] sm:$0xf]
    %v2723 = vld [vmem:[%s2696 + $0x9c] sm:$0xff]
    %v2724 = vld [vmem:[%s2696 + $0xa4] sm:$0xf]
    %v2725 = vld [vmem:[%s2696 + $0xa8] sm:$0xff]
    %v2726 = vld [vmem:[%s2696 + $0xb0] sm:$0xf]
    %v2727 = vld [vmem:[%s2696 + $0xb4] sm:$0xff]
    %v2728 = vld [vmem:[%s2696 + $0xbc] sm:$0xf]
    %s2729 = scalar_lea.vmem %s4, 3
    %v2730 = vld [vmem:[%s2729] sm:$0x7]
    %v2732 = vlaneseq
    %v2733 = vshrl.u32 %v2732, 7
    %v2734 = vsub.s32 0, %v2733
    %v2735 = vrot.slane %v2730, %v2734
    %v2736 = vlaneseq
    %v2737 = vshrl.u32 %v2736, 7
    %v2738 = vsub.s32 1, %v2737
    %v2739 = vrot.slane %v2730, %v2738
    %v2740 = vlaneseq
    %v2741 = vshrl.u32 %v2740, 7
    %v2742 = vsub.s32 2, %v2741
    %v2743 = vrot.slane %v2730, %v2742
    %v2779 = vunpack.c.l.b16 %v2697
    %v2780 = vunpack.c.h.b16 %v2697
    %v2781 = vunpack.c.l.b16 %v2698
    %v2782 = vunpack.c.l.b16 %v2699
    %v2783 = vunpack.c.h.b16 %v2699
    %v2784 = vunpack.c.l.b16 %v2700
    %v2785 = vunpack.c.l.b16 %v2701
    %v2786 = vunpack.c.h.b16 %v2701
    %v2787 = vunpack.c.l.b16 %v2702
    %v2788 = vunpack.c.l.b16 %v2703
    %v2789 = vunpack.c.h.b16 %v2703
    %v2790 = vunpack.c.l.b16 %v2704
    %v2791 = vunpack.c.l.b16 %v2705
    %v2792 = vunpack.c.h.b16 %v2705
    %v2793 = vunpack.c.l.b16 %v2706
    %v2794 = vunpack.c.l.b16 %v2707
    %v2795 = vunpack.c.h.b16 %v2707
    %v2796 = vunpack.c.l.b16 %v2708
    %v2797 = vunpack.c.l.b16 %v2709
    %v2798 = vunpack.c.h.b16 %v2709
    %v2799 = vunpack.c.l.b16 %v2710
    %v2800 = vunpack.c.l.b16 %v2711
    %v2801 = vunpack.c.h.b16 %v2711
    %v2802 = vunpack.c.l.b16 %v2712
    %v2803 = vunpack.c.l.b16 %v2713
    %v2804 = vunpack.c.h.b16 %v2713
    %v2805 = vunpack.c.l.b16 %v2714
    %v2806 = vunpack.c.l.b16 %v2715
    %v2807 = vunpack.c.h.b16 %v2715
    %v2808 = vunpack.c.l.b16 %v2716
    %v2809 = vunpack.c.l.b16 %v2717
    %v2810 = vunpack.c.h.b16 %v2717
    %v2811 = vunpack.c.l.b16 %v2718
    %v2812 = vunpack.c.l.b16 %v2719
    %v2813 = vunpack.c.h.b16 %v2719
    %v2814 = vunpack.c.l.b16 %v2720
    %v2815 = vunpack.c.l.b16 %v2721
    %v2816 = vunpack.c.h.b16 %v2721
    %v2817 = vunpack.c.l.b16 %v2722
    %v2818 = vunpack.c.l.b16 %v2723
    %v2819 = vunpack.c.h.b16 %v2723
    %v2820 = vunpack.c.l.b16 %v2724
    %v2821 = vunpack.c.l.b16 %v2725
    %v2822 = vunpack.c.h.b16 %v2725
    %v2823 = vunpack.c.l.b16 %v2726
    %v2824 = vunpack.c.l.b16 %v2727
    %v2825 = vunpack.c.h.b16 %v2727
    %v2826 = vunpack.c.l.b16 %v2728
    %v2827 = vpack.c.b16 %v2782, %v2779
    %v2828 = vpack.c.b16 %v2783, %v2780
    %v2829 = vpack.c.b16 %v2784, %v2781
    %v2830 = vpack.c.b16 %v2788, %v2785
    %v2831 = vpack.c.b16 %v2789, %v2786
    %v2832 = vpack.c.b16 %v2790, %v2787
    %v2833 = vpack.c.b16 %v2794, %v2791
    %v2834 = vpack.c.b16 %v2795, %v2792
    %v2835 = vpack.c.b16 %v2796, %v2793
    %v2836 = vpack.c.b16 %v2800, %v2797
    %v2837 = vpack.c.b16 %v2801, %v2798
    %v2838 = vpack.c.b16 %v2802, %v2799
    %v2839 = vpack.c.b16 %v2806, %v2803
    %v2840 = vpack.c.b16 %v2807, %v2804
    %v2841 = vpack.c.b16 %v2808, %v2805
    %v2842 = vpack.c.b16 %v2812, %v2809
    %v2843 = vpack.c.b16 %v2813, %v2810
    %v2844 = vpack.c.b16 %v2814, %v2811
    %v2845 = vpack.c.b16 %v2818, %v2815
    %v2846 = vpack.c.b16 %v2819, %v2816
    %v2847 = vpack.c.b16 %v2820, %v2817
    %v2848 = vpack.c.b16 %v2824, %v2821
    %v2849 = vpack.c.b16 %v2825, %v2822
    %v2850 = vpack.c.b16 %v2826, %v2823
    %2875 = vmatprep.subr.bf16.mxu0 %v2828
    %2876 = vmatpush1.bf16.msra.mxu0 %v2827
    %2877 = vmatprep.subr.bf16.mxu0 %v2831
    %2878 = vmatpush1.bf16.msra.mxu0 %v2830
    %2879 = vmatprep.subr.bf16.mxu0 %v2834
    %2880 = vmatpush1.bf16.msra.mxu0 %v2833
    %2881 = vmatprep.subr.bf16.mxu0 %v2837
    %2882 = vmatpush1.bf16.msra.mxu0 %v2836
    %2883 = vmatprep.subr.bf16.mxu0 %v2840
    %2884 = vmatpush1.bf16.msra.mxu0 %v2839
    %2885 = vmatprep.subr.bf16.mxu0 %v2843
    %2886 = vmatpush1.bf16.msra.mxu0 %v2842
    %2887 = vmatprep.subr.bf16.mxu0 %v2846
    %2888 = vmatpush1.bf16.msra.mxu0 %v2845
    %2889 = vmatprep.subr.bf16.mxu0 %v2849
    %2890 = vmatpush1.bf16.msra.mxu0 %v2848
    %2891 = vmatprep.subr.bf16.mxu0 0
    %2892 = vmatpush1.bf16.msra.mxu0 0
    %2893 = vmatprep.subr.bf16.mxu0 0
    %2894 = vmatpush1.bf16.msra.mxu0 0
    %2895 = vmatprep.subr.bf16.mxu0 0
    %2896 = vmatpush1.bf16.msra.mxu0 0
    %2897 = vmatprep.subr.bf16.mxu0 0
    %2898 = vmatpush1.bf16.msra.mxu0 0
    %2899 = vmatprep.subr.bf16.mxu0 0
    %2900 = vmatpush1.bf16.msra.mxu0 0
    %2901 = vmatprep.subr.bf16.mxu0 0
    %2902 = vmatpush1.bf16.msra.mxu0 0
    %2903 = vmatprep.subr.bf16.mxu0 0
    %2904 = vmatpush1.bf16.msra.mxu0 0
    %2905 = vmatprep.subr.bf16.mxu0 0
    %2906 = vmatpush1.bf16.msra.mxu0 0
    %2907 = vmatprep.mubr.bf16.mxu0 0
    %2908 = vmatmul.mubr.bf16.gmra.mrb[0].mxu0 %v2695
    %v2909 = vpop.f32.mrb[0].mxu0
    %v2910 = vadd.f32 %v2735, %v2909
    %v2911 = vpop.f32.mrb[0].mxu0
    %v2912 = vadd.f32 %v2739, %v2911
    %v2913 = vpop.f32.mrb[0].mxu0
    %v2914 = vpop.f32.mrb[0].mxu0
    %2915 = vdwg.mxu0
    %2916 = vmatprep.subr.bf16.mxu0 0
    %2917 = vmatpush1.bf16.msra.mxu0 %v2829
    %2918 = vmatprep.subr.bf16.mxu0 0
    %2919 = vmatpush1.bf16.msra.mxu0 %v2832
    %2920 = vmatprep.subr.bf16.mxu0 0
    %2921 = vmatpush1.bf16.msra.mxu0 %v2835
    %2922 = vmatprep.subr.bf16.mxu0 0
    %2923 = vmatpush1.bf16.msra.mxu0 %v2838
    %2924 = vmatprep.subr.bf16.mxu0 0
    %2925 = vmatpush1.bf16.msra.mxu0 %v2841
    %2926 = vmatprep.subr.bf16.mxu0 0
    %2927 = vmatpush1.bf16.msra.mxu0 %v2844
    %2928 = vmatprep.subr.bf16.mxu0 0
    %2929 = vmatpush1.bf16.msra.mxu0 %v2847
    %2930 = vmatprep.subr.bf16.mxu0 0
    %2931 = vmatpush1.bf16.msra.mxu0 %v2850
    %2932 = vmatprep.subr.bf16.mxu0 0
    %2933 = vmatpush1.bf16.msra.mxu0 0
    %2934 = vmatprep.subr.bf16.mxu0 0
    %2935 = vmatpush1.bf16.msra.mxu0 0
    %2936 = vmatprep.subr.bf16.mxu0 0
    %2937 = vmatpush1.bf16.msra.mxu0 0
    %2938 = vmatprep.subr.bf16.mxu0 0
    %2939 = vmatpush1.bf16.msra.mxu0 0
    %2940 = vmatprep.subr.bf16.mxu0 0
    %2941 = vmatpush1.bf16.msra.mxu0 0
    %2942 = vmatprep.subr.bf16.mxu0 0
    %2943 = vmatpush1.bf16.msra.mxu0 0
    %2944 = vmatprep.subr.bf16.mxu0 0
    %2945 = vmatpush1.bf16.msra.mxu0 0
    %2946 = vmatprep.subr.bf16.mxu0 0
    %2947 = vmatpush1.bf16.msra.mxu0 0
    %2948 = vmatprep.mubr.bf16.mxu0 0
    %2949 = vmatmul.mubr.bf16.gmra.mrb[0].mxu0 %v2695
    %v2950 = vpop.f32.mrb[0].mxu0
    %v2951 = vadd.f32 %v2743, %v2950
    %v2952 = vpop.f32.mrb[0].mxu0
    %v2953 = vpop.f32.mrb[0].mxu0
    %v2954 = vpop.f32.mrb[0].mxu0
    %2955 = vdwg.mxu0
    %2956 = vst [vmem:[#allocation3] sm:$0xff] %v2910
    %2957 = vst [vmem:[#allocation3 + $0x8] sm:$0xff] %v2912
    %2958 = vst [vmem:[#allocation3 + $0x10] sm:$0xff] %v2951
    %s2959 = scalar_lea.vmem %s8, 1
    %v2960 = vld [vmem:[%s2959] sm:$0x1]
    %v2961 = vpack.c.bf16 %v2960, %v2960
    %s2962 = scalar_lea.vmem [#allocation11], 192
    %v2963 = vld [vmem:[%s2962] sm:$0xff]
    %v2964 = vld [vmem:[%s2962 + $0x8] sm:$0xf]
    %v2965 = vld [vmem:[%s2962 + $0xc] sm:$0xff]
    %v2966 = vld [vmem:[%s2962 + $0x14] sm:$0xf]
    %v2967 = vld [vmem:[%s2962 + $0x18] sm:$0xff]
    %v2968 = vld [vmem:[%s2962 + $0x20] sm:$0xf]
    %v2969 = vld [vmem:[%s2962 + $0x24] sm:$0xff]
    %v2970 = vld [vmem:[%s2962 + $0x2c] sm:$0xf]
    %v2971 = vld [vmem:[%s2962 + $0x30] sm:$0xff]
    %v2972 = vld [vmem:[%s2962 + $0x38] sm:$0xf]
    %v2973 = vld [vmem:[%s2962 + $0x3c] sm:$0xff]
    %v2974 = vld [vmem:[%s2962 + $0x44] sm:$0xf]
    %v2975 = vld [vmem:[%s2962 + $0x48] sm:$0xff]
    %v2976 = vld [vmem:[%s2962 + $0x50] sm:$0xf]
    %v2977 = vld [vmem:[%s2962 + $0x54] sm:$0xff]
    %v2978 = vld [vmem:[%s2962 + $0x5c] sm:$0xf]
    %v2979 = vld [vmem:[%s2962 + $0x60] sm:$0xff]
    %v2980 = vld [vmem:[%s2962 + $0x68] sm:$0xf]
    %v2981 = vld [vmem:[%s2962 + $0x6c] sm:$0xff]
    %v2982 = vld [vmem:[%s2962 + $0x74] sm:$0xf]
    %v2983 = vld [vmem:[%s2962 + $0x78] sm:$0xff]
    %v2984 = vld [vmem:[%s2962 + $0x80] sm:$0xf]
    %v2985 = vld [vmem:[%s2962 + $0x84] sm:$0xff]
    %v2986 = vld [vmem:[%s2962 + $0x8c] sm:$0xf]
    %v2987 = vld [vmem:[%s2962 + $0x90] sm:$0xff]
    %v2988 = vld [vmem:[%s2962 + $0x98] sm:$0xf]
    %v2989 = vld [vmem:[%s2962 + $0x9c] sm:$0xff]
    %v2990 = vld [vmem:[%s2962 + $0xa4] sm:$0xf]
    %v2991 = vld [vmem:[%s2962 + $0xa8] sm:$0xff]
    %v2992 = vld [vmem:[%s2962 + $0xb0] sm:$0xf]
    %v2993 = vld [vmem:[%s2962 + $0xb4] sm:$0xff]
    %v2994 = vld [vmem:[%s2962 + $0xbc] sm:$0xf]
    %s2995 = scalar_lea.vmem %s5, 3
    %v2996 = vld [vmem:[%s2995] sm:$0x7]
    %v3029 = vunpack.c.l.b16 %v2963
    %v3030 = vunpack.c.h.b16 %v2963
    %v3031 = vunpack.c.l.b16 %v2964
    %v3032 = vunpack.c.l.b16 %v2965
    %v3033 = vunpack.c.h.b16 %v2965
    %v3034 = vunpack.c.l.b16 %v2966
    %v3035 = vunpack.c.l.b16 %v2967
    %v3036 = vunpack.c.h.b16 %v2967
    %v3037 = vunpack.c.l.b16 %v2968
    %v3038 = vunpack.c.l.b16 %v2969
    %v3039 = vunpack.c.h.b16 %v2969
    %v3040 = vunpack.c.l.b16 %v2970
    %v3041 = vunpack.c.l.b16 %v2971
    %v3042 = vunpack.c.h.b16 %v2971
    %v3043 = vunpack.c.l.b16 %v2972
    %v3044 = vunpack.c.l.b16 %v2973
    %v3045 = vunpack.c.h.b16 %v2973
    %v3046 = vunpack.c.l.b16 %v2974
    %v3047 = vunpack.c.l.b16 %v2975
    %v3048 = vunpack.c.h.b16 %v2975
    %v3049 = vunpack.c.l.b16 %v2976
    %v3050 = vunpack.c.l.b16 %v2977
    %v3051 = vunpack.c.h.b16 %v2977
    %v3052 = vunpack.c.l.b16 %v2978
    %v3053 = vunpack.c.l.b16 %v2979
    %v3054 = vunpack.c.h.b16 %v2979
    %v3055 = vunpack.c.l.b16 %v2980
    %v3056 = vunpack.c.l.b16 %v2981
    %v3057 = vunpack.c.h.b16 %v2981
    %v3058 = vunpack.c.l.b16 %v2982
    %v3059 = vunpack.c.l.b16 %v2983
    %v3060 = vunpack.c.h.b16 %v2983
    %v3061 = vunpack.c.l.b16 %v2984
    %v3062 = vunpack.c.l.b16 %v2985
    %v3063 = vunpack.c.h.b16 %v2985
    %v3064 = vunpack.c.l.b16 %v2986
    %v3065 = vunpack.c.l.b16 %v2987
    %v3066 = vunpack.c.h.b16 %v2987
    %v3067 = vunpack.c.l.b16 %v2988
    %v3068 = vunpack.c.l.b16 %v2989
    %v3069 = vunpack.c.h.b16 %v2989
    %v3070 = vunpack.c.l.b16 %v2990
    %v3071 = vunpack.c.l.b16 %v2991
    %v3072 = vunpack.c.h.b16 %v2991
    %v3073 = vunpack.c.l.b16 %v2992
    %v3074 = vunpack.c.l.b16 %v2993
    %v3075 = vunpack.c.h.b16 %v2993
    %v3076 = vunpack.c.l.b16 %v2994
    %v3077 = vpack.c.b16 %v3032, %v3029
    %v3078 = vpack.c.b16 %v3033, %v3030
    %v3079 = vpack.c.b16 %v3034, %v3031
    %v3080 = vpack.c.b16 %v3038, %v3035
    %v3081 = vpack.c.b16 %v3039, %v3036
    %v3082 = vpack.c.b16 %v3040, %v3037
    %v3083 = vpack.c.b16 %v3044, %v3041
    %v3084 = vpack.c.b16 %v3045, %v3042
    %v3085 = vpack.c.b16 %v3046, %v3043
    %v3086 = vpack.c.b16 %v3050, %v3047
    %v3087 = vpack.c.b16 %v3051, %v3048
    %v3088 = vpack.c.b16 %v3052, %v3049
    %v3089 = vpack.c.b16 %v3056, %v3053
    %v3090 = vpack.c.b16 %v3057, %v3054
    %v3091 = vpack.c.b16 %v3058, %v3055
    %v3092 = vpack.c.b16 %v3062, %v3059
    %v3093 = vpack.c.b16 %v3063, %v3060
    %v3094 = vpack.c.b16 %v3064, %v3061
    %v3095 = vpack.c.b16 %v3068, %v3065
    %v3096 = vpack.c.b16 %v3069, %v3066
    %v3097 = vpack.c.b16 %v3070, %v3067
    %v3098 = vpack.c.b16 %v3074, %v3071
    %v3099 = vpack.c.b16 %v3075, %v3072
    %v3100 = vpack.c.b16 %v3076, %v3073
    %v3126 = vlaneseq
    %v3127 = vshrl.u32 %v3126, 7
    %v3128 = vsub.s32 0, %v3127
    %v3129 = vrot.slane %v2996, %v3128
    %v3130 = vlaneseq
    %v3131 = vshrl.u32 %v3130, 7
    %v3132 = vsub.s32 1, %v3131
    %v3133 = vrot.slane %v2996, %v3132
    %v3134 = vlaneseq
    %v3135 = vshrl.u32 %v3134, 7
    %v3136 = vsub.s32 2, %v3135
    %v3137 = vrot.slane %v2996, %v3136
    %3141 = vmatprep.subr.bf16.mxu0 %v3078
    %3142 = vmatpush1.bf16.msra.mxu0 %v3077
    %3143 = vmatprep.subr.bf16.mxu0 %v3081
    %3144 = vmatpush1.bf16.msra.mxu0 %v3080
    %3145 = vmatprep.subr.bf16.mxu0 %v3084
    %3146 = vmatpush1.bf16.msra.mxu0 %v3083
    %3147 = vmatprep.subr.bf16.mxu0 %v3087
    %3148 = vmatpush1.bf16.msra.mxu0 %v3086
    %3149 = vmatprep.subr.bf16.mxu0 %v3090
    %3150 = vmatpush1.bf16.msra.mxu0 %v3089
    %3151 = vmatprep.subr.bf16.mxu0 %v3093
    %3152 = vmatpush1.bf16.msra.mxu0 %v3092
    %3153 = vmatprep.subr.bf16.mxu0 %v3096
    %3154 = vmatpush1.bf16.msra.mxu0 %v3095
    %3155 = vmatprep.subr.bf16.mxu0 %v3099
    %3156 = vmatpush1.bf16.msra.mxu0 %v3098
    %3157 = vmatprep.subr.bf16.mxu0 0
    %3158 = vmatpush1.bf16.msra.mxu0 0
    %3159 = vmatprep.subr.bf16.mxu0 0
    %3160 = vmatpush1.bf16.msra.mxu0 0
    %3161 = vmatprep.subr.bf16.mxu0 0
    %3162 = vmatpush1.bf16.msra.mxu0 0
    %3163 = vmatprep.subr.bf16.mxu0 0
    %3164 = vmatpush1.bf16.msra.mxu0 0
    %3165 = vmatprep.subr.bf16.mxu0 0
    %3166 = vmatpush1.bf16.msra.mxu0 0
    %3167 = vmatprep.subr.bf16.mxu0 0
    %3168 = vmatpush1.bf16.msra.mxu0 0
    %3169 = vmatprep.subr.bf16.mxu0 0
    %3170 = vmatpush1.bf16.msra.mxu0 0
    %3171 = vmatprep.subr.bf16.mxu0 0
    %3172 = vmatpush1.bf16.msra.mxu0 0
    %3173 = vmatprep.mubr.bf16.mxu0 0
    %3174 = vmatmul.mubr.bf16.gmra.mrb[0].mxu0 %v2961
    %v3175 = vpop.f32.mrb[0].mxu0
    %v3176 = vadd.f32 %v3129, %v3175
    %v3177 = vpop.f32.mrb[0].mxu0
    %v3178 = vadd.f32 %v3133, %v3177
    %v3179 = vpop.f32.mrb[0].mxu0
    %v3180 = vpop.f32.mrb[0].mxu0
    %3181 = vdwg.mxu0
    %3182 = vmatprep.subr.bf16.mxu0 0
    %3183 = vmatpush1.bf16.msra.mxu0 %v3079
    %3184 = vmatprep.subr.bf16.mxu0 0
    %3185 = vmatpush1.bf16.msra.mxu0 %v3082
    %3186 = vmatprep.subr.bf16.mxu0 0
    %3187 = vmatpush1.bf16.msra.mxu0 %v3085
    %3188 = vmatprep.subr.bf16.mxu0 0
    %3189 = vmatpush1.bf16.msra.mxu0 %v3088
    %3190 = vmatprep.subr.bf16.mxu0 0
    %3191 = vmatpush1.bf16.msra.mxu0 %v3091
    %3192 = vmatprep.subr.bf16.mxu0 0
    %3193 = vmatpush1.bf16.msra.mxu0 %v3094
    %3194 = vmatprep.subr.bf16.mxu0 0
    %3195 = vmatpush1.bf16.msra.mxu0 %v3097
    %3196 = vmatprep.subr.bf16.mxu0 0
    %3197 = vmatpush1.bf16.msra.mxu0 %v3100
    %3198 = vmatprep.subr.bf16.mxu0 0
    %3199 = vmatpush1.bf16.msra.mxu0 0
    %3200 = vmatprep.subr.bf16.mxu0 0
    %3201 = vmatpush1.bf16.msra.mxu0 0
    %3202 = vmatprep.subr.bf16.mxu0 0
    %3203 = vmatpush1.bf16.msra.mxu0 0
    %3204 = vmatprep.subr.bf16.mxu0 0
    %3205 = vmatpush1.bf16.msra.mxu0 0
    %3206 = vmatprep.subr.bf16.mxu0 0
    %3207 = vmatpush1.bf16.msra.mxu0 0
    %3208 = vmatprep.subr.bf16.mxu0 0
    %3209 = vmatpush1.bf16.msra.mxu0 0
    %3210 = vmatprep.subr.bf16.mxu0 0
    %3211 = vmatpush1.bf16.msra.mxu0 0
    %3212 = vmatprep.subr.bf16.mxu0 0
    %3213 = vmatpush1.bf16.msra.mxu0 0
    %3214 = vmatprep.mubr.bf16.mxu0 0
    %3215 = vmatmul.mubr.bf16.gmra.mrb[0].mxu0 %v2961
    %v3216 = vpop.f32.mrb[0].mxu0
    %v3217 = vadd.f32 %v3137, %v3216
    %v3218 = vpop.f32.mrb[0].mxu0
    %v3219 = vpop.f32.mrb[0].mxu0
    %v3220 = vpop.f32.mrb[0].mxu0
    %3221 = vdwg.mxu0
    %v3222 = vld [vmem:[#allocation3] ss:$8 sm:$0x7]
    %v3223 = vadd.f32 %v3222, %v3176
    %v3224 = vxor.u32 %v3223, 2147483648
    %v3225 = vmul.f32 %v3224, 1.442695
    %v3226 = vpow.pop %v3225
    %v3227 = vadd.f32 %v3226, 1.0
    %v3228 = vrcp.pop %v3227
    %v3229 = vmul.f32 1.0, %v3228
    %v3231 = vrot.slane %v3222, 1
    %v3233 = vadd.f32 %v3231, %v3178
    %v3234 = vxor.u32 %v3233, 2147483648
    %v3235 = vmul.f32 %v3234, 1.442695
    %v3236 = vpow.pop %v3235
    %v3237 = vadd.f32 %v3236, 1.0
    %v3238 = vrcp.pop %v3237
    %v3239 = vmul.f32 1.0, %v3238
    %v3240 = vmul.f32 %v3229, %v3217
    %v3241 = vrot.slane %v3222, 2
    %v3243 = vadd.f32 %v3241, %v3240
    %v3244 = vtanh.pop %v3243
    %v3245 = vsub.f32 1.0, %v3239
    %v3246 = vmul.f32 %v3245, %v3244
    %v3247 = vmul.f32 %v3239, %v2960
    %v3248 = vadd.f32 %v3246, %v3247
    %3249 = vst [vmem:[#allocation2] sm:$0x1] %v3248
    %v3250 = vpack.c.bf16 %v3248, %v3248
    %v3251 = vld [vmem:[%s2962] sm:$0xff]
    %v3252 = vld [vmem:[%s2962 + $0x8] sm:$0xf]
    %v3253 = vld [vmem:[%s2962 + $0xc] sm:$0xff]
    %v3254 = vld [vmem:[%s2962 + $0x14] sm:$0xf]
    %v3255 = vld [vmem:[%s2962 + $0x18] sm:$0xff]
    %v3256 = vld [vmem:[%s2962 + $0x20] sm:$0xf]
    %v3257 = vld [vmem:[%s2962 + $0x24] sm:$0xff]
    %v3258 = vld [vmem:[%s2962 + $0x2c] sm:$0xf]
    %v3259 = vld [vmem:[%s2962 + $0x30] sm:$0xff]
    %v3260 = vld [vmem:[%s2962 + $0x38] sm:$0xf]
    %v3261 = vld [vmem:[%s2962 + $0x3c] sm:$0xff]
    %v3262 = vld [vmem:[%s2962 + $0x44] sm:$0xf]
    %v3263 = vld [vmem:[%s2962 + $0x48] sm:$0xff]
    %v3264 = vld [vmem:[%s2962 + $0x50] sm:$0xf]
    %v3265 = vld [vmem:[%s2962 + $0x54] sm:$0xff]
    %v3266 = vld [vmem:[%s2962 + $0x5c] sm:$0xf]
    %v3267 = vld [vmem:[%s2962 + $0x60] sm:$0xff]
    %v3268 = vld [vmem:[%s2962 + $0x68] sm:$0xf]
    %v3269 = vld [vmem:[%s2962 + $0x6c] sm:$0xff]
    %v3270 = vld [vmem:[%s2962 + $0x74] sm:$0xf]
    %v3271 = vld [vmem:[%s2962 + $0x78] sm:$0xff]
    %v3272 = vld [vmem:[%s2962 + $0x80] sm:$0xf]
    %v3273 = vld [vmem:[%s2962 + $0x84] sm:$0xff]
    %v3274 = vld [vmem:[%s2962 + $0x8c] sm:$0xf]
    %v3275 = vld [vmem:[%s2962 + $0x90] sm:$0xff]
    %v3276 = vld [vmem:[%s2962 + $0x98] sm:$0xf]
    %v3277 = vld [vmem:[%s2962 + $0x9c] sm:$0xff]
    %v3278 = vld [vmem:[%s2962 + $0xa4] sm:$0xf]
    %v3279 = vld [vmem:[%s2962 + $0xa8] sm:$0xff]
    %v3280 = vld [vmem:[%s2962 + $0xb0] sm:$0xf]
    %v3281 = vld [vmem:[%s2962 + $0xb4] sm:$0xff]
    %v3282 = vld [vmem:[%s2962 + $0xbc] sm:$0xf]
    %v3283 = vld [vmem:[%s2995] sm:$0x7]
    %v3316 = vunpack.c.l.b16 %v3251
    %v3317 = vunpack.c.h.b16 %v3251
    %v3318 = vunpack.c.l.b16 %v3252
    %v3319 = vunpack.c.l.b16 %v3253
    %v3320 = vunpack.c.h.b16 %v3253
    %v3321 = vunpack.c.l.b16 %v3254
    %v3322 = vunpack.c.l.b16 %v3255
    %v3323 = vunpack.c.h.b16 %v3255
    %v3324 = vunpack.c.l.b16 %v3256
    %v3325 = vunpack.c.l.b16 %v3257
    %v3326 = vunpack.c.h.b16 %v3257
    %v3327 = vunpack.c.l.b16 %v3258
    %v3328 = vunpack.c.l.b16 %v3259
    %v3329 = vunpack.c.h.b16 %v3259
    %v3330 = vunpack.c.l.b16 %v3260
    %v3331 = vunpack.c.l.b16 %v3261
    %v3332 = vunpack.c.h.b16 %v3261
    %v3333 = vunpack.c.l.b16 %v3262
    %v3334 = vunpack.c.l.b16 %v3263
    %v3335 = vunpack.c.h.b16 %v3263
    %v3336 = vunpack.c.l.b16 %v3264
    %v3337 = vunpack.c.l.b16 %v3265
    %v3338 = vunpack.c.h.b16 %v3265
    %v3339 = vunpack.c.l.b16 %v3266
    %v3340 = vunpack.c.l.b16 %v3267
    %v3341 = vunpack.c.h.b16 %v3267
    %v3342 = vunpack.c.l.b16 %v3268
    %v3343 = vunpack.c.l.b16 %v3269
    %v3344 = vunpack.c.h.b16 %v3269
    %v3345 = vunpack.c.l.b16 %v3270
    %v3346 = vunpack.c.l.b16 %v3271
    %v3347 = vunpack.c.h.b16 %v3271
    %v3348 = vunpack.c.l.b16 %v3272
    %v3349 = vunpack.c.l.b16 %v3273
    %v3350 = vunpack.c.h.b16 %v3273
    %v3351 = vunpack.c.l.b16 %v3274
    %v3352 = vunpack.c.l.b16 %v3275
    %v3353 = vunpack.c.h.b16 %v3275
    %v3354 = vunpack.c.l.b16 %v3276
    %v3355 = vunpack.c.l.b16 %v3277
    %v3356 = vunpack.c.h.b16 %v3277
    %v3357 = vunpack.c.l.b16 %v3278
    %v3358 = vunpack.c.l.b16 %v3279
    %v3359 = vunpack.c.h.b16 %v3279
    %v3360 = vunpack.c.l.b16 %v3280
    %v3361 = vunpack.c.l.b16 %v3281
    %v3362 = vunpack.c.h.b16 %v3281
    %v3363 = vunpack.c.l.b16 %v3282
    %v3364 = vpack.c.b16 %v3319, %v3316
    %v3365 = vpack.c.b16 %v3320, %v3317
    %v3366 = vpack.c.b16 %v3321, %v3318
    %v3367 = vpack.c.b16 %v3325, %v3322
    %v3368 = vpack.c.b16 %v3326, %v3323
    %v3369 = vpack.c.b16 %v3327, %v3324
    %v3370 = vpack.c.b16 %v3331, %v3328
    %v3371 = vpack.c.b16 %v3332, %v3329
    %v3372 = vpack.c.b16 %v3333, %v3330
    %v3373 = vpack.c.b16 %v3337, %v3334
    %v3374 = vpack.c.b16 %v3338, %v3335
    %v3375 = vpack.c.b16 %v3339, %v3336
    %v3376 = vpack.c.b16 %v3343, %v3340
    %v3377 = vpack.c.b16 %v3344, %v3341
    %v3378 = vpack.c.b16 %v3345, %v3342
    %v3379 = vpack.c.b16 %v3349, %v3346
    %v3380 = vpack.c.b16 %v3350, %v3347
    %v3381 = vpack.c.b16 %v3351, %v3348
    %v3382 = vpack.c.b16 %v3355, %v3352
    %v3383 = vpack.c.b16 %v3356, %v3353
    %v3384 = vpack.c.b16 %v3357, %v3354
    %v3385 = vpack.c.b16 %v3361, %v3358
    %v3386 = vpack.c.b16 %v3362, %v3359
    %v3387 = vpack.c.b16 %v3363, %v3360
    %v3413 = vlaneseq
    %v3414 = vshrl.u32 %v3413, 7
    %v3415 = vsub.s32 0, %v3414
    %v3416 = vrot.slane %v3283, %v3415
    %v3417 = vlaneseq
    %v3418 = vshrl.u32 %v3417, 7
    %v3419 = vsub.s32 1, %v3418
    %v3420 = vrot.slane %v3283, %v3419
    %v3421 = vlaneseq
    %v3422 = vshrl.u32 %v3421, 7
    %v3423 = vsub.s32 2, %v3422
    %v3424 = vrot.slane %v3283, %v3423
    %3428 = vmatprep.subr.bf16.mxu0 %v3365
    %3429 = vmatpush1.bf16.msra.mxu0 %v3364
    %3430 = vmatprep.subr.bf16.mxu0 %v3368
    %3431 = vmatpush1.bf16.msra.mxu0 %v3367
    %3432 = vmatprep.subr.bf16.mxu0 %v3371
    %3433 = vmatpush1.bf16.msra.mxu0 %v3370
    %3434 = vmatprep.subr.bf16.mxu0 %v3374
    %3435 = vmatpush1.bf16.msra.mxu0 %v3373
    %3436 = vmatprep.subr.bf16.mxu0 %v3377
    %3437 = vmatpush1.bf16.msra.mxu0 %v3376
    %3438 = vmatprep.subr.bf16.mxu0 %v3380
    %3439 = vmatpush1.bf16.msra.mxu0 %v3379
    %3440 = vmatprep.subr.bf16.mxu0 %v3383
    %3441 = vmatpush1.bf16.msra.mxu0 %v3382
    %3442 = vmatprep.subr.bf16.mxu0 %v3386
    %3443 = vmatpush1.bf16.msra.mxu0 %v3385
    %3444 = vmatprep.subr.bf16.mxu0 0
    %3445 = vmatpush1.bf16.msra.mxu0 0
    %3446 = vmatprep.subr.bf16.mxu0 0
    %3447 = vmatpush1.bf16.msra.mxu0 0
    %3448 = vmatprep.subr.bf16.mxu0 0
    %3449 = vmatpush1.bf16.msra.mxu0 0
    %3450 = vmatprep.subr.bf16.mxu0 0
    %3451 = vmatpush1.bf16.msra.mxu0 0
    %3452 = vmatprep.subr.bf16.mxu0 0
    %3453 = vmatpush1.bf16.msra.mxu0 0
    %3454 = vmatprep.subr.bf16.mxu0 0
    %3455 = vmatpush1.bf16.msra.mxu0 0
    %3456 = vmatprep.subr.bf16.mxu0 0
    %3457 = vmatpush1.bf16.msra.mxu0 0
    %3458 = vmatprep.subr.bf16.mxu0 0
    %3459 = vmatpush1.bf16.msra.mxu0 0
    %3460 = vmatprep.mubr.bf16.mxu0 0
    %3461 = vmatmul.mubr.bf16.gmra.mrb[0].mxu0 %v3250
    %v3462 = vpop.f32.mrb[0].mxu0
    %v3463 = vadd.f32 %v3416, %v3462
    %v3464 = vpop.f32.mrb[0].mxu0
    %v3465 = vadd.f32 %v3420, %v3464
    %v3466 = vpop.f32.mrb[0].mxu0
    %v3467 = vpop.f32.mrb[0].mxu0
    %3468 = vdwg.mxu0
    %3469 = vmatprep.subr.bf16.mxu0 0
    %3470 = vmatpush1.bf16.msra.mxu0 %v3366
    %3471 = vmatprep.subr.bf16.mxu0 0
    %3472 = vmatpush1.bf16.msra.mxu0 %v3369
    %3473 = vmatprep.subr.bf16.mxu0 0
    %3474 = vmatpush1.bf16.msra.mxu0 %v3372
    %3475 = vmatprep.subr.bf16.mxu0 0
    %3476 = vmatpush1.bf16.msra.mxu0 %v3375
    %3477 = vmatprep.subr.bf16.mxu0 0
    %3478 = vmatpush1.bf16.msra.mxu0 %v3378
    %3479 = vmatprep.subr.bf16.mxu0 0
    %3480 = vmatpush1.bf16.msra.mxu0 %v3381
    %3481 = vmatprep.subr.bf16.mxu0 0
    %3482 = vmatpush1.bf16.msra.mxu0 %v3384
    %3483 = vmatprep.subr.bf16.mxu0 0
    %3484 = vmatpush1.bf16.msra.mxu0 %v3387
    %3485 = vmatprep.subr.bf16.mxu0 0
    %3486 = vmatpush1.bf16.msra.mxu0 0
    %3487 = vmatprep.subr.bf16.mxu0 0
    %3488 = vmatpush1.bf16.msra.mxu0 0
    %3489 = vmatprep.subr.bf16.mxu0 0
    %3490 = vmatpush1.bf16.msra.mxu0 0
    %3491 = vmatprep.subr.bf16.mxu0 0
    %3492 = vmatpush1.bf16.msra.mxu0 0
    %3493 = vmatprep.subr.bf16.mxu0 0
    %3494 = vmatpush1.bf16.msra.mxu0 0
    %3495 = vmatprep.subr.bf16.mxu0 0
    %3496 = vmatpush1.bf16.msra.mxu0 0
    %3497 = vmatprep.subr.bf16.mxu0 0
    %3498 = vmatpush1.bf16.msra.mxu0 0
    %3499 = vmatprep.subr.bf16.mxu0 0
    %3500 = vmatpush1.bf16.msra.mxu0 0
    %3501 = vmatprep.mubr.bf16.mxu0 0
    %3502 = vmatmul.mubr.bf16.gmra.mrb[0].mxu0 %v3250
    %v3503 = vpop.f32.mrb[0].mxu0
    %v3504 = vadd.f32 %v3424, %v3503
    %v3505 = vpop.f32.mrb[0].mxu0
    %v3506 = vpop.f32.mrb[0].mxu0
    %v3507 = vpop.f32.mrb[0].mxu0
    %3508 = vdwg.mxu0
    %v3509 = vld [vmem:[%s936] ss:$8 sm:$0x7]
    %v3510 = vadd.f32 %v3509, %v3463
    %v3511 = vxor.u32 %v3510, 2147483648
    %v3512 = vmul.f32 %v3511, 1.442695
    %v3513 = vpow.pop %v3512
    %v3514 = vadd.f32 %v3513, 1.0
    %v3515 = vrcp.pop %v3514
    %v3516 = vmul.f32 1.0, %v3515
    %v3518 = vrot.slane %v3509, 1
    %v3520 = vadd.f32 %v3518, %v3465
    %v3521 = vxor.u32 %v3520, 2147483648
    %v3522 = vmul.f32 %v3521, 1.442695
    %v3523 = vpow.pop %v3522
    %v3524 = vadd.f32 %v3523, 1.0
    %v3525 = vrcp.pop %v3524
    %v3526 = vmul.f32 1.0, %v3525
    %v3527 = vmul.f32 %v3516, %v3504
    %v3528 = vrot.slane %v3509, 2
    %v3530 = vadd.f32 %v3528, %v3527
    %v3531 = vtanh.pop %v3530
    %v3532 = vsub.f32 1.0, %v3526
    %v3533 = vmul.f32 %v3532, %v3531
    %v3534 = vmul.f32 %v3526, %v3248
    %v3535 = vadd.f32 %v3533, %v3534
    %3536 = vst [vmem:[#allocation2 + $0x1] sm:$0x1] %v3535
    %v3537 = vpack.c.bf16 %v3535, %v3535
    %v3538 = vld [vmem:[%s2962] sm:$0xff]
    %v3539 = vld [vmem:[%s2962 + $0x8] sm:$0xf]
    %v3540 = vld [vmem:[%s2962 + $0xc] sm:$0xff]
    %v3541 = vld [vmem:[%s2962 + $0x14] sm:$0xf]
    %v3542 = vld [vmem:[%s2962 + $0x18] sm:$0xff]
    %v3543 = vld [vmem:[%s2962 + $0x20] sm:$0xf]
    %v3544 = vld [vmem:[%s2962 + $0x24] sm:$0xff]
    %v3545 = vld [vmem:[%s2962 + $0x2c] sm:$0xf]
    %v3546 = vld [vmem:[%s2962 + $0x30] sm:$0xff]
    %v3547 = vld [vmem:[%s2962 + $0x38] sm:$0xf]
    %v3548 = vld [vmem:[%s2962 + $0x3c] sm:$0xff]
    %v3549 = vld [vmem:[%s2962 + $0x44] sm:$0xf]
    %v3550 = vld [vmem:[%s2962 + $0x48] sm:$0xff]
    %v3551 = vld [vmem:[%s2962 + $0x50] sm:$0xf]
    %v3552 = vld [vmem:[%s2962 + $0x54] sm:$0xff]
    %v3553 = vld [vmem:[%s2962 + $0x5c] sm:$0xf]
    %v3554 = vld [vmem:[%s2962 + $0x60] sm:$0xff]
    %v3555 = vld [vmem:[%s2962 + $0x68] sm:$0xf]
    %v3556 = vld [vmem:[%s2962 + $0x6c] sm:$0xff]
    %v3557 = vld [vmem:[%s2962 + $0x74] sm:$0xf]
    %v3558 = vld [vmem:[%s2962 + $0x78] sm:$0xff]
    %v3559 = vld [vmem:[%s2962 + $0x80] sm:$0xf]
    %v3560 = vld [vmem:[%s2962 + $0x84] sm:$0xff]
    %v3561 = vld [vmem:[%s2962 + $0x8c] sm:$0xf]
    %v3562 = vld [vmem:[%s2962 + $0x90] sm:$0xff]
    %v3563 = vld [vmem:[%s2962 + $0x98] sm:$0xf]
    %v3564 = vld [vmem:[%s2962 + $0x9c] sm:$0xff]
    %v3565 = vld [vmem:[%s2962 + $0xa4] sm:$0xf]
    %v3566 = vld [vmem:[%s2962 + $0xa8] sm:$0xff]
    %v3567 = vld [vmem:[%s2962 + $0xb0] sm:$0xf]
    %v3568 = vld [vmem:[%s2962 + $0xb4] sm:$0xff]
    %v3569 = vld [vmem:[%s2962 + $0xbc] sm:$0xf]
    %v3570 = vld [vmem:[%s2995] sm:$0x7]
    %v3603 = vunpack.c.l.b16 %v3538
    %v3604 = vunpack.c.h.b16 %v3538
    %v3605 = vunpack.c.l.b16 %v3539
    %v3606 = vunpack.c.l.b16 %v3540
    %v3607 = vunpack.c.h.b16 %v3540
    %v3608 = vunpack.c.l.b16 %v3541
    %v3609 = vunpack.c.l.b16 %v3542
    %v3610 = vunpack.c.h.b16 %v3542
    %v3611 = vunpack.c.l.b16 %v3543
    %v3612 = vunpack.c.l.b16 %v3544
    %v3613 = vunpack.c.h.b16 %v3544
    %v3614 = vunpack.c.l.b16 %v3545
    %v3615 = vunpack.c.l.b16 %v3546
    %v3616 = vunpack.c.h.b16 %v3546
    %v3617 = vunpack.c.l.b16 %v3547
    %v3618 = vunpack.c.l.b16 %v3548
    %v3619 = vunpack.c.h.b16 %v3548
    %v3620 = vunpack.c.l.b16 %v3549
    %v3621 = vunpack.c.l.b16 %v3550
    %v3622 = vunpack.c.h.b16 %v3550
    %v3623 = vunpack.c.l.b16 %v3551
    %v3624 = vunpack.c.l.b16 %v3552
    %v3625 = vunpack.c.h.b16 %v3552
    %v3626 = vunpack.c.l.b16 %v3553
    %v3627 = vunpack.c.l.b16 %v3554
    %v3628 = vunpack.c.h.b16 %v3554
    %v3629 = vunpack.c.l.b16 %v3555
    %v3630 = vunpack.c.l.b16 %v3556
    %v3631 = vunpack.c.h.b16 %v3556
    %v3632 = vunpack.c.l.b16 %v3557
    %v3633 = vunpack.c.l.b16 %v3558
    %v3634 = vunpack.c.h.b16 %v3558
    %v3635 = vunpack.c.l.b16 %v3559
    %v3636 = vunpack.c.l.b16 %v3560
    %v3637 = vunpack.c.h.b16 %v3560
    %v3638 = vunpack.c.l.b16 %v3561
    %v3639 = vunpack.c.l.b16 %v3562
    %v3640 = vunpack.c.h.b16 %v3562
    %v3641 = vunpack.c.l.b16 %v3563
    %v3642 = vunpack.c.l.b16 %v3564
    %v3643 = vunpack.c.h.b16 %v3564
    %v3644 = vunpack.c.l.b16 %v3565
    %v3645 = vunpack.c.l.b16 %v3566
    %v3646 = vunpack.c.h.b16 %v3566
    %v3647 = vunpack.c.l.b16 %v3567
    %v3648 = vunpack.c.l.b16 %v3568
    %v3649 = vunpack.c.h.b16 %v3568
    %v3650 = vunpack.c.l.b16 %v3569
    %v3651 = vpack.c.b16 %v3606, %v3603
    %v3652 = vpack.c.b16 %v3607, %v3604
    %v3653 = vpack.c.b16 %v3608, %v3605
    %v3654 = vpack.c.b16 %v3612, %v3609
    %v3655 = vpack.c.b16 %v3613, %v3610
    %v3656 = vpack.c.b16 %v3614, %v3611
    %v3657 = vpack.c.b16 %v3618, %v3615
    %v3658 = vpack.c.b16 %v3619, %v3616
    %v3659 = vpack.c.b16 %v3620, %v3617
    %v3660 = vpack.c.b16 %v3624, %v3621
    %v3661 = vpack.c.b16 %v3625, %v3622
    %v3662 = vpack.c.b16 %v3626, %v3623
    %v3663 = vpack.c.b16 %v3630, %v3627
    %v3664 = vpack.c.b16 %v3631, %v3628
    %v3665 = vpack.c.b16 %v3632, %v3629
    %v3666 = vpack.c.b16 %v3636, %v3633
    %v3667 = vpack.c.b16 %v3637, %v3634
    %v3668 = vpack.c.b16 %v3638, %v3635
    %v3669 = vpack.c.b16 %v3642, %v3639
    %v3670 = vpack.c.b16 %v3643, %v3640
    %v3671 = vpack.c.b16 %v3644, %v3641
    %v3672 = vpack.c.b16 %v3648, %v3645
    %v3673 = vpack.c.b16 %v3649, %v3646
    %v3674 = vpack.c.b16 %v3650, %v3647
    %v3700 = vlaneseq
    %v3701 = vshrl.u32 %v3700, 7
    %v3702 = vsub.s32 0, %v3701
    %v3703 = vrot.slane %v3570, %v3702
    %v3704 = vlaneseq
    %v3705 = vshrl.u32 %v3704, 7
    %v3706 = vsub.s32 1, %v3705
    %v3707 = vrot.slane %v3570, %v3706
    %v3708 = vlaneseq
    %v3709 = vshrl.u32 %v3708, 7
    %v3710 = vsub.s32 2, %v3709
    %v3711 = vrot.slane %v3570, %v3710
    %3715 = vmatprep.subr.bf16.mxu0 %v3652
    %3716 = vmatpush1.bf16.msra.mxu0 %v3651
    %3717 = vmatprep.subr.bf16.mxu0 %v3655
    %3718 = vmatpush1.bf16.msra.mxu0 %v3654
    %3719 = vmatprep.subr.bf16.mxu0 %v3658
    %3720 = vmatpush1.bf16.msra.mxu0 %v3657
    %3721 = vmatprep.subr.bf16.mxu0 %v3661
    %3722 = vmatpush1.bf16.msra.mxu0 %v3660
    %3723 = vmatprep.subr.bf16.mxu0 %v3664
    %3724 = vmatpush1.bf16.msra.mxu0 %v3663
    %3725 = vmatprep.subr.bf16.mxu0 %v3667
    %3726 = vmatpush1.bf16.msra.mxu0 %v3666
    %3727 = vmatprep.subr.bf16.mxu0 %v3670
    %3728 = vmatpush1.bf16.msra.mxu0 %v3669
    %3729 = vmatprep.subr.bf16.mxu0 %v3673
    %3730 = vmatpush1.bf16.msra.mxu0 %v3672
    %3731 = vmatprep.subr.bf16.mxu0 0
    %3732 = vmatpush1.bf16.msra.mxu0 0
    %3733 = vmatprep.subr.bf16.mxu0 0
    %3734 = vmatpush1.bf16.msra.mxu0 0
    %3735 = vmatprep.subr.bf16.mxu0 0
    %3736 = vmatpush1.bf16.msra.mxu0 0
    %3737 = vmatprep.subr.bf16.mxu0 0
    %3738 = vmatpush1.bf16.msra.mxu0 0
    %3739 = vmatprep.subr.bf16.mxu0 0
    %3740 = vmatpush1.bf16.msra.mxu0 0
    %3741 = vmatprep.subr.bf16.mxu0 0
    %3742 = vmatpush1.bf16.msra.mxu0 0
    %3743 = vmatprep.subr.bf16.mxu0 0
    %3744 = vmatpush1.bf16.msra.mxu0 0
    %3745 = vmatprep.subr.bf16.mxu0 0
    %3746 = vmatpush1.bf16.msra.mxu0 0
    %3747 = vmatprep.mubr.bf16.mxu0 0
    %3748 = vmatmul.mubr.bf16.gmra.mrb[0].mxu0 %v3537
    %v3749 = vpop.f32.mrb[0].mxu0
    %v3750 = vadd.f32 %v3703, %v3749
    %v3751 = vpop.f32.mrb[0].mxu0
    %v3752 = vadd.f32 %v3707, %v3751
    %v3753 = vpop.f32.mrb[0].mxu0
    %v3754 = vpop.f32.mrb[0].mxu0
    %3755 = vdwg.mxu0
    %3756 = vmatprep.subr.bf16.mxu0 0
    %3757 = vmatpush1.bf16.msra.mxu0 %v3653
    %3758 = vmatprep.subr.bf16.mxu0 0
    %3759 = vmatpush1.bf16.msra.mxu0 %v3656
    %3760 = vmatprep.subr.bf16.mxu0 0
    %3761 = vmatpush1.bf16.msra.mxu0 %v3659
    %3762 = vmatprep.subr.bf16.mxu0 0
    %3763 = vmatpush1.bf16.msra.mxu0 %v3662
    %3764 = vmatprep.subr.bf16.mxu0 0
    %3765 = vmatpush1.bf16.msra.mxu0 %v3665
    %3766 = vmatprep.subr.bf16.mxu0 0
    %3767 = vmatpush1.bf16.msra.mxu0 %v3668
    %3768 = vmatprep.subr.bf16.mxu0 0
    %3769 = vmatpush1.bf16.msra.mxu0 %v3671
    %3770 = vmatprep.subr.bf16.mxu0 0
    %3771 = vmatpush1.bf16.msra.mxu0 %v3674
    %3772 = vmatprep.subr.bf16.mxu0 0
    %3773 = vmatpush1.bf16.msra.mxu0 0
    %3774 = vmatprep.subr.bf16.mxu0 0
    %3775 = vmatpush1.bf16.msra.mxu0 0
    %3776 = vmatprep.subr.bf16.mxu0 0
    %3777 = vmatpush1.bf16.msra.mxu0 0
    %3778 = vmatprep.subr.bf16.mxu0 0
    %3779 = vmatpush1.bf16.msra.mxu0 0
    %3780 = vmatprep.subr.bf16.mxu0 0
    %3781 = vmatpush1.bf16.msra.mxu0 0
    %3782 = vmatprep.subr.bf16.mxu0 0
    %3783 = vmatpush1.bf16.msra.mxu0 0
    %3784 = vmatprep.subr.bf16.mxu0 0
    %3785 = vmatpush1.bf16.msra.mxu0 0
    %3786 = vmatprep.subr.bf16.mxu0 0
    %3787 = vmatpush1.bf16.msra.mxu0 0
    %3788 = vmatprep.mubr.bf16.mxu0 0
    %3789 = vmatmul.mubr.bf16.gmra.mrb[0].mxu0 %v3537
    %v3790 = vpop.f32.mrb[0].mxu0
    %v3791 = vadd.f32 %v3711, %v3790
    %v3792 = vpop.f32.mrb[0].mxu0
    %v3793 = vpop.f32.mrb[0].mxu0
    %v3794 = vpop.f32.mrb[0].mxu0
    %3795 = vdwg.mxu0
    %v3796 = vld [vmem:[%s1224] ss:$8 sm:$0x7]
    %v3797 = vadd.f32 %v3796, %v3750
    %v3798 = vxor.u32 %v3797, 2147483648
    %v3799 = vmul.f32 %v3798, 1.442695
    %v3800 = vpow.pop %v3799
    %v3801 = vadd.f32 %v3800, 1.0
    %v3802 = vrcp.pop %v3801
    %v3803 = vmul.f32 1.0, %v3802
    %v3805 = vrot.slane %v3796, 1
    %v3807 = vadd.f32 %v3805, %v3752
    %v3808 = vxor.u32 %v3807, 2147483648
    %v3809 = vmul.f32 %v3808, 1.442695
    %v3810 = vpow.pop %v3809
    %v3811 = vadd.f32 %v3810, 1.0
    %v3812 = vrcp.pop %v3811
    %v3813 = vmul.f32 1.0, %v3812
    %v3814 = vmul.f32 %v3803, %v3791
    %v3815 = vrot.slane %v3796, 2
    %v3817 = vadd.f32 %v3815, %v3814
    %v3818 = vtanh.pop %v3817
    %v3819 = vsub.f32 1.0, %v3813
    %v3820 = vmul.f32 %v3819, %v3818
    %v3821 = vmul.f32 %v3813, %v3535
    %v3822 = vadd.f32 %v3820, %v3821
    %3823 = vst [vmem:[#allocation2 + $0x2] sm:$0x1] %v3822
    %v3824 = vpack.c.bf16 %v3822, %v3822
    %v3825 = vld [vmem:[%s2962] sm:$0xff]
    %v3826 = vld [vmem:[%s2962 + $0x8] sm:$0xf]
    %v3827 = vld [vmem:[%s2962 + $0xc] sm:$0xff]
    %v3828 = vld [vmem:[%s2962 + $0x14] sm:$0xf]
    %v3829 = vld [vmem:[%s2962 + $0x18] sm:$0xff]
    %v3830 = vld [vmem:[%s2962 + $0x20] sm:$0xf]
    %v3831 = vld [vmem:[%s2962 + $0x24] sm:$0xff]
    %v3832 = vld [vmem:[%s2962 + $0x2c] sm:$0xf]
    %v3833 = vld [vmem:[%s2962 + $0x30] sm:$0xff]
    %v3834 = vld [vmem:[%s2962 + $0x38] sm:$0xf]
    %v3835 = vld [vmem:[%s2962 + $0x3c] sm:$0xff]
    %v3836 = vld [vmem:[%s2962 + $0x44] sm:$0xf]
    %v3837 = vld [vmem:[%s2962 + $0x48] sm:$0xff]
    %v3838 = vld [vmem:[%s2962 + $0x50] sm:$0xf]
    %v3839 = vld [vmem:[%s2962 + $0x54] sm:$0xff]
    %v3840 = vld [vmem:[%s2962 + $0x5c] sm:$0xf]
    %v3841 = vld [vmem:[%s2962 + $0x60] sm:$0xff]
    %v3842 = vld [vmem:[%s2962 + $0x68] sm:$0xf]
    %v3843 = vld [vmem:[%s2962 + $0x6c] sm:$0xff]
    %v3844 = vld [vmem:[%s2962 + $0x74] sm:$0xf]
    %v3845 = vld [vmem:[%s2962 + $0x78] sm:$0xff]
    %v3846 = vld [vmem:[%s2962 + $0x80] sm:$0xf]
    %v3847 = vld [vmem:[%s2962 + $0x84] sm:$0xff]
    %v3848 = vld [vmem:[%s2962 + $0x8c] sm:$0xf]
    %v3849 = vld [vmem:[%s2962 + $0x90] sm:$0xff]
    %v3850 = vld [vmem:[%s2962 + $0x98] sm:$0xf]
    %v3851 = vld [vmem:[%s2962 + $0x9c] sm:$0xff]
    %v3852 = vld [vmem:[%s2962 + $0xa4] sm:$0xf]
    %v3853 = vld [vmem:[%s2962 + $0xa8] sm:$0xff]
    %v3854 = vld [vmem:[%s2962 + $0xb0] sm:$0xf]
    %v3855 = vld [vmem:[%s2962 + $0xb4] sm:$0xff]
    %v3856 = vld [vmem:[%s2962 + $0xbc] sm:$0xf]
    %v3857 = vld [vmem:[%s2995] sm:$0x7]
    %v3890 = vunpack.c.l.b16 %v3825
    %v3891 = vunpack.c.h.b16 %v3825
    %v3892 = vunpack.c.l.b16 %v3826
    %v3893 = vunpack.c.l.b16 %v3827
    %v3894 = vunpack.c.h.b16 %v3827
    %v3895 = vunpack.c.l.b16 %v3828
    %v3896 = vunpack.c.l.b16 %v3829
    %v3897 = vunpack.c.h.b16 %v3829
    %v3898 = vunpack.c.l.b16 %v3830
    %v3899 = vunpack.c.l.b16 %v3831
    %v3900 = vunpack.c.h.b16 %v3831
    %v3901 = vunpack.c.l.b16 %v3832
    %v3902 = vunpack.c.l.b16 %v3833
    %v3903 = vunpack.c.h.b16 %v3833
    %v3904 = vunpack.c.l.b16 %v3834
    %v3905 = vunpack.c.l.b16 %v3835
    %v3906 = vunpack.c.h.b16 %v3835
    %v3907 = vunpack.c.l.b16 %v3836
    %v3908 = vunpack.c.l.b16 %v3837
    %v3909 = vunpack.c.h.b16 %v3837
    %v3910 = vunpack.c.l.b16 %v3838
    %v3911 = vunpack.c.l.b16 %v3839
    %v3912 = vunpack.c.h.b16 %v3839
    %v3913 = vunpack.c.l.b16 %v3840
    %v3914 = vunpack.c.l.b16 %v3841
    %v3915 = vunpack.c.h.b16 %v3841
    %v3916 = vunpack.c.l.b16 %v3842
    %v3917 = vunpack.c.l.b16 %v3843
    %v3918 = vunpack.c.h.b16 %v3843
    %v3919 = vunpack.c.l.b16 %v3844
    %v3920 = vunpack.c.l.b16 %v3845
    %v3921 = vunpack.c.h.b16 %v3845
    %v3922 = vunpack.c.l.b16 %v3846
    %v3923 = vunpack.c.l.b16 %v3847
    %v3924 = vunpack.c.h.b16 %v3847
    %v3925 = vunpack.c.l.b16 %v3848
    %v3926 = vunpack.c.l.b16 %v3849
    %v3927 = vunpack.c.h.b16 %v3849
    %v3928 = vunpack.c.l.b16 %v3850
    %v3929 = vunpack.c.l.b16 %v3851
    %v3930 = vunpack.c.h.b16 %v3851
    %v3931 = vunpack.c.l.b16 %v3852
    %v3932 = vunpack.c.l.b16 %v3853
    %v3933 = vunpack.c.h.b16 %v3853
    %v3934 = vunpack.c.l.b16 %v3854
    %v3935 = vunpack.c.l.b16 %v3855
    %v3936 = vunpack.c.h.b16 %v3855
    %v3937 = vunpack.c.l.b16 %v3856
    %v3938 = vpack.c.b16 %v3893, %v3890
    %v3939 = vpack.c.b16 %v3894, %v3891
    %v3940 = vpack.c.b16 %v3895, %v3892
    %v3941 = vpack.c.b16 %v3899, %v3896
    %v3942 = vpack.c.b16 %v3900, %v3897
    %v3943 = vpack.c.b16 %v3901, %v3898
    %v3944 = vpack.c.b16 %v3905, %v3902
    %v3945 = vpack.c.b16 %v3906, %v3903
    %v3946 = vpack.c.b16 %v3907, %v3904
    %v3947 = vpack.c.b16 %v3911, %v3908
    %v3948 = vpack.c.b16 %v3912, %v3909
    %v3949 = vpack.c.b16 %v3913, %v3910
    %v3950 = vpack.c.b16 %v3917, %v3914
    %v3951 = vpack.c.b16 %v3918, %v3915
    %v3952 = vpack.c.b16 %v3919, %v3916
    %v3953 = vpack.c.b16 %v3923, %v3920
    %v3954 = vpack.c.b16 %v3924, %v3921
    %v3955 = vpack.c.b16 %v3925, %v3922
    %v3956 = vpack.c.b16 %v3929, %v3926
    %v3957 = vpack.c.b16 %v3930, %v3927
    %v3958 = vpack.c.b16 %v3931, %v3928
    %v3959 = vpack.c.b16 %v3935, %v3932
    %v3960 = vpack.c.b16 %v3936, %v3933
    %v3961 = vpack.c.b16 %v3937, %v3934
    %v3987 = vlaneseq
    %v3988 = vshrl.u32 %v3987, 7
    %v3989 = vsub.s32 0, %v3988
    %v3990 = vrot.slane %v3857, %v3989
    %v3991 = vlaneseq
    %v3992 = vshrl.u32 %v3991, 7
    %v3993 = vsub.s32 1, %v3992
    %v3994 = vrot.slane %v3857, %v3993
    %v3995 = vlaneseq
    %v3996 = vshrl.u32 %v3995, 7
    %v3997 = vsub.s32 2, %v3996
    %v3998 = vrot.slane %v3857, %v3997
    %4002 = vmatprep.subr.bf16.mxu0 %v3939
    %4003 = vmatpush1.bf16.msra.mxu0 %v3938
    %4004 = vmatprep.subr.bf16.mxu0 %v3942
    %4005 = vmatpush1.bf16.msra.mxu0 %v3941
    %4006 = vmatprep.subr.bf16.mxu0 %v3945
    %4007 = vmatpush1.bf16.msra.mxu0 %v3944
    %4008 = vmatprep.subr.bf16.mxu0 %v3948
    %4009 = vmatpush1.bf16.msra.mxu0 %v3947
    %4010 = vmatprep.subr.bf16.mxu0 %v3951
    %4011 = vmatpush1.bf16.msra.mxu0 %v3950
    %4012 = vmatprep.subr.bf16.mxu0 %v3954
    %4013 = vmatpush1.bf16.msra.mxu0 %v3953
    %4014 = vmatprep.subr.bf16.mxu0 %v3957
    %4015 = vmatpush1.bf16.msra.mxu0 %v3956
    %4016 = vmatprep.subr.bf16.mxu0 %v3960
    %4017 = vmatpush1.bf16.msra.mxu0 %v3959
    %4018 = vmatprep.subr.bf16.mxu0 0
    %4019 = vmatpush1.bf16.msra.mxu0 0
    %4020 = vmatprep.subr.bf16.mxu0 0
    %4021 = vmatpush1.bf16.msra.mxu0 0
    %4022 = vmatprep.subr.bf16.mxu0 0
    %4023 = vmatpush1.bf16.msra.mxu0 0
    %4024 = vmatprep.subr.bf16.mxu0 0
    %4025 = vmatpush1.bf16.msra.mxu0 0
    %4026 = vmatprep.subr.bf16.mxu0 0
    %4027 = vmatpush1.bf16.msra.mxu0 0
    %4028 = vmatprep.subr.bf16.mxu0 0
    %4029 = vmatpush1.bf16.msra.mxu0 0
    %4030 = vmatprep.subr.bf16.mxu0 0
    %4031 = vmatpush1.bf16.msra.mxu0 0
    %4032 = vmatprep.subr.bf16.mxu0 0
    %4033 = vmatpush1.bf16.msra.mxu0 0
    %4034 = vmatprep.mubr.bf16.mxu0 0
    %4035 = vmatmul.mubr.bf16.gmra.mrb[0].mxu0 %v3824
    %v4036 = vpop.f32.mrb[0].mxu0
    %v4037 = vadd.f32 %v3990, %v4036
    %v4038 = vpop.f32.mrb[0].mxu0
    %v4039 = vadd.f32 %v3994, %v4038
    %v4040 = vpop.f32.mrb[0].mxu0
    %v4041 = vpop.f32.mrb[0].mxu0
    %4042 = vdwg.mxu0
    %4043 = vmatprep.subr.bf16.mxu0 0
    %4044 = vmatpush1.bf16.msra.mxu0 %v3940
    %4045 = vmatprep.subr.bf16.mxu0 0
    %4046 = vmatpush1.bf16.msra.mxu0 %v3943
    %4047 = vmatprep.subr.bf16.mxu0 0
    %4048 = vmatpush1.bf16.msra.mxu0 %v3946
    %4049 = vmatprep.subr.bf16.mxu0 0
    %4050 = vmatpush1.bf16.msra.mxu0 %v3949
    %4051 = vmatprep.subr.bf16.mxu0 0
    %4052 = vmatpush1.bf16.msra.mxu0 %v3952
    %4053 = vmatprep.subr.bf16.mxu0 0
    %4054 = vmatpush1.bf16.msra.mxu0 %v3955
    %4055 = vmatprep.subr.bf16.mxu0 0
    %4056 = vmatpush1.bf16.msra.mxu0 %v3958
    %4057 = vmatprep.subr.bf16.mxu0 0
    %4058 = vmatpush1.bf16.msra.mxu0 %v3961
    %4059 = vmatprep.subr.bf16.mxu0 0
    %4060 = vmatpush1.bf16.msra.mxu0 0
    %4061 = vmatprep.subr.bf16.mxu0 0
    %4062 = vmatpush1.bf16.msra.mxu0 0
    %4063 = vmatprep.subr.bf16.mxu0 0
    %4064 = vmatpush1.bf16.msra.mxu0 0
    %4065 = vmatprep.subr.bf16.mxu0 0
    %4066 = vmatpush1.bf16.msra.mxu0 0
    %4067 = vmatprep.subr.bf16.mxu0 0
    %4068 = vmatpush1.bf16.msra.mxu0 0
    %4069 = vmatprep.subr.bf16.mxu0 0
    %4070 = vmatpush1.bf16.msra.mxu0 0
    %4071 = vmatprep.subr.bf16.mxu0 0
    %4072 = vmatpush1.bf16.msra.mxu0 0
    %4073 = vmatprep.subr.bf16.mxu0 0
    %4074 = vmatpush1.bf16.msra.mxu0 0
    %4075 = vmatprep.mubr.bf16.mxu0 0
    %4076 = vmatmul.mubr.bf16.gmra.mrb[0].mxu0 %v3824
    %v4077 = vpop.f32.mrb[0].mxu0
    %v4078 = vadd.f32 %v3998, %v4077
    %v4079 = vpop.f32.mrb[0].mxu0
    %v4080 = vpop.f32.mrb[0].mxu0
    %v4081 = vpop.f32.mrb[0].mxu0
    %4082 = vdwg.mxu0
    %v4083 = vld [vmem:[%s1512] ss:$8 sm:$0x7]
    %v4084 = vadd.f32 %v4083, %v4037
    %v4085 = vxor.u32 %v4084, 2147483648
    %v4086 = vmul.f32 %v4085, 1.442695
    %v4087 = vpow.pop %v4086
    %v4088 = vadd.f32 %v4087, 1.0
    %v4089 = vrcp.pop %v4088
    %v4090 = vmul.f32 1.0, %v4089
    %v4092 = vrot.slane %v4083, 1
    %v4094 = vadd.f32 %v4092, %v4039
    %v4095 = vxor.u32 %v4094, 2147483648
    %v4096 = vmul.f32 %v4095, 1.442695
    %v4097 = vpow.pop %v4096
    %v4098 = vadd.f32 %v4097, 1.0
    %v4099 = vrcp.pop %v4098
    %v4100 = vmul.f32 1.0, %v4099
    %v4101 = vmul.f32 %v4090, %v4078
    %v4102 = vrot.slane %v4083, 2
    %v4104 = vadd.f32 %v4102, %v4101
    %v4105 = vtanh.pop %v4104
    %v4106 = vsub.f32 1.0, %v4100
    %v4107 = vmul.f32 %v4106, %v4105
    %v4108 = vmul.f32 %v4100, %v3822
    %v4109 = vadd.f32 %v4107, %v4108
    %4110 = vst [vmem:[#allocation2 + $0x3] sm:$0x1] %v4109
    %v4111 = vpack.c.bf16 %v4109, %v4109
    %v4112 = vld [vmem:[%s2962] sm:$0xff]
    %v4113 = vld [vmem:[%s2962 + $0x8] sm:$0xf]
    %v4114 = vld [vmem:[%s2962 + $0xc] sm:$0xff]
    %v4115 = vld [vmem:[%s2962 + $0x14] sm:$0xf]
    %v4116 = vld [vmem:[%s2962 + $0x18] sm:$0xff]
    %v4117 = vld [vmem:[%s2962 + $0x20] sm:$0xf]
    %v4118 = vld [vmem:[%s2962 + $0x24] sm:$0xff]
    %v4119 = vld [vmem:[%s2962 + $0x2c] sm:$0xf]
    %v4120 = vld [vmem:[%s2962 + $0x30] sm:$0xff]
    %v4121 = vld [vmem:[%s2962 + $0x38] sm:$0xf]
    %v4122 = vld [vmem:[%s2962 + $0x3c] sm:$0xff]
    %v4123 = vld [vmem:[%s2962 + $0x44] sm:$0xf]
    %v4124 = vld [vmem:[%s2962 + $0x48] sm:$0xff]
    %v4125 = vld [vmem:[%s2962 + $0x50] sm:$0xf]
    %v4126 = vld [vmem:[%s2962 + $0x54] sm:$0xff]
    %v4127 = vld [vmem:[%s2962 + $0x5c] sm:$0xf]
    %v4128 = vld [vmem:[%s2962 + $0x60] sm:$0xff]
    %v4129 = vld [vmem:[%s2962 + $0x68] sm:$0xf]
    %v4130 = vld [vmem:[%s2962 + $0x6c] sm:$0xff]
    %v4131 = vld [vmem:[%s2962 + $0x74] sm:$0xf]
    %v4132 = vld [vmem:[%s2962 + $0x78] sm:$0xff]
    %v4133 = vld [vmem:[%s2962 + $0x80] sm:$0xf]
    %v4134 = vld [vmem:[%s2962 + $0x84] sm:$0xff]
    %v4135 = vld [vmem:[%s2962 + $0x8c] sm:$0xf]
    %v4136 = vld [vmem:[%s2962 + $0x90] sm:$0xff]
    %v4137 = vld [vmem:[%s2962 + $0x98] sm:$0xf]
    %v4138 = vld [vmem:[%s2962 + $0x9c] sm:$0xff]
    %v4139 = vld [vmem:[%s2962 + $0xa4] sm:$0xf]
    %v4140 = vld [vmem:[%s2962 + $0xa8] sm:$0xff]
    %v4141 = vld [vmem:[%s2962 + $0xb0] sm:$0xf]
    %v4142 = vld [vmem:[%s2962 + $0xb4] sm:$0xff]
    %v4143 = vld [vmem:[%s2962 + $0xbc] sm:$0xf]
    %v4144 = vld [vmem:[%s2995] sm:$0x7]
    %v4177 = vunpack.c.l.b16 %v4112
    %v4178 = vunpack.c.h.b16 %v4112
    %v4179 = vunpack.c.l.b16 %v4113
    %v4180 = vunpack.c.l.b16 %v4114
    %v4181 = vunpack.c.h.b16 %v4114
    %v4182 = vunpack.c.l.b16 %v4115
    %v4183 = vunpack.c.l.b16 %v4116
    %v4184 = vunpack.c.h.b16 %v4116
    %v4185 = vunpack.c.l.b16 %v4117
    %v4186 = vunpack.c.l.b16 %v4118
    %v4187 = vunpack.c.h.b16 %v4118
    %v4188 = vunpack.c.l.b16 %v4119
    %v4189 = vunpack.c.l.b16 %v4120
    %v4190 = vunpack.c.h.b16 %v4120
    %v4191 = vunpack.c.l.b16 %v4121
    %v4192 = vunpack.c.l.b16 %v4122
    %v4193 = vunpack.c.h.b16 %v4122
    %v4194 = vunpack.c.l.b16 %v4123
    %v4195 = vunpack.c.l.b16 %v4124
    %v4196 = vunpack.c.h.b16 %v4124
    %v4197 = vunpack.c.l.b16 %v4125
    %v4198 = vunpack.c.l.b16 %v4126
    %v4199 = vunpack.c.h.b16 %v4126
    %v4200 = vunpack.c.l.b16 %v4127
    %v4201 = vunpack.c.l.b16 %v4128
    %v4202 = vunpack.c.h.b16 %v4128
    %v4203 = vunpack.c.l.b16 %v4129
    %v4204 = vunpack.c.l.b16 %v4130
    %v4205 = vunpack.c.h.b16 %v4130
    %v4206 = vunpack.c.l.b16 %v4131
    %v4207 = vunpack.c.l.b16 %v4132
    %v4208 = vunpack.c.h.b16 %v4132
    %v4209 = vunpack.c.l.b16 %v4133
    %v4210 = vunpack.c.l.b16 %v4134
    %v4211 = vunpack.c.h.b16 %v4134
    %v4212 = vunpack.c.l.b16 %v4135
    %v4213 = vunpack.c.l.b16 %v4136
    %v4214 = vunpack.c.h.b16 %v4136
    %v4215 = vunpack.c.l.b16 %v4137
    %v4216 = vunpack.c.l.b16 %v4138
    %v4217 = vunpack.c.h.b16 %v4138
    %v4218 = vunpack.c.l.b16 %v4139
    %v4219 = vunpack.c.l.b16 %v4140
    %v4220 = vunpack.c.h.b16 %v4140
    %v4221 = vunpack.c.l.b16 %v4141
    %v4222 = vunpack.c.l.b16 %v4142
    %v4223 = vunpack.c.h.b16 %v4142
    %v4224 = vunpack.c.l.b16 %v4143
    %v4225 = vpack.c.b16 %v4180, %v4177
    %v4226 = vpack.c.b16 %v4181, %v4178
    %v4227 = vpack.c.b16 %v4182, %v4179
    %v4228 = vpack.c.b16 %v4186, %v4183
    %v4229 = vpack.c.b16 %v4187, %v4184
    %v4230 = vpack.c.b16 %v4188, %v4185
    %v4231 = vpack.c.b16 %v4192, %v4189
    %v4232 = vpack.c.b16 %v4193, %v4190
    %v4233 = vpack.c.b16 %v4194, %v4191
    %v4234 = vpack.c.b16 %v4198, %v4195
    %v4235 = vpack.c.b16 %v4199, %v4196
    %v4236 = vpack.c.b16 %v4200, %v4197
    %v4237 = vpack.c.b16 %v4204, %v4201
    %v4238 = vpack.c.b16 %v4205, %v4202
    %v4239 = vpack.c.b16 %v4206, %v4203
    %v4240 = vpack.c.b16 %v4210, %v4207
    %v4241 = vpack.c.b16 %v4211, %v4208
    %v4242 = vpack.c.b16 %v4212, %v4209
    %v4243 = vpack.c.b16 %v4216, %v4213
    %v4244 = vpack.c.b16 %v4217, %v4214
    %v4245 = vpack.c.b16 %v4218, %v4215
    %v4246 = vpack.c.b16 %v4222, %v4219
    %v4247 = vpack.c.b16 %v4223, %v4220
    %v4248 = vpack.c.b16 %v4224, %v4221
    %v4274 = vlaneseq
    %v4275 = vshrl.u32 %v4274, 7
    %v4276 = vsub.s32 0, %v4275
    %v4277 = vrot.slane %v4144, %v4276
    %v4278 = vlaneseq
    %v4279 = vshrl.u32 %v4278, 7
    %v4280 = vsub.s32 1, %v4279
    %v4281 = vrot.slane %v4144, %v4280
    %v4282 = vlaneseq
    %v4283 = vshrl.u32 %v4282, 7
    %v4284 = vsub.s32 2, %v4283
    %v4285 = vrot.slane %v4144, %v4284
    %4289 = vmatprep.subr.bf16.mxu0 %v4226
    %4290 = vmatpush1.bf16.msra.mxu0 %v4225
    %4291 = vmatprep.subr.bf16.mxu0 %v4229
    %4292 = vmatpush1.bf16.msra.mxu0 %v4228
    %4293 = vmatprep.subr.bf16.mxu0 %v4232
    %4294 = vmatpush1.bf16.msra.mxu0 %v4231
    %4295 = vmatprep.subr.bf16.mxu0 %v4235
    %4296 = vmatpush1.bf16.msra.mxu0 %v4234
    %4297 = vmatprep.subr.bf16.mxu0 %v4238
    %4298 = vmatpush1.bf16.msra.mxu0 %v4237
    %4299 = vmatprep.subr.bf16.mxu0 %v4241
    %4300 = vmatpush1.bf16.msra.mxu0 %v4240
    %4301 = vmatprep.subr.bf16.mxu0 %v4244
    %4302 = vmatpush1.bf16.msra.mxu0 %v4243
    %4303 = vmatprep.subr.bf16.mxu0 %v4247
    %4304 = vmatpush1.bf16.msra.mxu0 %v4246
    %4305 = vmatprep.subr.bf16.mxu0 0
    %4306 = vmatpush1.bf16.msra.mxu0 0
    %4307 = vmatprep.subr.bf16.mxu0 0
    %4308 = vmatpush1.bf16.msra.mxu0 0
    %4309 = vmatprep.subr.bf16.mxu0 0
    %4310 = vmatpush1.bf16.msra.mxu0 0
    %4311 = vmatprep.subr.bf16.mxu0 0
    %4312 = vmatpush1.bf16.msra.mxu0 0
    %4313 = vmatprep.subr.bf16.mxu0 0
    %4314 = vmatpush1.bf16.msra.mxu0 0
    %4315 = vmatprep.subr.bf16.mxu0 0
    %4316 = vmatpush1.bf16.msra.mxu0 0
    %4317 = vmatprep.subr.bf16.mxu0 0
    %4318 = vmatpush1.bf16.msra.mxu0 0
    %4319 = vmatprep.subr.bf16.mxu0 0
    %4320 = vmatpush1.bf16.msra.mxu0 0
    %4321 = vmatprep.mubr.bf16.mxu0 0
    %4322 = vmatmul.mubr.bf16.gmra.mrb[0].mxu0 %v4111
    %v4323 = vpop.f32.mrb[0].mxu0
    %v4324 = vadd.f32 %v4277, %v4323
    %v4325 = vpop.f32.mrb[0].mxu0
    %v4326 = vadd.f32 %v4281, %v4325
    %v4327 = vpop.f32.mrb[0].mxu0
    %v4328 = vpop.f32.mrb[0].mxu0
    %4329 = vdwg.mxu0
    %4330 = vmatprep.subr.bf16.mxu0 0
    %4331 = vmatpush1.bf16.msra.mxu0 %v4227
    %4332 = vmatprep.subr.bf16.mxu0 0
    %4333 = vmatpush1.bf16.msra.mxu0 %v4230
    %4334 = vmatprep.subr.bf16.mxu0 0
    %4335 = vmatpush1.bf16.msra.mxu0 %v4233
    %4336 = vmatprep.subr.bf16.mxu0 0
    %4337 = vmatpush1.bf16.msra.mxu0 %v4236
    %4338 = vmatprep.subr.bf16.mxu0 0
    %4339 = vmatpush1.bf16.msra.mxu0 %v4239
    %4340 = vmatprep.subr.bf16.mxu0 0
    %4341 = vmatpush1.bf16.msra.mxu0 %v4242
    %4342 = vmatprep.subr.bf16.mxu0 0
    %4343 = vmatpush1.bf16.msra.mxu0 %v4245
    %4344 = vmatprep.subr.bf16.mxu0 0
    %4345 = vmatpush1.bf16.msra.mxu0 %v4248
    %4346 = vmatprep.subr.bf16.mxu0 0
    %4347 = vmatpush1.bf16.msra.mxu0 0
    %4348 = vmatprep.subr.bf16.mxu0 0
    %4349 = vmatpush1.bf16.msra.mxu0 0
    %4350 = vmatprep.subr.bf16.mxu0 0
    %4351 = vmatpush1.bf16.msra.mxu0 0
    %4352 = vmatprep.subr.bf16.mxu0 0
    %4353 = vmatpush1.bf16.msra.mxu0 0
    %4354 = vmatprep.subr.bf16.mxu0 0
    %4355 = vmatpush1.bf16.msra.mxu0 0
    %4356 = vmatprep.subr.bf16.mxu0 0
    %4357 = vmatpush1.bf16.msra.mxu0 0
    %4358 = vmatprep.subr.bf16.mxu0 0
    %4359 = vmatpush1.bf16.msra.mxu0 0
    %4360 = vmatprep.subr.bf16.mxu0 0
    %4361 = vmatpush1.bf16.msra.mxu0 0
    %4362 = vmatprep.mubr.bf16.mxu0 0
    %4363 = vmatmul.mubr.bf16.gmra.mrb[0].mxu0 %v4111
    %v4364 = vpop.f32.mrb[0].mxu0
    %v4365 = vadd.f32 %v4285, %v4364
    %v4366 = vpop.f32.mrb[0].mxu0
    %v4367 = vpop.f32.mrb[0].mxu0
    %v4368 = vpop.f32.mrb[0].mxu0
    %4369 = vdwg.mxu0
    %v4370 = vld [vmem:[%s1800] ss:$8 sm:$0x7]
    %v4371 = vadd.f32 %v4370, %v4324
    %v4372 = vxor.u32 %v4371, 2147483648
    %v4373 = vmul.f32 %v4372, 1.442695
    %v4374 = vpow.pop %v4373
    %v4375 = vadd.f32 %v4374, 1.0
    %v4376 = vrcp.pop %v4375
    %v4377 = vmul.f32 1.0, %v4376
    %v4379 = vrot.slane %v4370, 1
    %v4381 = vadd.f32 %v4379, %v4326
    %v4382 = vxor.u32 %v4381, 2147483648
    %v4383 = vmul.f32 %v4382, 1.442695
    %v4384 = vpow.pop %v4383
    %v4385 = vadd.f32 %v4384, 1.0
    %v4386 = vrcp.pop %v4385
    %v4387 = vmul.f32 1.0, %v4386
    %v4388 = vmul.f32 %v4377, %v4365
    %v4389 = vrot.slane %v4370, 2
    %v4391 = vadd.f32 %v4389, %v4388
    %v4392 = vtanh.pop %v4391
    %v4393 = vsub.f32 1.0, %v4387
    %v4394 = vmul.f32 %v4393, %v4392
    %v4395 = vmul.f32 %v4387, %v4109
    %v4396 = vadd.f32 %v4394, %v4395
    %4397 = vst [vmem:[#allocation2 + $0x4] sm:$0x1] %v4396
    %v4398 = vpack.c.bf16 %v4396, %v4396
    %v4399 = vld [vmem:[%s2962] sm:$0xff]
    %v4400 = vld [vmem:[%s2962 + $0x8] sm:$0xf]
    %v4401 = vld [vmem:[%s2962 + $0xc] sm:$0xff]
    %v4402 = vld [vmem:[%s2962 + $0x14] sm:$0xf]
    %v4403 = vld [vmem:[%s2962 + $0x18] sm:$0xff]
    %v4404 = vld [vmem:[%s2962 + $0x20] sm:$0xf]
    %v4405 = vld [vmem:[%s2962 + $0x24] sm:$0xff]
    %v4406 = vld [vmem:[%s2962 + $0x2c] sm:$0xf]
    %v4407 = vld [vmem:[%s2962 + $0x30] sm:$0xff]
    %v4408 = vld [vmem:[%s2962 + $0x38] sm:$0xf]
    %v4409 = vld [vmem:[%s2962 + $0x3c] sm:$0xff]
    %v4410 = vld [vmem:[%s2962 + $0x44] sm:$0xf]
    %v4411 = vld [vmem:[%s2962 + $0x48] sm:$0xff]
    %v4412 = vld [vmem:[%s2962 + $0x50] sm:$0xf]
    %v4413 = vld [vmem:[%s2962 + $0x54] sm:$0xff]
    %v4414 = vld [vmem:[%s2962 + $0x5c] sm:$0xf]
    %v4415 = vld [vmem:[%s2962 + $0x60] sm:$0xff]
    %v4416 = vld [vmem:[%s2962 + $0x68] sm:$0xf]
    %v4417 = vld [vmem:[%s2962 + $0x6c] sm:$0xff]
    %v4418 = vld [vmem:[%s2962 + $0x74] sm:$0xf]
    %v4419 = vld [vmem:[%s2962 + $0x78] sm:$0xff]
    %v4420 = vld [vmem:[%s2962 + $0x80] sm:$0xf]
    %v4421 = vld [vmem:[%s2962 + $0x84] sm:$0xff]
    %v4422 = vld [vmem:[%s2962 + $0x8c] sm:$0xf]
    %v4423 = vld [vmem:[%s2962 + $0x90] sm:$0xff]
    %v4424 = vld [vmem:[%s2962 + $0x98] sm:$0xf]
    %v4425 = vld [vmem:[%s2962 + $0x9c] sm:$0xff]
    %v4426 = vld [vmem:[%s2962 + $0xa4] sm:$0xf]
    %v4427 = vld [vmem:[%s2962 + $0xa8] sm:$0xff]
    %v4428 = vld [vmem:[%s2962 + $0xb0] sm:$0xf]
    %v4429 = vld [vmem:[%s2962 + $0xb4] sm:$0xff]
    %v4430 = vld [vmem:[%s2962 + $0xbc] sm:$0xf]
    %v4431 = vld [vmem:[%s2995] sm:$0x7]
    %v4464 = vunpack.c.l.b16 %v4399
    %v4465 = vunpack.c.h.b16 %v4399
    %v4466 = vunpack.c.l.b16 %v4400
    %v4467 = vunpack.c.l.b16 %v4401
    %v4468 = vunpack.c.h.b16 %v4401
    %v4469 = vunpack.c.l.b16 %v4402
    %v4470 = vunpack.c.l.b16 %v4403
    %v4471 = vunpack.c.h.b16 %v4403
    %v4472 = vunpack.c.l.b16 %v4404
    %v4473 = vunpack.c.l.b16 %v4405
    %v4474 = vunpack.c.h.b16 %v4405
    %v4475 = vunpack.c.l.b16 %v4406
    %v4476 = vunpack.c.l.b16 %v4407
    %v4477 = vunpack.c.h.b16 %v4407
    %v4478 = vunpack.c.l.b16 %v4408
    %v4479 = vunpack.c.l.b16 %v4409
    %v4480 = vunpack.c.h.b16 %v4409
    %v4481 = vunpack.c.l.b16 %v4410
    %v4482 = vunpack.c.l.b16 %v4411
    %v4483 = vunpack.c.h.b16 %v4411
    %v4484 = vunpack.c.l.b16 %v4412
    %v4485 = vunpack.c.l.b16 %v4413
    %v4486 = vunpack.c.h.b16 %v4413
    %v4487 = vunpack.c.l.b16 %v4414
    %v4488 = vunpack.c.l.b16 %v4415
    %v4489 = vunpack.c.h.b16 %v4415
    %v4490 = vunpack.c.l.b16 %v4416
    %v4491 = vunpack.c.l.b16 %v4417
    %v4492 = vunpack.c.h.b16 %v4417
    %v4493 = vunpack.c.l.b16 %v4418
    %v4494 = vunpack.c.l.b16 %v4419
    %v4495 = vunpack.c.h.b16 %v4419
    %v4496 = vunpack.c.l.b16 %v4420
    %v4497 = vunpack.c.l.b16 %v4421
    %v4498 = vunpack.c.h.b16 %v4421
    %v4499 = vunpack.c.l.b16 %v4422
    %v4500 = vunpack.c.l.b16 %v4423
    %v4501 = vunpack.c.h.b16 %v4423
    %v4502 = vunpack.c.l.b16 %v4424
    %v4503 = vunpack.c.l.b16 %v4425
    %v4504 = vunpack.c.h.b16 %v4425
    %v4505 = vunpack.c.l.b16 %v4426
    %v4506 = vunpack.c.l.b16 %v4427
    %v4507 = vunpack.c.h.b16 %v4427
    %v4508 = vunpack.c.l.b16 %v4428
    %v4509 = vunpack.c.l.b16 %v4429
    %v4510 = vunpack.c.h.b16 %v4429
    %v4511 = vunpack.c.l.b16 %v4430
    %v4512 = vpack.c.b16 %v4467, %v4464
    %v4513 = vpack.c.b16 %v4468, %v4465
    %v4514 = vpack.c.b16 %v4469, %v4466
    %v4515 = vpack.c.b16 %v4473, %v4470
    %v4516 = vpack.c.b16 %v4474, %v4471
    %v4517 = vpack.c.b16 %v4475, %v4472
    %v4518 = vpack.c.b16 %v4479, %v4476
    %v4519 = vpack.c.b16 %v4480, %v4477
    %v4520 = vpack.c.b16 %v4481, %v4478
    %v4521 = vpack.c.b16 %v4485, %v4482
    %v4522 = vpack.c.b16 %v4486, %v4483
    %v4523 = vpack.c.b16 %v4487, %v4484
    %v4524 = vpack.c.b16 %v4491, %v4488
    %v4525 = vpack.c.b16 %v4492, %v4489
    %v4526 = vpack.c.b16 %v4493, %v4490
    %v4527 = vpack.c.b16 %v4497, %v4494
    %v4528 = vpack.c.b16 %v4498, %v4495
    %v4529 = vpack.c.b16 %v4499, %v4496
    %v4530 = vpack.c.b16 %v4503, %v4500
    %v4531 = vpack.c.b16 %v4504, %v4501
    %v4532 = vpack.c.b16 %v4505, %v4502
    %v4533 = vpack.c.b16 %v4509, %v4506
    %v4534 = vpack.c.b16 %v4510, %v4507
    %v4535 = vpack.c.b16 %v4511, %v4508
    %v4561 = vlaneseq
    %v4562 = vshrl.u32 %v4561, 7
    %v4563 = vsub.s32 0, %v4562
    %v4564 = vrot.slane %v4431, %v4563
    %v4565 = vlaneseq
    %v4566 = vshrl.u32 %v4565, 7
    %v4567 = vsub.s32 1, %v4566
    %v4568 = vrot.slane %v4431, %v4567
    %v4569 = vlaneseq
    %v4570 = vshrl.u32 %v4569, 7
    %v4571 = vsub.s32 2, %v4570
    %v4572 = vrot.slane %v4431, %v4571
    %4576 = vmatprep.subr.bf16.mxu0 %v4513
    %4577 = vmatpush1.bf16.msra.mxu0 %v4512
    %4578 = vmatprep.subr.bf16.mxu0 %v4516
    %4579 = vmatpush1.bf16.msra.mxu0 %v4515
    %4580 = vmatprep.subr.bf16.mxu0 %v4519
    %4581 = vmatpush1.bf16.msra.mxu0 %v4518
    %4582 = vmatprep.subr.bf16.mxu0 %v4522
    %4583 = vmatpush1.bf16.msra.mxu0 %v4521
    %4584 = vmatprep.subr.bf16.mxu0 %v4525
    %4585 = vmatpush1.bf16.msra.mxu0 %v4524
    %4586 = vmatprep.subr.bf16.mxu0 %v4528
    %4587 = vmatpush1.bf16.msra.mxu0 %v4527
    %4588 = vmatprep.subr.bf16.mxu0 %v4531
    %4589 = vmatpush1.bf16.msra.mxu0 %v4530
    %4590 = vmatprep.subr.bf16.mxu0 %v4534
    %4591 = vmatpush1.bf16.msra.mxu0 %v4533
    %4592 = vmatprep.subr.bf16.mxu0 0
    %4593 = vmatpush1.bf16.msra.mxu0 0
    %4594 = vmatprep.subr.bf16.mxu0 0
    %4595 = vmatpush1.bf16.msra.mxu0 0
    %4596 = vmatprep.subr.bf16.mxu0 0
    %4597 = vmatpush1.bf16.msra.mxu0 0
    %4598 = vmatprep.subr.bf16.mxu0 0
    %4599 = vmatpush1.bf16.msra.mxu0 0
    %4600 = vmatprep.subr.bf16.mxu0 0
    %4601 = vmatpush1.bf16.msra.mxu0 0
    %4602 = vmatprep.subr.bf16.mxu0 0
    %4603 = vmatpush1.bf16.msra.mxu0 0
    %4604 = vmatprep.subr.bf16.mxu0 0
    %4605 = vmatpush1.bf16.msra.mxu0 0
    %4606 = vmatprep.subr.bf16.mxu0 0
    %4607 = vmatpush1.bf16.msra.mxu0 0
    %4608 = vmatprep.mubr.bf16.mxu0 0
    %4609 = vmatmul.mubr.bf16.gmra.mrb[0].mxu0 %v4398
    %v4610 = vpop.f32.mrb[0].mxu0
    %v4611 = vadd.f32 %v4564, %v4610
    %v4612 = vpop.f32.mrb[0].mxu0
    %v4613 = vadd.f32 %v4568, %v4612
    %v4614 = vpop.f32.mrb[0].mxu0
    %v4615 = vpop.f32.mrb[0].mxu0
    %4616 = vdwg.mxu0
    %4617 = vmatprep.subr.bf16.mxu0 0
    %4618 = vmatpush1.bf16.msra.mxu0 %v4514
    %4619 = vmatprep.subr.bf16.mxu0 0
    %4620 = vmatpush1.bf16.msra.mxu0 %v4517
    %4621 = vmatprep.subr.bf16.mxu0 0
    %4622 = vmatpush1.bf16.msra.mxu0 %v4520
    %4623 = vmatprep.subr.bf16.mxu0 0
    %4624 = vmatpush1.bf16.msra.mxu0 %v4523
    %4625 = vmatprep.subr.bf16.mxu0 0
    %4626 = vmatpush1.bf16.msra.mxu0 %v4526
    %4627 = vmatprep.subr.bf16.mxu0 0
    %4628 = vmatpush1.bf16.msra.mxu0 %v4529
    %4629 = vmatprep.subr.bf16.mxu0 0
    %4630 = vmatpush1.bf16.msra.mxu0 %v4532
    %4631 = vmatprep.subr.bf16.mxu0 0
    %4632 = vmatpush1.bf16.msra.mxu0 %v4535
    %4633 = vmatprep.subr.bf16.mxu0 0
    %4634 = vmatpush1.bf16.msra.mxu0 0
    %4635 = vmatprep.subr.bf16.mxu0 0
    %4636 = vmatpush1.bf16.msra.mxu0 0
    %4637 = vmatprep.subr.bf16.mxu0 0
    %4638 = vmatpush1.bf16.msra.mxu0 0
    %4639 = vmatprep.subr.bf16.mxu0 0
    %4640 = vmatpush1.bf16.msra.mxu0 0
    %4641 = vmatprep.subr.bf16.mxu0 0
    %4642 = vmatpush1.bf16.msra.mxu0 0
    %4643 = vmatprep.subr.bf16.mxu0 0
    %4644 = vmatpush1.bf16.msra.mxu0 0
    %4645 = vmatprep.subr.bf16.mxu0 0
    %4646 = vmatpush1.bf16.msra.mxu0 0
    %4647 = vmatprep.subr.bf16.mxu0 0
    %4648 = vmatpush1.bf16.msra.mxu0 0
    %4649 = vmatprep.mubr.bf16.mxu0 0
    %4650 = vmatmul.mubr.bf16.gmra.mrb[0].mxu0 %v4398
    %v4651 = vpop.f32.mrb[0].mxu0
    %v4652 = vadd.f32 %v4572, %v4651
    %v4653 = vpop.f32.mrb[0].mxu0
    %v4654 = vpop.f32.mrb[0].mxu0
    %v4655 = vpop.f32.mrb[0].mxu0
    %4656 = vdwg.mxu0
    %v4657 = vld [vmem:[%s2088] ss:$8 sm:$0x7]
    %v4658 = vadd.f32 %v4657, %v4611
    %v4659 = vxor.u32 %v4658, 2147483648
    %v4660 = vmul.f32 %v4659, 1.442695
    %v4661 = vpow.pop %v4660
    %v4662 = vadd.f32 %v4661, 1.0
    %v4663 = vrcp.pop %v4662
    %v4664 = vmul.f32 1.0, %v4663
    %v4666 = vrot.slane %v4657, 1
    %v4668 = vadd.f32 %v4666, %v4613
    %v4669 = vxor.u32 %v4668, 2147483648
    %v4670 = vmul.f32 %v4669, 1.442695
    %v4671 = vpow.pop %v4670
    %v4672 = vadd.f32 %v4671, 1.0
    %v4673 = vrcp.pop %v4672
    %v4674 = vmul.f32 1.0, %v4673
    %v4675 = vmul.f32 %v4664, %v4652
    %v4676 = vrot.slane %v4657, 2
    %v4678 = vadd.f32 %v4676, %v4675
    %v4679 = vtanh.pop %v4678
    %v4680 = vsub.f32 1.0, %v4674
    %v4681 = vmul.f32 %v4680, %v4679
    %v4682 = vmul.f32 %v4674, %v4396
    %v4683 = vadd.f32 %v4681, %v4682
    %4684 = vst [vmem:[#allocation2 + $0x5] sm:$0x1] %v4683
    %v4685 = vpack.c.bf16 %v4683, %v4683
    %v4686 = vld [vmem:[%s2962] sm:$0xff]
    %v4687 = vld [vmem:[%s2962 + $0x8] sm:$0xf]
    %v4688 = vld [vmem:[%s2962 + $0xc] sm:$0xff]
    %v4689 = vld [vmem:[%s2962 + $0x14] sm:$0xf]
    %v4690 = vld [vmem:[%s2962 + $0x18] sm:$0xff]
    %v4691 = vld [vmem:[%s2962 + $0x20] sm:$0xf]
    %v4692 = vld [vmem:[%s2962 + $0x24] sm:$0xff]
    %v4693 = vld [vmem:[%s2962 + $0x2c] sm:$0xf]
    %v4694 = vld [vmem:[%s2962 + $0x30] sm:$0xff]
    %v4695 = vld [vmem:[%s2962 + $0x38] sm:$0xf]
    %v4696 = vld [vmem:[%s2962 + $0x3c] sm:$0xff]
    %v4697 = vld [vmem:[%s2962 + $0x44] sm:$0xf]
    %v4698 = vld [vmem:[%s2962 + $0x48] sm:$0xff]
    %v4699 = vld [vmem:[%s2962 + $0x50] sm:$0xf]
    %v4700 = vld [vmem:[%s2962 + $0x54] sm:$0xff]
    %v4701 = vld [vmem:[%s2962 + $0x5c] sm:$0xf]
    %v4702 = vld [vmem:[%s2962 + $0x60] sm:$0xff]
    %v4703 = vld [vmem:[%s2962 + $0x68] sm:$0xf]
    %v4704 = vld [vmem:[%s2962 + $0x6c] sm:$0xff]
    %v4705 = vld [vmem:[%s2962 + $0x74] sm:$0xf]
    %v4706 = vld [vmem:[%s2962 + $0x78] sm:$0xff]
    %v4707 = vld [vmem:[%s2962 + $0x80] sm:$0xf]
    %v4708 = vld [vmem:[%s2962 + $0x84] sm:$0xff]
    %v4709 = vld [vmem:[%s2962 + $0x8c] sm:$0xf]
    %v4710 = vld [vmem:[%s2962 + $0x90] sm:$0xff]
    %v4711 = vld [vmem:[%s2962 + $0x98] sm:$0xf]
    %v4712 = vld [vmem:[%s2962 + $0x9c] sm:$0xff]
    %v4713 = vld [vmem:[%s2962 + $0xa4] sm:$0xf]
    %v4714 = vld [vmem:[%s2962 + $0xa8] sm:$0xff]
    %v4715 = vld [vmem:[%s2962 + $0xb0] sm:$0xf]
    %v4716 = vld [vmem:[%s2962 + $0xb4] sm:$0xff]
    %v4717 = vld [vmem:[%s2962 + $0xbc] sm:$0xf]
    %v4718 = vld [vmem:[%s2995] sm:$0x7]
    %v4751 = vunpack.c.l.b16 %v4686
    %v4752 = vunpack.c.h.b16 %v4686
    %v4753 = vunpack.c.l.b16 %v4687
    %v4754 = vunpack.c.l.b16 %v4688
    %v4755 = vunpack.c.h.b16 %v4688
    %v4756 = vunpack.c.l.b16 %v4689
    %v4757 = vunpack.c.l.b16 %v4690
    %v4758 = vunpack.c.h.b16 %v4690
    %v4759 = vunpack.c.l.b16 %v4691
    %v4760 = vunpack.c.l.b16 %v4692
    %v4761 = vunpack.c.h.b16 %v4692
    %v4762 = vunpack.c.l.b16 %v4693
    %v4763 = vunpack.c.l.b16 %v4694
    %v4764 = vunpack.c.h.b16 %v4694
    %v4765 = vunpack.c.l.b16 %v4695
    %v4766 = vunpack.c.l.b16 %v4696
    %v4767 = vunpack.c.h.b16 %v4696
    %v4768 = vunpack.c.l.b16 %v4697
    %v4769 = vunpack.c.l.b16 %v4698
    %v4770 = vunpack.c.h.b16 %v4698
    %v4771 = vunpack.c.l.b16 %v4699
    %v4772 = vunpack.c.l.b16 %v4700
    %v4773 = vunpack.c.h.b16 %v4700
    %v4774 = vunpack.c.l.b16 %v4701
    %v4775 = vunpack.c.l.b16 %v4702
    %v4776 = vunpack.c.h.b16 %v4702
    %v4777 = vunpack.c.l.b16 %v4703
    %v4778 = vunpack.c.l.b16 %v4704
    %v4779 = vunpack.c.h.b16 %v4704
    %v4780 = vunpack.c.l.b16 %v4705
    %v4781 = vunpack.c.l.b16 %v4706
    %v4782 = vunpack.c.h.b16 %v4706
    %v4783 = vunpack.c.l.b16 %v4707
    %v4784 = vunpack.c.l.b16 %v4708
    %v4785 = vunpack.c.h.b16 %v4708
    %v4786 = vunpack.c.l.b16 %v4709
    %v4787 = vunpack.c.l.b16 %v4710
    %v4788 = vunpack.c.h.b16 %v4710
    %v4789 = vunpack.c.l.b16 %v4711
    %v4790 = vunpack.c.l.b16 %v4712
    %v4791 = vunpack.c.h.b16 %v4712
    %v4792 = vunpack.c.l.b16 %v4713
    %v4793 = vunpack.c.l.b16 %v4714
    %v4794 = vunpack.c.h.b16 %v4714
    %v4795 = vunpack.c.l.b16 %v4715
    %v4796 = vunpack.c.l.b16 %v4716
    %v4797 = vunpack.c.h.b16 %v4716
    %v4798 = vunpack.c.l.b16 %v4717
    %v4799 = vpack.c.b16 %v4754, %v4751
    %v4800 = vpack.c.b16 %v4755, %v4752
    %v4801 = vpack.c.b16 %v4756, %v4753
    %v4802 = vpack.c.b16 %v4760, %v4757
    %v4803 = vpack.c.b16 %v4761, %v4758
    %v4804 = vpack.c.b16 %v4762, %v4759
    %v4805 = vpack.c.b16 %v4766, %v4763
    %v4806 = vpack.c.b16 %v4767, %v4764
    %v4807 = vpack.c.b16 %v4768, %v4765
    %v4808 = vpack.c.b16 %v4772, %v4769
    %v4809 = vpack.c.b16 %v4773, %v4770
    %v4810 = vpack.c.b16 %v4774, %v4771
    %v4811 = vpack.c.b16 %v4778, %v4775
    %v4812 = vpack.c.b16 %v4779, %v4776
    %v4813 = vpack.c.b16 %v4780, %v4777
    %v4814 = vpack.c.b16 %v4784, %v4781
    %v4815 = vpack.c.b16 %v4785, %v4782
    %v4816 = vpack.c.b16 %v4786, %v4783
    %v4817 = vpack.c.b16 %v4790, %v4787
    %v4818 = vpack.c.b16 %v4791, %v4788
    %v4819 = vpack.c.b16 %v4792, %v4789
    %v4820 = vpack.c.b16 %v4796, %v4793
    %v4821 = vpack.c.b16 %v4797, %v4794
    %v4822 = vpack.c.b16 %v4798, %v4795
    %v4848 = vlaneseq
    %v4849 = vshrl.u32 %v4848, 7
    %v4850 = vsub.s32 0, %v4849
    %v4851 = vrot.slane %v4718, %v4850
    %v4852 = vlaneseq
    %v4853 = vshrl.u32 %v4852, 7
    %v4854 = vsub.s32 1, %v4853
    %v4855 = vrot.slane %v4718, %v4854
    %v4856 = vlaneseq
    %v4857 = vshrl.u32 %v4856, 7
    %v4858 = vsub.s32 2, %v4857
    %v4859 = vrot.slane %v4718, %v4858
    %4863 = vmatprep.subr.bf16.mxu0 %v4800
    %4864 = vmatpush1.bf16.msra.mxu0 %v4799
    %4865 = vmatprep.subr.bf16.mxu0 %v4803
    %4866 = vmatpush1.bf16.msra.mxu0 %v4802
    %4867 = vmatprep.subr.bf16.mxu0 %v4806
    %4868 = vmatpush1.bf16.msra.mxu0 %v4805
    %4869 = vmatprep.subr.bf16.mxu0 %v4809
    %4870 = vmatpush1.bf16.msra.mxu0 %v4808
    %4871 = vmatprep.subr.bf16.mxu0 %v4812
    %4872 = vmatpush1.bf16.msra.mxu0 %v4811
    %4873 = vmatprep.subr.bf16.mxu0 %v4815
    %4874 = vmatpush1.bf16.msra.mxu0 %v4814
    %4875 = vmatprep.subr.bf16.mxu0 %v4818
    %4876 = vmatpush1.bf16.msra.mxu0 %v4817
    %4877 = vmatprep.subr.bf16.mxu0 %v4821
    %4878 = vmatpush1.bf16.msra.mxu0 %v4820
    %4879 = vmatprep.subr.bf16.mxu0 0
    %4880 = vmatpush1.bf16.msra.mxu0 0
    %4881 = vmatprep.subr.bf16.mxu0 0
    %4882 = vmatpush1.bf16.msra.mxu0 0
    %4883 = vmatprep.subr.bf16.mxu0 0
    %4884 = vmatpush1.bf16.msra.mxu0 0
    %4885 = vmatprep.subr.bf16.mxu0 0
    %4886 = vmatpush1.bf16.msra.mxu0 0
    %4887 = vmatprep.subr.bf16.mxu0 0
    %4888 = vmatpush1.bf16.msra.mxu0 0
    %4889 = vmatprep.subr.bf16.mxu0 0
    %4890 = vmatpush1.bf16.msra.mxu0 0
    %4891 = vmatprep.subr.bf16.mxu0 0
    %4892 = vmatpush1.bf16.msra.mxu0 0
    %4893 = vmatprep.subr.bf16.mxu0 0
    %4894 = vmatpush1.bf16.msra.mxu0 0
    %4895 = vmatprep.mubr.bf16.mxu0 0
    %4896 = vmatmul.mubr.bf16.gmra.mrb[0].mxu0 %v4685
    %v4897 = vpop.f32.mrb[0].mxu0
    %v4898 = vadd.f32 %v4851, %v4897
    %v4899 = vpop.f32.mrb[0].mxu0
    %v4900 = vadd.f32 %v4855, %v4899
    %v4901 = vpop.f32.mrb[0].mxu0
    %v4902 = vpop.f32.mrb[0].mxu0
    %4903 = vdwg.mxu0
    %4904 = vmatprep.subr.bf16.mxu0 0
    %4905 = vmatpush1.bf16.msra.mxu0 %v4801
    %4906 = vmatprep.subr.bf16.mxu0 0
    %4907 = vmatpush1.bf16.msra.mxu0 %v4804
    %4908 = vmatprep.subr.bf16.mxu0 0
    %4909 = vmatpush1.bf16.msra.mxu0 %v4807
    %4910 = vmatprep.subr.bf16.mxu0 0
    %4911 = vmatpush1.bf16.msra.mxu0 %v4810
    %4912 = vmatprep.subr.bf16.mxu0 0
    %4913 = vmatpush1.bf16.msra.mxu0 %v4813
    %4914 = vmatprep.subr.bf16.mxu0 0
    %4915 = vmatpush1.bf16.msra.mxu0 %v4816
    %4916 = vmatprep.subr.bf16.mxu0 0
    %4917 = vmatpush1.bf16.msra.mxu0 %v4819
    %4918 = vmatprep.subr.bf16.mxu0 0
    %4919 = vmatpush1.bf16.msra.mxu0 %v4822
    %4920 = vmatprep.subr.bf16.mxu0 0
    %4921 = vmatpush1.bf16.msra.mxu0 0
    %4922 = vmatprep.subr.bf16.mxu0 0
    %4923 = vmatpush1.bf16.msra.mxu0 0
    %4924 = vmatprep.subr.bf16.mxu0 0
    %4925 = vmatpush1.bf16.msra.mxu0 0
    %4926 = vmatprep.subr.bf16.mxu0 0
    %4927 = vmatpush1.bf16.msra.mxu0 0
    %4928 = vmatprep.subr.bf16.mxu0 0
    %4929 = vmatpush1.bf16.msra.mxu0 0
    %4930 = vmatprep.subr.bf16.mxu0 0
    %4931 = vmatpush1.bf16.msra.mxu0 0
    %4932 = vmatprep.subr.bf16.mxu0 0
    %4933 = vmatpush1.bf16.msra.mxu0 0
    %4934 = vmatprep.subr.bf16.mxu0 0
    %4935 = vmatpush1.bf16.msra.mxu0 0
    %4936 = vmatprep.mubr.bf16.mxu0 0
    %4937 = vmatmul.mubr.bf16.gmra.mrb[0].mxu0 %v4685
    %v4938 = vpop.f32.mrb[0].mxu0
    %v4939 = vadd.f32 %v4859, %v4938
    %v4940 = vpop.f32.mrb[0].mxu0
    %v4941 = vpop.f32.mrb[0].mxu0
    %v4942 = vpop.f32.mrb[0].mxu0
    %4943 = vdwg.mxu0
    %v4944 = vld [vmem:[%s2376] ss:$8 sm:$0x7]
    %v4945 = vadd.f32 %v4944, %v4898
    %v4946 = vxor.u32 %v4945, 2147483648
    %v4947 = vmul.f32 %v4946, 1.442695
    %v4948 = vpow.pop %v4947
    %v4949 = vadd.f32 %v4948, 1.0
    %v4950 = vrcp.pop %v4949
    %v4951 = vmul.f32 1.0, %v4950
    %v4953 = vrot.slane %v4944, 1
    %v4955 = vadd.f32 %v4953, %v4900
    %v4956 = vxor.u32 %v4955, 2147483648
    %v4957 = vmul.f32 %v4956, 1.442695
    %v4958 = vpow.pop %v4957
    %v4959 = vadd.f32 %v4958, 1.0
    %v4960 = vrcp.pop %v4959
    %v4961 = vmul.f32 1.0, %v4960
    %v4962 = vmul.f32 %v4951, %v4939
    %v4963 = vrot.slane %v4944, 2
    %v4965 = vadd.f32 %v4963, %v4962
    %v4966 = vtanh.pop %v4965
    %v4967 = vsub.f32 1.0, %v4961
    %v4968 = vmul.f32 %v4967, %v4966
    %v4969 = vmul.f32 %v4961, %v4683
    %v4970 = vadd.f32 %v4968, %v4969
    %4971 = vst [vmem:[#allocation2 + $0x6] sm:$0x1] %v4970
    %v4972 = vpack.c.bf16 %v4970, %v4970
    %v4973 = vld [vmem:[%s2962] sm:$0xff]
    %v4974 = vld [vmem:[%s2962 + $0x8] sm:$0xf]
    %v4975 = vld [vmem:[%s2962 + $0xc] sm:$0xff]
    %v4976 = vld [vmem:[%s2962 + $0x14] sm:$0xf]
    %v4977 = vld [vmem:[%s2962 + $0x18] sm:$0xff]
    %v4978 = vld [vmem:[%s2962 + $0x20] sm:$0xf]
    %v4979 = vld [vmem:[%s2962 + $0x24] sm:$0xff]
    %v4980 = vld [vmem:[%s2962 + $0x2c] sm:$0xf]
    %v4981 = vld [vmem:[%s2962 + $0x30] sm:$0xff]
    %v4982 = vld [vmem:[%s2962 + $0x38] sm:$0xf]
    %v4983 = vld [vmem:[%s2962 + $0x3c] sm:$0xff]
    %v4984 = vld [vmem:[%s2962 + $0x44] sm:$0xf]
    %v4985 = vld [vmem:[%s2962 + $0x48] sm:$0xff]
    %v4986 = vld [vmem:[%s2962 + $0x50] sm:$0xf]
    %v4987 = vld [vmem:[%s2962 + $0x54] sm:$0xff]
    %v4988 = vld [vmem:[%s2962 + $0x5c] sm:$0xf]
    %v4989 = vld [vmem:[%s2962 + $0x60] sm:$0xff]
    %v4990 = vld [vmem:[%s2962 + $0x68] sm:$0xf]
    %v4991 = vld [vmem:[%s2962 + $0x6c] sm:$0xff]
    %v4992 = vld [vmem:[%s2962 + $0x74] sm:$0xf]
    %v4993 = vld [vmem:[%s2962 + $0x78] sm:$0xff]
    %v4994 = vld [vmem:[%s2962 + $0x80] sm:$0xf]
    %v4995 = vld [vmem:[%s2962 + $0x84] sm:$0xff]
    %v4996 = vld [vmem:[%s2962 + $0x8c] sm:$0xf]
    %v4997 = vld [vmem:[%s2962 + $0x90] sm:$0xff]
    %v4998 = vld [vmem:[%s2962 + $0x98] sm:$0xf]
    %v4999 = vld [vmem:[%s2962 + $0x9c] sm:$0xff]
    %v5000 = vld [vmem:[%s2962 + $0xa4] sm:$0xf]
    %v5001 = vld [vmem:[%s2962 + $0xa8] sm:$0xff]
    %v5002 = vld [vmem:[%s2962 + $0xb0] sm:$0xf]
    %v5003 = vld [vmem:[%s2962 + $0xb4] sm:$0xff]
    %v5004 = vld [vmem:[%s2962 + $0xbc] sm:$0xf]
    %v5005 = vld [vmem:[%s2995] sm:$0x7]
    %v5038 = vunpack.c.l.b16 %v4973
    %v5039 = vunpack.c.h.b16 %v4973
    %v5040 = vunpack.c.l.b16 %v4974
    %v5041 = vunpack.c.l.b16 %v4975
    %v5042 = vunpack.c.h.b16 %v4975
    %v5043 = vunpack.c.l.b16 %v4976
    %v5044 = vunpack.c.l.b16 %v4977
    %v5045 = vunpack.c.h.b16 %v4977
    %v5046 = vunpack.c.l.b16 %v4978
    %v5047 = vunpack.c.l.b16 %v4979
    %v5048 = vunpack.c.h.b16 %v4979
    %v5049 = vunpack.c.l.b16 %v4980
    %v5050 = vunpack.c.l.b16 %v4981
    %v5051 = vunpack.c.h.b16 %v4981
    %v5052 = vunpack.c.l.b16 %v4982
    %v5053 = vunpack.c.l.b16 %v4983
    %v5054 = vunpack.c.h.b16 %v4983
    %v5055 = vunpack.c.l.b16 %v4984
    %v5056 = vunpack.c.l.b16 %v4985
    %v5057 = vunpack.c.h.b16 %v4985
    %v5058 = vunpack.c.l.b16 %v4986
    %v5059 = vunpack.c.l.b16 %v4987
    %v5060 = vunpack.c.h.b16 %v4987
    %v5061 = vunpack.c.l.b16 %v4988
    %v5062 = vunpack.c.l.b16 %v4989
    %v5063 = vunpack.c.h.b16 %v4989
    %v5064 = vunpack.c.l.b16 %v4990
    %v5065 = vunpack.c.l.b16 %v4991
    %v5066 = vunpack.c.h.b16 %v4991
    %v5067 = vunpack.c.l.b16 %v4992
    %v5068 = vunpack.c.l.b16 %v4993
    %v5069 = vunpack.c.h.b16 %v4993
    %v5070 = vunpack.c.l.b16 %v4994
    %v5071 = vunpack.c.l.b16 %v4995
    %v5072 = vunpack.c.h.b16 %v4995
    %v5073 = vunpack.c.l.b16 %v4996
    %v5074 = vunpack.c.l.b16 %v4997
    %v5075 = vunpack.c.h.b16 %v4997
    %v5076 = vunpack.c.l.b16 %v4998
    %v5077 = vunpack.c.l.b16 %v4999
    %v5078 = vunpack.c.h.b16 %v4999
    %v5079 = vunpack.c.l.b16 %v5000
    %v5080 = vunpack.c.l.b16 %v5001
    %v5081 = vunpack.c.h.b16 %v5001
    %v5082 = vunpack.c.l.b16 %v5002
    %v5083 = vunpack.c.l.b16 %v5003
    %v5084 = vunpack.c.h.b16 %v5003
    %v5085 = vunpack.c.l.b16 %v5004
    %v5086 = vpack.c.b16 %v5041, %v5038
    %v5087 = vpack.c.b16 %v5042, %v5039
    %v5088 = vpack.c.b16 %v5043, %v5040
    %v5089 = vpack.c.b16 %v5047, %v5044
    %v5090 = vpack.c.b16 %v5048, %v5045
    %v5091 = vpack.c.b16 %v5049, %v5046
    %v5092 = vpack.c.b16 %v5053, %v5050
    %v5093 = vpack.c.b16 %v5054, %v5051
    %v5094 = vpack.c.b16 %v5055, %v5052
    %v5095 = vpack.c.b16 %v5059, %v5056
    %v5096 = vpack.c.b16 %v5060, %v5057
    %v5097 = vpack.c.b16 %v5061, %v5058
    %v5098 = vpack.c.b16 %v5065, %v5062
    %v5099 = vpack.c.b16 %v5066, %v5063
    %v5100 = vpack.c.b16 %v5067, %v5064
    %v5101 = vpack.c.b16 %v5071, %v5068
    %v5102 = vpack.c.b16 %v5072, %v5069
    %v5103 = vpack.c.b16 %v5073, %v5070
    %v5104 = vpack.c.b16 %v5077, %v5074
    %v5105 = vpack.c.b16 %v5078, %v5075
    %v5106 = vpack.c.b16 %v5079, %v5076
    %v5107 = vpack.c.b16 %v5083, %v5080
    %v5108 = vpack.c.b16 %v5084, %v5081
    %v5109 = vpack.c.b16 %v5085, %v5082
    %v5135 = vlaneseq
    %v5136 = vshrl.u32 %v5135, 7
    %v5137 = vsub.s32 0, %v5136
    %v5138 = vrot.slane %v5005, %v5137
    %v5139 = vlaneseq
    %v5140 = vshrl.u32 %v5139, 7
    %v5141 = vsub.s32 1, %v5140
    %v5142 = vrot.slane %v5005, %v5141
    %v5143 = vlaneseq
    %v5144 = vshrl.u32 %v5143, 7
    %v5145 = vsub.s32 2, %v5144
    %v5146 = vrot.slane %v5005, %v5145
    %5150 = vmatprep.subr.bf16.mxu0 %v5087
    %5151 = vmatpush1.bf16.msra.mxu0 %v5086
    %5152 = vmatprep.subr.bf16.mxu0 %v5090
    %5153 = vmatpush1.bf16.msra.mxu0 %v5089
    %5154 = vmatprep.subr.bf16.mxu0 %v5093
    %5155 = vmatpush1.bf16.msra.mxu0 %v5092
    %5156 = vmatprep.subr.bf16.mxu0 %v5096
    %5157 = vmatpush1.bf16.msra.mxu0 %v5095
    %5158 = vmatprep.subr.bf16.mxu0 %v5099
    %5159 = vmatpush1.bf16.msra.mxu0 %v5098
    %5160 = vmatprep.subr.bf16.mxu0 %v5102
    %5161 = vmatpush1.bf16.msra.mxu0 %v5101
    %5162 = vmatprep.subr.bf16.mxu0 %v5105
    %5163 = vmatpush1.bf16.msra.mxu0 %v5104
    %5164 = vmatprep.subr.bf16.mxu0 %v5108
    %5165 = vmatpush1.bf16.msra.mxu0 %v5107
    %5166 = vmatprep.subr.bf16.mxu0 0
    %5167 = vmatpush1.bf16.msra.mxu0 0
    %5168 = vmatprep.subr.bf16.mxu0 0
    %5169 = vmatpush1.bf16.msra.mxu0 0
    %5170 = vmatprep.subr.bf16.mxu0 0
    %5171 = vmatpush1.bf16.msra.mxu0 0
    %5172 = vmatprep.subr.bf16.mxu0 0
    %5173 = vmatpush1.bf16.msra.mxu0 0
    %5174 = vmatprep.subr.bf16.mxu0 0
    %5175 = vmatpush1.bf16.msra.mxu0 0
    %5176 = vmatprep.subr.bf16.mxu0 0
    %5177 = vmatpush1.bf16.msra.mxu0 0
    %5178 = vmatprep.subr.bf16.mxu0 0
    %5179 = vmatpush1.bf16.msra.mxu0 0
    %5180 = vmatprep.subr.bf16.mxu0 0
    %5181 = vmatpush1.bf16.msra.mxu0 0
    %5182 = vmatprep.mubr.bf16.mxu0 0
    %5183 = vmatmul.mubr.bf16.gmra.mrb[0].mxu0 %v4972
    %v5184 = vpop.f32.mrb[0].mxu0
    %v5185 = vadd.f32 %v5138, %v5184
    %v5186 = vpop.f32.mrb[0].mxu0
    %v5187 = vadd.f32 %v5142, %v5186
    %v5188 = vpop.f32.mrb[0].mxu0
    %v5189 = vpop.f32.mrb[0].mxu0
    %5190 = vdwg.mxu0
    %5191 = vmatprep.subr.bf16.mxu0 0
    %5192 = vmatpush1.bf16.msra.mxu0 %v5088
    %5193 = vmatprep.subr.bf16.mxu0 0
    %5194 = vmatpush1.bf16.msra.mxu0 %v5091
    %5195 = vmatprep.subr.bf16.mxu0 0
    %5196 = vmatpush1.bf16.msra.mxu0 %v5094
    %5197 = vmatprep.subr.bf16.mxu0 0
    %5198 = vmatpush1.bf16.msra.mxu0 %v5097
    %5199 = vmatprep.subr.bf16.mxu0 0
    %5200 = vmatpush1.bf16.msra.mxu0 %v5100
    %5201 = vmatprep.subr.bf16.mxu0 0
    %5202 = vmatpush1.bf16.msra.mxu0 %v5103
    %5203 = vmatprep.subr.bf16.mxu0 0
    %5204 = vmatpush1.bf16.msra.mxu0 %v5106
    %5205 = vmatprep.subr.bf16.mxu0 0
    %5206 = vmatpush1.bf16.msra.mxu0 %v5109
    %5207 = vmatprep.subr.bf16.mxu0 0
    %5208 = vmatpush1.bf16.msra.mxu0 0
    %5209 = vmatprep.subr.bf16.mxu0 0
    %5210 = vmatpush1.bf16.msra.mxu0 0
    %5211 = vmatprep.subr.bf16.mxu0 0
    %5212 = vmatpush1.bf16.msra.mxu0 0
    %5213 = vmatprep.subr.bf16.mxu0 0
    %5214 = vmatpush1.bf16.msra.mxu0 0
    %5215 = vmatprep.subr.bf16.mxu0 0
    %5216 = vmatpush1.bf16.msra.mxu0 0
    %5217 = vmatprep.subr.bf16.mxu0 0
    %5218 = vmatpush1.bf16.msra.mxu0 0
    %5219 = vmatprep.subr.bf16.mxu0 0
    %5220 = vmatpush1.bf16.msra.mxu0 0
    %5221 = vmatprep.subr.bf16.mxu0 0
    %5222 = vmatpush1.bf16.msra.mxu0 0
    %5223 = vmatprep.mubr.bf16.mxu0 0
    %5224 = vmatmul.mubr.bf16.gmra.mrb[0].mxu0 %v4972
    %v5225 = vpop.f32.mrb[0].mxu0
    %v5226 = vadd.f32 %v5146, %v5225
    %v5227 = vpop.f32.mrb[0].mxu0
    %v5228 = vpop.f32.mrb[0].mxu0
    %v5229 = vpop.f32.mrb[0].mxu0
    %5230 = vdwg.mxu0
    %v5231 = vld [vmem:[%s2664] ss:$8 sm:$0x7]
    %v5232 = vadd.f32 %v5231, %v5185
    %v5233 = vxor.u32 %v5232, 2147483648
    %v5234 = vmul.f32 %v5233, 1.442695
    %v5235 = vpow.pop %v5234
    %v5236 = vadd.f32 %v5235, 1.0
    %v5237 = vrcp.pop %v5236
    %v5238 = vmul.f32 1.0, %v5237
    %v5240 = vrot.slane %v5231, 1
    %v5242 = vadd.f32 %v5240, %v5187
    %v5243 = vxor.u32 %v5242, 2147483648
    %v5244 = vmul.f32 %v5243, 1.442695
    %v5245 = vpow.pop %v5244
    %v5246 = vadd.f32 %v5245, 1.0
    %v5247 = vrcp.pop %v5246
    %v5248 = vmul.f32 1.0, %v5247
    %v5249 = vmul.f32 %v5238, %v5226
    %v5250 = vrot.slane %v5231, 2
    %v5252 = vadd.f32 %v5250, %v5249
    %v5253 = vtanh.pop %v5252
    %v5254 = vsub.f32 1.0, %v5248
    %v5255 = vmul.f32 %v5254, %v5253
    %v5256 = vmul.f32 %v5248, %v4970
    %v5257 = vadd.f32 %v5255, %v5256
    %5258 = vst [vmem:[#allocation2 + $0x7] sm:$0x1] %v5257
    %s5259 = scalar_lea.vmem [#allocation15], 1
    %5260 = vst [vmem:[%s5259] sm:$0x1] %v5257
    %v5261 = vld [vmem:[#allocation2] sm:$0xff]
    %v5262 = vpack.c.bf16 %v5261, %v5261
    %v5263 = vld [vmem:[#allocation12] sm:$0xf]
    %v5264 = vld [vmem:[#allocation12 + $0x4] sm:$0xf]
    %v5265 = vld [vmem:[#allocation12 + $0x8] sm:$0xf]
    %v5266 = vld [vmem:[#allocation12 + $0xc] sm:$0xf]
    %v5267 = vld [vmem:[#allocation12 + $0x10] sm:$0xf]
    %v5268 = vld [vmem:[#allocation12 + $0x14] sm:$0xf]
    %v5269 = vld [vmem:[#allocation12 + $0x18] sm:$0xf]
    %v5270 = vld [vmem:[#allocation12 + $0x1c] sm:$0xf]
    %v5271 = vld [vmem:[#allocation12 + $0x20] sm:$0xf]
    %v5272 = vld [vmem:[#allocation12 + $0x24] sm:$0xf]
    %v5273 = vld [vmem:[#allocation12 + $0x28] sm:$0xf]
    %v5274 = vld [vmem:[#allocation12 + $0x2c] sm:$0xf]
    %v5275 = vld [vmem:[#allocation12 + $0x30] sm:$0xf]
    %v5276 = vld [vmem:[#allocation12 + $0x34] sm:$0xf]
    %v5277 = vld [vmem:[#allocation12 + $0x38] sm:$0xf]
    %v5278 = vld [vmem:[#allocation12 + $0x3c] sm:$0xf]
    %v5279 = vld [vmem:[%s7] sm:$0x1]
    %v5281 = vlaneseq
    %v5282 = vshrl.u32 %v5281, 7
    %v5283 = vsub.s32 0, %v5282
    %v5284 = vrot.slane %v5279, %v5283
    %v5302 = vunpack.c.l.b16 %v5263
    %v5303 = vunpack.c.l.b16 %v5264
    %v5304 = vunpack.c.l.b16 %v5265
    %v5305 = vunpack.c.l.b16 %v5266
    %v5306 = vunpack.c.l.b16 %v5267
    %v5307 = vunpack.c.l.b16 %v5268
    %v5308 = vunpack.c.l.b16 %v5269
    %v5309 = vunpack.c.l.b16 %v5270
    %v5310 = vunpack.c.l.b16 %v5271
    %v5311 = vunpack.c.l.b16 %v5272
    %v5312 = vunpack.c.l.b16 %v5273
    %v5313 = vunpack.c.l.b16 %v5274
    %v5314 = vunpack.c.l.b16 %v5275
    %v5315 = vunpack.c.l.b16 %v5276
    %v5316 = vunpack.c.l.b16 %v5277
    %v5317 = vunpack.c.l.b16 %v5278
    %v5318 = vpack.c.b16 %v5303, %v5302
    %v5319 = vpack.c.b16 %v5305, %v5304
    %v5320 = vpack.c.b16 %v5307, %v5306
    %v5321 = vpack.c.b16 %v5309, %v5308
    %v5322 = vpack.c.b16 %v5311, %v5310
    %v5323 = vpack.c.b16 %v5313, %v5312
    %v5324 = vpack.c.b16 %v5315, %v5314
    %v5325 = vpack.c.b16 %v5317, %v5316
    %5334 = vmatprep.subr.bf16.mxu0 0
    %5335 = vmatpush1.bf16.msra.mxu0 %v5318
    %5336 = vmatprep.subr.bf16.mxu0 0
    %5337 = vmatpush1.bf16.msra.mxu0 %v5319
    %5338 = vmatprep.subr.bf16.mxu0 0
    %5339 = vmatpush1.bf16.msra.mxu0 %v5320
    %5340 = vmatprep.subr.bf16.mxu0 0
    %5341 = vmatpush1.bf16.msra.mxu0 %v5321
    %5342 = vmatprep.subr.bf16.mxu0 0
    %5343 = vmatpush1.bf16.msra.mxu0 %v5322
    %5344 = vmatprep.subr.bf16.mxu0 0
    %5345 = vmatpush1.bf16.msra.mxu0 %v5323
    %5346 = vmatprep.subr.bf16.mxu0 0
    %5347 = vmatpush1.bf16.msra.mxu0 %v5324
    %5348 = vmatprep.subr.bf16.mxu0 0
    %5349 = vmatpush1.bf16.msra.mxu0 %v5325
    %5350 = vmatprep.subr.bf16.mxu0 0
    %5351 = vmatpush1.bf16.msra.mxu0 0
    %5352 = vmatprep.subr.bf16.mxu0 0
    %5353 = vmatpush1.bf16.msra.mxu0 0
    %5354 = vmatprep.subr.bf16.mxu0 0
    %5355 = vmatpush1.bf16.msra.mxu0 0
    %5356 = vmatprep.subr.bf16.mxu0 0
    %5357 = vmatpush1.bf16.msra.mxu0 0
    %5358 = vmatprep.subr.bf16.mxu0 0
    %5359 = vmatpush1.bf16.msra.mxu0 0
    %5360 = vmatprep.subr.bf16.mxu0 0
    %5361 = vmatpush1.bf16.msra.mxu0 0
    %5362 = vmatprep.subr.bf16.mxu0 0
    %5363 = vmatpush1.bf16.msra.mxu0 0
    %5364 = vmatprep.subr.bf16.mxu0 0
    %5365 = vmatpush1.bf16.msra.mxu0 0
    %5366 = vmatprep.mubr.bf16.mxu0 0
    %5367 = vmatmul.mubr.bf16.gmra.mrb[0].mxu0 %v5262
    %v5368 = vpop.f32.mrb[0].mxu0
    %v5369 = vadd.f32 %v5284, %v5368
    %v5370 = vpop.f32.mrb[0].mxu0
    %v5371 = vpop.f32.mrb[0].mxu0
    %v5372 = vpop.f32.mrb[0].mxu0
    %5373 = vdwg.mxu0
    %5374 = vst [vmem:[#allocation14] sm:$0xff] %v5369
    // Predicated region
    $region50: #{tpu_custom_call.1} parent=1 // pred_check
      _
    $region51: #{tpu_custom_call.1} parent=1 // pred_check_branch
      %5376 = sbr.rel (0) target = $region53
    $region52: #{tpu_custom_call.1} parent=1 // pred_region
      %s5378 = ssub.s32 128, 128
      %5379 = vsyncadd [#allocation8], %s5378
      %s5381 = sshll.u32 [#allocation14], 4
      %s5382 = int_to_ptr.vmem [resolvable:$true] %s5381
      %5384 = dma.vmem_to_hbm [thread:$0]  %s5382, 128, %s9, [#allocation8]
    $region53: #{tpu_custom_call.1} parent=1 // pred_fallthru
      _
    // Predicated region
    $region54: #{tpu_custom_call.1} parent=1 // pred_check
      _
    $region55: #{tpu_custom_call.1} parent=1 // pred_check_branch
      %5386 = sbr.rel (0) target = $region57
    $region56: #{tpu_custom_call.1} parent=1 // pred_region
      %s5388 = ssub.s32 32, 32
      %5389 = vsyncadd [#allocation16], %s5388
      %s5390 = sshll.u32 [#allocation15], 4
      %s5391 = int_to_ptr.vmem [resolvable:$true] %s5390
      %5396 = dma.vmem_to_hbm [thread:$0]  %s5391, 32, %s10, [#allocation16], 16, 16, 1
    $region57: #{tpu_custom_call.1} parent=1 // pred_fallthru
      _
    // Predicated region
    $region58: #{tpu_custom_call.1} parent=1 // pred_check
      _
    $region59: #{tpu_custom_call.1} parent=1 // pred_check_branch
      %5398 = sbr.rel (0) target = $region61
    $region60: #{tpu_custom_call.1} parent=1 // pred_region
      %5399 = dma.done [#allocation8], 128
    $region61: #{tpu_custom_call.1} parent=1 // pred_fallthru
      _
    // Predicated region
    $region62: #{tpu_custom_call.1} parent=1 // pred_check
      _
    $region63: #{tpu_custom_call.1} parent=1 // pred_check_branch
      %5401 = sbr.rel (0) target = $region65
    $region64: #{tpu_custom_call.1} parent=1 // pred_region
      %5402 = dma.done [#allocation16], 32
    $region65: #{tpu_custom_call.1} parent=1 // pred_fallthru
      _
    %5403 = vsyncpa [#allocation7], 1
    %5404 = vsyncpa [#allocation10], 1
    %5405 = vsyncpa [#allocation13], 1
    %5406 = vsyncpa [#allocation8], 1
    %5407 = vsyncpa [#allocation16], 1

</llo_original>
